<compile_context>
chip_gen: v7x
topology: tpu7x:2x2x1
jax: 0.10.0
libtpu: 0.0.40
codegen_flags: <defaults>
</compile_context>

<pallas_src>
import numpy as np
import jax
import jax.numpy as jnp
from jax.experimental import pallas as pl
from jax.experimental.pallas import tpu as pltpu


# --------------------------- fused Pallas kernel -----------------------------

def _cnn_fused_kernel(x_ref, p1_ref, b1w_ref, bias1_ref,
                      p2_ref, b2w_ref, bias2_ref, wl_ref, bl_ref, o_ref):
    f32 = jnp.float32

    def dot(a, b):
        return jnp.dot(a, b, preferred_element_type=f32)

    def conv_relu_pool(f, p_ref, bw_ref, bias_ref, half):
        # f:      [H, W*Cin] feature map (value, lane-dense)
        # p_ref:  [3, H, H]   h-tap gather matrices (exact 0/1 row selection,
        #                     rows ordered [h-even half ; h-odd half])
        # bw_ref: [2, 3, W*Cin, (W//2)*Cout] banded tap weights per w-parity
        ye = None   # w-even conv outputs
        yo = None   # w-odd  conv outputs
        for dh in range(3):
            l = dot(p_ref[dh], f)                      # exact row gather/shift
            e = dot(l, bw_ref[0, dh])
            o = dot(l, bw_ref[1, dh])
            ye = e if ye is None else ye + e
            yo = o if yo is None else yo + o
        yw = jnp.maximum(ye, yo)                       # max over w-parity
        yh = jnp.maximum(yw[:half, :], yw[half:, :])   # max over h-parity
        return jnp.maximum(yh + bias_ref[...], 0.0)    # bias + ReLU after max

    x = x_ref[0]                                                 # [28, 28]
    y1 = conv_relu_pool(x, p1_ref, b1w_ref, bias1_ref, 14)       # [14, 14*16]
    y2 = conv_relu_pool(y1, p2_ref, b2w_ref, bias2_ref, 7)       # [7, 7*32]

    # Linear + tanh, contracting over (h, (w, c)); wl_ref is [7, 224, latent].
    acc = dot(y2[0:1, :], wl_ref[0])
    for h in range(1, 7):
        acc = acc + dot(y2[h:h + 1, :], wl_ref[h])
    o_ref[0] = jnp.tanh(acc + bl_ref[...])


def cnn_forward(x_nchw, params):
    """x_nchw: [B, 1, 28, 28] float -> [B, latent_dims] latent representation."""
    b, c, h, w = x_nchw.shape
    assert (c, h, w) == (1, 28, 28), "fused kernel is specialised to 1x28x28"
    x = x_nchw.reshape(b, 28, 28).astype(jnp.float32)
    latent = params['bl_k'].shape[-1]

    def full(a):
        zeros = (0,) * a.ndim
        return pl.BlockSpec(a.shape, lambda i, _z=zeros: _z)

    weights = (params['p1'], params['b1w'], params['bias1'],
               params['p2'], params['b2w'], params['bias2'],
               params['wl_k'], params['bl_k'])

    out = pl.pallas_call(
        _cnn_fused_kernel,
        out_shape=jax.ShapeDtypeStruct((b, 1, latent), jnp.float32),
        grid=(b,),
        in_specs=[pl.BlockSpec((1, 28, 28), lambda i: (i, 0, 0))]
                 + [full(a) for a in weights],
        out_specs=pl.BlockSpec((1, 1, latent), lambda i: (i, 0, 0)),
        compiler_params=pltpu.CompilerParams(
            dimension_semantics=("parallel",)),
    )(x, *weights)
    return out.reshape(b, latent)


# ----------------------- weight preprocessing (init-time) --------------------

def _pool_gather_matrices(h):
    """[3, h, h] 0/1 matrices: row r selects source row (2r+dh-1) for r < h/2
    (h-even conv rows) and (2(r-h/2)+1+dh-1) for r >= h/2 (h-odd rows);
    out-of-range rows stay zero ('same' padding)."""
    p = np.zeros((3, h, h), np.float32)
    hh = h // 2
    for dh in range(3):
        for r in range(h):
            src = (2 * r + dh - 1) if r < hh else (2 * (r - hh) + 1 + dh - 1)
            if 0 <= src < h:
                p[dh, r, src] = 1.0
    return p


def _banded_pool_weights(w_hwio, width):
    """w_hwio: [3, 3, cin, cout] -> [2, 3, width*cin, (width//2)*cout].
    Entry maps input column (2*wp + parity + dw - 1)*cin + ci to output column
    wp*cout + co with value w[dh, dw, ci, co]; out-of-range source columns are
    omitted ('same' padding contributes zero)."""
    kh, kw, cin, cout = w_hwio.shape
    wh = width // 2
    b = np.zeros((2, 3, width * cin, wh * cout), np.float32)
    for parity in range(2):
        for dh in range(kh):
            for dw in range(kw):
                for wp in range(wh):
                    ws = 2 * wp + parity + dw - 1
                    if 0 <= ws < width:
                        b[parity, dh,
                          ws * cin:(ws + 1) * cin,
                          wp * cout:(wp + 1) * cout] = w_hwio[dh, dw]
    return b


def init_params(key, latent_dims=32):
    k1, k2, k3, k4, k5, k6 = jax.random.split(key, 6)
    w1 = jax.random.normal(k1, (3, 3, 1, 16), jnp.float32) * 0.10    # HWIO
    b1 = jax.random.normal(k2, (16,), jnp.float32) * 0.10
    w2 = jax.random.normal(k3, (3, 3, 16, 32), jnp.float32) * 0.05   # HWIO
    b2 = jax.random.normal(k4, (32,), jnp.float32) * 0.05
    wl = jax.random.normal(k5, (32 * 7 * 7, latent_dims), jnp.float32) * 0.02
    bl = jax.random.normal(k6, (latent_dims,), jnp.float32) * 0.02

    w1_np, w2_np, wl_np = np.asarray(w1), np.asarray(w2), np.asarray(wl)
    b1_np, b2_np = np.asarray(b1), np.asarray(b2)

    # Permute the Linear weight from torch's NCHW (c, h, w) flatten order to
    # the kernel's (h, (w, c)) order once, at zero runtime cost.
    wl_k = wl_np.reshape(32, 7, 7, latent_dims).transpose(1, 2, 0, 3)
    wl_k = wl_k.reshape(7, 7 * 32, latent_dims)

    return {
        # kernel-format parameters
        'p1':    jnp.asarray(_pool_gather_matrices(28)),          # [3, 28, 28]
        'b1w':   jnp.asarray(_banded_pool_weights(w1_np, 28)),    # [2, 3, 28, 224]
        'bias1': jnp.asarray(np.tile(b1_np, 14).reshape(1, 224)),
        'p2':    jnp.asarray(_pool_gather_matrices(14)),          # [3, 14, 14]
        'b2w':   jnp.asarray(_banded_pool_weights(w2_np, 14)),    # [2, 3, 224, 224]
        'bias2': jnp.asarray(np.tile(b2_np, 7).reshape(1, 224)),
        'wl_k':  jnp.asarray(wl_k),                               # [7, 224, L]
        'bl_k':  bl.reshape(1, latent_dims),
        # reference-format parameters (XLA validation only)
        'w1_hwio': w1, 'b1': b1, 'w2_hwio': w2, 'b2': b2, 'wl': wl, 'bl': bl,
    }


# ------------------------------ XLA reference ---------------------------------

def reference_forward(x_nchw, params):
    """Pure-JAX (XLA) reference with identical semantics, for validation."""
    x = jnp.transpose(x_nchw, (0, 2, 3, 1))
    dn = ('NHWC', 'HWIO', 'NHWC')

    def conv_relu(x, w, b):
        y = jax.lax.conv_general_dilated(x, w, (1, 1), 'SAME',
                                         dimension_numbers=dn)
        return jnp.maximum(y + b.reshape(1, 1, 1, -1), 0.0)

    def pool(x):
        return jax.lax.reduce_window(x, -jnp.inf, jax.lax.max,
                                     (1, 2, 2, 1), (1, 2, 2, 1), 'VALID')

    y = pool(conv_relu(x, params['w1_hwio'], params['b1']))
    y = pool(conv_relu(y, params['w2_hwio'], params['b2']))
    flat = jnp.transpose(y, (0, 3, 1, 2)).reshape(x.shape[0], -1)   # NCHW flatten
    return jnp.tanh(flat @ params['wl'] + params['bl'])


if __name__ == "__main__":
    key = jax.random.PRNGKey(0)
    pkey, xkey = jax.random.split(key)
    params = init_params(pkey, latent_dims=32)

    # PyTorch-style NCHW MNIST batch: [B=2, C=1, H=28, W=28]
    x = jax.random.normal(xkey, (2, 1, 28, 28), jnp.float32)

    out = jax.block_until_ready(jax.jit(cnn_forward)(x, params))
    ref = jax.block_until_ready(reference_forward(x, params))

    assert out.shape == (2, 32) and out.dtype == jnp.float32
    err = float(jnp.max(jnp.abs(out - ref)))
    assert jnp.allclose(out, ref, atol=1e-4, rtol=1e-4), f"max abs err {err}"
    print("KERNEL_OK")
</pallas_src>

<mosaic_0001>
module attributes {stable_mosaic.version = 11 : i64} {
  func.func @_cnn_fused_kernel(%arg0: i32, %arg1: memref<1x28x28xf32, #tpu.memory_space<vmem>>, %arg2: memref<3x28x28xf32, #tpu.memory_space<vmem>>, %arg3: memref<2x3x28x224xf32, #tpu.memory_space<vmem>>, %arg4: memref<1x224xf32, #tpu.memory_space<vmem>>, %arg5: memref<3x14x14xf32, #tpu.memory_space<vmem>>, %arg6: memref<2x3x224x224xf32, #tpu.memory_space<vmem>>, %arg7: memref<1x224xf32, #tpu.memory_space<vmem>>, %arg8: memref<7x224x32xf32, #tpu.memory_space<vmem>>, %arg9: memref<1x32xf32, #tpu.memory_space<vmem>>, %arg10: memref<1x1x32xf32, #tpu.memory_space<vmem>>) attributes {dimension_semantics = [#tpu.dimension_semantics<parallel>], iteration_bounds = array<i64: 2>, scalar_prefetch = 0 : i64, scratch_operands = 0 : i64, tpu.core_type = #tpu.core_type<tc>, window_params = [{transform_indices = @transform_0, window_bounds = array<i64: 1, 28, 28>}, {pipeline_mode = #tpu.pipeline_mode<synchronous>, transform_indices = @transform_1, window_bounds = array<i64: 3, 28, 28>}, {pipeline_mode = #tpu.pipeline_mode<synchronous>, transform_indices = @transform_2, window_bounds = array<i64: 2, 3, 28, 224>}, {pipeline_mode = #tpu.pipeline_mode<synchronous>, transform_indices = @transform_3, window_bounds = array<i64: 1, 224>}, {pipeline_mode = #tpu.pipeline_mode<synchronous>, transform_indices = @transform_4, window_bounds = array<i64: 3, 14, 14>}, {pipeline_mode = #tpu.pipeline_mode<synchronous>, transform_indices = @transform_5, window_bounds = array<i64: 2, 3, 224, 224>}, {pipeline_mode = #tpu.pipeline_mode<synchronous>, transform_indices = @transform_6, window_bounds = array<i64: 1, 224>}, {pipeline_mode = #tpu.pipeline_mode<synchronous>, transform_indices = @transform_7, window_bounds = array<i64: 7, 224, 32>}, {pipeline_mode = #tpu.pipeline_mode<synchronous>, transform_indices = @transform_8, window_bounds = array<i64: 1, 32>}, {transform_indices = @transform_9, window_bounds = array<i64: 1, 1, 32>}]} {
    %c0 = arith.constant 0 : index
    %c0_0 = arith.constant 0 : index
    %c0_1 = arith.constant 0 : index
    %0 = vector.load %arg1[%c0, %c0_0, %c0_1] : memref<1x28x28xf32, #tpu.memory_space<vmem>>, vector<1x28x28xf32>
    %1 = vector.shape_cast %0 : vector<1x28x28xf32> to vector<28x28xf32>
    %c0_2 = arith.constant 0 : index
    %c0_3 = arith.constant 0 : index
    %c0_4 = arith.constant 0 : index
    %2 = vector.load %arg2[%c0_2, %c0_3, %c0_4] : memref<3x28x28xf32, #tpu.memory_space<vmem>>, vector<1x28x28xf32>
    %3 = vector.shape_cast %2 : vector<1x28x28xf32> to vector<28x28xf32>
    %cst = arith.constant dense<0.000000e+00> : vector<28x28xf32>
    %4 = tpu.matmul %3, %1, %cst {dimension_numbers = #tpu.dot_dimension_numbers<[1], [0], [0], [1], [0, 0, 1, 1], [], []>} : vector<28x28xf32>, vector<28x28xf32>, vector<28x28xf32> -> vector<28x28xf32>
    %c0_5 = arith.constant 0 : index
    %c0_6 = arith.constant 0 : index
    %c0_7 = arith.constant 0 : index
    %c0_8 = arith.constant 0 : index
    %5 = vector.load %arg3[%c0_5, %c0_6, %c0_7, %c0_8] : memref<2x3x28x224xf32, #tpu.memory_space<vmem>>, vector<1x1x28x224xf32>
    %6 = vector.shape_cast %5 : vector<1x1x28x224xf32> to vector<28x224xf32>
    %cst_9 = arith.constant dense<0.000000e+00> : vector<28x224xf32>
    %7 = tpu.matmul %4, %6, %cst_9 {dimension_numbers = #tpu.dot_dimension_numbers<[1], [0], [0], [1], [0, 0, 1, 1], [], []>} : vector<28x28xf32>, vector<28x224xf32>, vector<28x224xf32> -> vector<28x224xf32>
    %c1 = arith.constant 1 : index
    %c0_10 = arith.constant 0 : index
    %c0_11 = arith.constant 0 : index
    %c0_12 = arith.constant 0 : index
    %8 = vector.load %arg3[%c1, %c0_10, %c0_11, %c0_12] : memref<2x3x28x224xf32, #tpu.memory_space<vmem>>, vector<1x1x28x224xf32>
    %9 = vector.shape_cast %8 : vector<1x1x28x224xf32> to vector<28x224xf32>
    %cst_13 = arith.constant dense<0.000000e+00> : vector<28x224xf32>
    %10 = tpu.matmul %4, %9, %cst_13 {dimension_numbers = #tpu.dot_dimension_numbers<[1], [0], [0], [1], [0, 0, 1, 1], [], []>} : vector<28x28xf32>, vector<28x224xf32>, vector<28x224xf32> -> vector<28x224xf32>
    %c1_14 = arith.constant 1 : index
    %c0_15 = arith.constant 0 : index
    %c0_16 = arith.constant 0 : index
    %11 = vector.load %arg2[%c1_14, %c0_15, %c0_16] : memref<3x28x28xf32, #tpu.memory_space<vmem>>, vector<1x28x28xf32>
    %12 = vector.shape_cast %11 : vector<1x28x28xf32> to vector<28x28xf32>
    %cst_17 = arith.constant dense<0.000000e+00> : vector<28x28xf32>
    %13 = tpu.matmul %12, %1, %cst_17 {dimension_numbers = #tpu.dot_dimension_numbers<[1], [0], [0], [1], [0, 0, 1, 1], [], []>} : vector<28x28xf32>, vector<28x28xf32>, vector<28x28xf32> -> vector<28x28xf32>
    %c0_18 = arith.constant 0 : index
    %c1_19 = arith.constant 1 : index
    %c0_20 = arith.constant 0 : index
    %c0_21 = arith.constant 0 : index
    %14 = vector.load %arg3[%c0_18, %c1_19, %c0_20, %c0_21] : memref<2x3x28x224xf32, #tpu.memory_space<vmem>>, vector<1x1x28x224xf32>
    %15 = vector.shape_cast %14 : vector<1x1x28x224xf32> to vector<28x224xf32>
    %cst_22 = arith.constant dense<0.000000e+00> : vector<28x224xf32>
    %16 = tpu.matmul %13, %15, %cst_22 {dimension_numbers = #tpu.dot_dimension_numbers<[1], [0], [0], [1], [0, 0, 1, 1], [], []>} : vector<28x28xf32>, vector<28x224xf32>, vector<28x224xf32> -> vector<28x224xf32>
    %c1_23 = arith.constant 1 : index
    %c1_24 = arith.constant 1 : index
    %c0_25 = arith.constant 0 : index
    %c0_26 = arith.constant 0 : index
    %17 = vector.load %arg3[%c1_23, %c1_24, %c0_25, %c0_26] : memref<2x3x28x224xf32, #tpu.memory_space<vmem>>, vector<1x1x28x224xf32>
    %18 = vector.shape_cast %17 : vector<1x1x28x224xf32> to vector<28x224xf32>
    %cst_27 = arith.constant dense<0.000000e+00> : vector<28x224xf32>
    %19 = tpu.matmul %13, %18, %cst_27 {dimension_numbers = #tpu.dot_dimension_numbers<[1], [0], [0], [1], [0, 0, 1, 1], [], []>} : vector<28x28xf32>, vector<28x224xf32>, vector<28x224xf32> -> vector<28x224xf32>
    %20 = arith.addf %7, %16 : vector<28x224xf32>
    %21 = arith.addf %10, %19 : vector<28x224xf32>
    %c2 = arith.constant 2 : index
    %c0_28 = arith.constant 0 : index
    %c0_29 = arith.constant 0 : index
    %22 = vector.load %arg2[%c2, %c0_28, %c0_29] : memref<3x28x28xf32, #tpu.memory_space<vmem>>, vector<1x28x28xf32>
    %23 = vector.shape_cast %22 : vector<1x28x28xf32> to vector<28x28xf32>
    %cst_30 = arith.constant dense<0.000000e+00> : vector<28x28xf32>
    %24 = tpu.matmul %23, %1, %cst_30 {dimension_numbers = #tpu.dot_dimension_numbers<[1], [0], [0], [1], [0, 0, 1, 1], [], []>} : vector<28x28xf32>, vector<28x28xf32>, vector<28x28xf32> -> vector<28x28xf32>
    %c0_31 = arith.constant 0 : index
    %c2_32 = arith.constant 2 : index
    %c0_33 = arith.constant 0 : index
    %c0_34 = arith.constant 0 : index
    %25 = vector.load %arg3[%c0_31, %c2_32, %c0_33, %c0_34] : memref<2x3x28x224xf32, #tpu.memory_space<vmem>>, vector<1x1x28x224xf32>
    %26 = vector.shape_cast %25 : vector<1x1x28x224xf32> to vector<28x224xf32>
    %cst_35 = arith.constant dense<0.000000e+00> : vector<28x224xf32>
    %27 = tpu.matmul %24, %26, %cst_35 {dimension_numbers = #tpu.dot_dimension_numbers<[1], [0], [0], [1], [0, 0, 1, 1], [], []>} : vector<28x28xf32>, vector<28x224xf32>, vector<28x224xf32> -> vector<28x224xf32>
    %c1_36 = arith.constant 1 : index
    %c2_37 = arith.constant 2 : index
    %c0_38 = arith.constant 0 : index
    %c0_39 = arith.constant 0 : index
    %28 = vector.load %arg3[%c1_36, %c2_37, %c0_38, %c0_39] : memref<2x3x28x224xf32, #tpu.memory_space<vmem>>, vector<1x1x28x224xf32>
    %29 = vector.shape_cast %28 : vector<1x1x28x224xf32> to vector<28x224xf32>
    %cst_40 = arith.constant dense<0.000000e+00> : vector<28x224xf32>
    %30 = tpu.matmul %24, %29, %cst_40 {dimension_numbers = #tpu.dot_dimension_numbers<[1], [0], [0], [1], [0, 0, 1, 1], [], []>} : vector<28x28xf32>, vector<28x224xf32>, vector<28x224xf32> -> vector<28x224xf32>
    %31 = arith.addf %20, %27 : vector<28x224xf32>
    %32 = arith.addf %21, %30 : vector<28x224xf32>
    %33 = arith.maximumf %31, %32 : vector<28x224xf32>
    %34 = vector.extract_strided_slice %33 {offsets = [0, 0], sizes = [14, 224], strides = [1, 1]} : vector<28x224xf32> to vector<14x224xf32>
    %35 = vector.extract_strided_slice %33 {offsets = [14, 0], sizes = [14, 224], strides = [1, 1]} : vector<28x224xf32> to vector<14x224xf32>
    %36 = arith.maximumf %34, %35 : vector<14x224xf32>
    %c0_41 = arith.constant 0 : index
    %c0_42 = arith.constant 0 : index
    %37 = vector.load %arg4[%c0_41, %c0_42] : memref<1x224xf32, #tpu.memory_space<vmem>>, vector<1x224xf32>
    %38 = vector.broadcast %37 : vector<1x224xf32> to vector<14x224xf32>
    %39 = arith.addf %36, %38 : vector<14x224xf32>
    %cst_43 = arith.constant 0.000000e+00 : f32
    %40 = vector.broadcast %cst_43 : f32 to vector<14x224xf32>
    %41 = arith.maximumf %39, %40 : vector<14x224xf32>
    %c0_44 = arith.constant 0 : index
    %c0_45 = arith.constant 0 : index
    %c0_46 = arith.constant 0 : index
    %42 = vector.load %arg5[%c0_44, %c0_45, %c0_46] : memref<3x14x14xf32, #tpu.memory_space<vmem>>, vector<1x14x14xf32>
    %43 = vector.shape_cast %42 : vector<1x14x14xf32> to vector<14x14xf32>
    %cst_47 = arith.constant dense<0.000000e+00> : vector<14x224xf32>
    %44 = tpu.matmul %43, %41, %cst_47 {dimension_numbers = #tpu.dot_dimension_numbers<[1], [0], [0], [1], [0, 0, 1, 1], [], []>} : vector<14x14xf32>, vector<14x224xf32>, vector<14x224xf32> -> vector<14x224xf32>
    %c0_48 = arith.constant 0 : index
    %c0_49 = arith.constant 0 : index
    %c0_50 = arith.constant 0 : index
    %c0_51 = arith.constant 0 : index
    %45 = vector.load %arg6[%c0_48, %c0_49, %c0_50, %c0_51] : memref<2x3x224x224xf32, #tpu.memory_space<vmem>>, vector<1x1x224x224xf32>
    %46 = vector.shape_cast %45 : vector<1x1x224x224xf32> to vector<224x224xf32>
    %cst_52 = arith.constant dense<0.000000e+00> : vector<14x224xf32>
    %47 = tpu.matmul %44, %46, %cst_52 {dimension_numbers = #tpu.dot_dimension_numbers<[1], [0], [0], [1], [0, 0, 1, 1], [], []>} : vector<14x224xf32>, vector<224x224xf32>, vector<14x224xf32> -> vector<14x224xf32>
    %c1_53 = arith.constant 1 : index
    %c0_54 = arith.constant 0 : index
    %c0_55 = arith.constant 0 : index
    %c0_56 = arith.constant 0 : index
    %48 = vector.load %arg6[%c1_53, %c0_54, %c0_55, %c0_56] : memref<2x3x224x224xf32, #tpu.memory_space<vmem>>, vector<1x1x224x224xf32>
    %49 = vector.shape_cast %48 : vector<1x1x224x224xf32> to vector<224x224xf32>
    %cst_57 = arith.constant dense<0.000000e+00> : vector<14x224xf32>
    %50 = tpu.matmul %44, %49, %cst_57 {dimension_numbers = #tpu.dot_dimension_numbers<[1], [0], [0], [1], [0, 0, 1, 1], [], []>} : vector<14x224xf32>, vector<224x224xf32>, vector<14x224xf32> -> vector<14x224xf32>
    %c1_58 = arith.constant 1 : index
    %c0_59 = arith.constant 0 : index
    %c0_60 = arith.constant 0 : index
    %51 = vector.load %arg5[%c1_58, %c0_59, %c0_60] : memref<3x14x14xf32, #tpu.memory_space<vmem>>, vector<1x14x14xf32>
    %52 = vector.shape_cast %51 : vector<1x14x14xf32> to vector<14x14xf32>
    %cst_61 = arith.constant dense<0.000000e+00> : vector<14x224xf32>
    %53 = tpu.matmul %52, %41, %cst_61 {dimension_numbers = #tpu.dot_dimension_numbers<[1], [0], [0], [1], [0, 0, 1, 1], [], []>} : vector<14x14xf32>, vector<14x224xf32>, vector<14x224xf32> -> vector<14x224xf32>
    %c0_62 = arith.constant 0 : index
    %c1_63 = arith.constant 1 : index
    %c0_64 = arith.constant 0 : index
    %c0_65 = arith.constant 0 : index
    %54 = vector.load %arg6[%c0_62, %c1_63, %c0_64, %c0_65] : memref<2x3x224x224xf32, #tpu.memory_space<vmem>>, vector<1x1x224x224xf32>
    %55 = vector.shape_cast %54 : vector<1x1x224x224xf32> to vector<224x224xf32>
    %cst_66 = arith.constant dense<0.000000e+00> : vector<14x224xf32>
    %56 = tpu.matmul %53, %55, %cst_66 {dimension_numbers = #tpu.dot_dimension_numbers<[1], [0], [0], [1], [0, 0, 1, 1], [], []>} : vector<14x224xf32>, vector<224x224xf32>, vector<14x224xf32> -> vector<14x224xf32>
    %c1_67 = arith.constant 1 : index
    %c1_68 = arith.constant 1 : index
    %c0_69 = arith.constant 0 : index
    %c0_70 = arith.constant 0 : index
    %57 = vector.load %arg6[%c1_67, %c1_68, %c0_69, %c0_70] : memref<2x3x224x224xf32, #tpu.memory_space<vmem>>, vector<1x1x224x224xf32>
    %58 = vector.shape_cast %57 : vector<1x1x224x224xf32> to vector<224x224xf32>
    %cst_71 = arith.constant dense<0.000000e+00> : vector<14x224xf32>
    %59 = tpu.matmul %53, %58, %cst_71 {dimension_numbers = #tpu.dot_dimension_numbers<[1], [0], [0], [1], [0, 0, 1, 1], [], []>} : vector<14x224xf32>, vector<224x224xf32>, vector<14x224xf32> -> vector<14x224xf32>
    %60 = arith.addf %47, %56 : vector<14x224xf32>
    %61 = arith.addf %50, %59 : vector<14x224xf32>
    %c2_72 = arith.constant 2 : index
    %c0_73 = arith.constant 0 : index
    %c0_74 = arith.constant 0 : index
    %62 = vector.load %arg5[%c2_72, %c0_73, %c0_74] : memref<3x14x14xf32, #tpu.memory_space<vmem>>, vector<1x14x14xf32>
    %63 = vector.shape_cast %62 : vector<1x14x14xf32> to vector<14x14xf32>
    %cst_75 = arith.constant dense<0.000000e+00> : vector<14x224xf32>
    %64 = tpu.matmul %63, %41, %cst_75 {dimension_numbers = #tpu.dot_dimension_numbers<[1], [0], [0], [1], [0, 0, 1, 1], [], []>} : vector<14x14xf32>, vector<14x224xf32>, vector<14x224xf32> -> vector<14x224xf32>
    %c0_76 = arith.constant 0 : index
    %c2_77 = arith.constant 2 : index
    %c0_78 = arith.constant 0 : index
    %c0_79 = arith.constant 0 : index
    %65 = vector.load %arg6[%c0_76, %c2_77, %c0_78, %c0_79] : memref<2x3x224x224xf32, #tpu.memory_space<vmem>>, vector<1x1x224x224xf32>
    %66 = vector.shape_cast %65 : vector<1x1x224x224xf32> to vector<224x224xf32>
    %cst_80 = arith.constant dense<0.000000e+00> : vector<14x224xf32>
    %67 = tpu.matmul %64, %66, %cst_80 {dimension_numbers = #tpu.dot_dimension_numbers<[1], [0], [0], [1], [0, 0, 1, 1], [], []>} : vector<14x224xf32>, vector<224x224xf32>, vector<14x224xf32> -> vector<14x224xf32>
    %c1_81 = arith.constant 1 : index
    %c2_82 = arith.constant 2 : index
    %c0_83 = arith.constant 0 : index
    %c0_84 = arith.constant 0 : index
    %68 = vector.load %arg6[%c1_81, %c2_82, %c0_83, %c0_84] : memref<2x3x224x224xf32, #tpu.memory_space<vmem>>, vector<1x1x224x224xf32>
    %69 = vector.shape_cast %68 : vector<1x1x224x224xf32> to vector<224x224xf32>
    %cst_85 = arith.constant dense<0.000000e+00> : vector<14x224xf32>
    %70 = tpu.matmul %64, %69, %cst_85 {dimension_numbers = #tpu.dot_dimension_numbers<[1], [0], [0], [1], [0, 0, 1, 1], [], []>} : vector<14x224xf32>, vector<224x224xf32>, vector<14x224xf32> -> vector<14x224xf32>
    %71 = arith.addf %60, %67 : vector<14x224xf32>
    %72 = arith.addf %61, %70 : vector<14x224xf32>
    %73 = arith.maximumf %71, %72 : vector<14x224xf32>
    %74 = vector.extract_strided_slice %73 {offsets = [0, 0], sizes = [7, 224], strides = [1, 1]} : vector<14x224xf32> to vector<7x224xf32>
    %75 = vector.extract_strided_slice %73 {offsets = [7, 0], sizes = [7, 224], strides = [1, 1]} : vector<14x224xf32> to vector<7x224xf32>
    %76 = arith.maximumf %74, %75 : vector<7x224xf32>
    %c0_86 = arith.constant 0 : index
    %c0_87 = arith.constant 0 : index
    %77 = vector.load %arg7[%c0_86, %c0_87] : memref<1x224xf32, #tpu.memory_space<vmem>>, vector<1x224xf32>
    %78 = vector.broadcast %77 : vector<1x224xf32> to vector<7x224xf32>
    %79 = arith.addf %76, %78 : vector<7x224xf32>
    %cst_88 = arith.constant 0.000000e+00 : f32
    %80 = vector.broadcast %cst_88 : f32 to vector<7x224xf32>
    %81 = arith.maximumf %79, %80 : vector<7x224xf32>
    %82 = vector.extract_strided_slice %81 {offsets = [0, 0], sizes = [1, 224], strides = [1, 1]} : vector<7x224xf32> to vector<1x224xf32>
    %c0_89 = arith.constant 0 : index
    %c0_90 = arith.constant 0 : index
    %c0_91 = arith.constant 0 : index
    %83 = vector.load %arg8[%c0_89, %c0_90, %c0_91] : memref<7x224x32xf32, #tpu.memory_space<vmem>>, vector<1x224x32xf32>
    %84 = vector.shape_cast %83 : vector<1x224x32xf32> to vector<224x32xf32>
    %cst_92 = arith.constant dense<0.000000e+00> : vector<1x32xf32>
    %85 = tpu.matmul %82, %84, %cst_92 {dimension_numbers = #tpu.dot_dimension_numbers<[1], [0], [0], [1], [0, 0, 1, 1], [], []>} : vector<1x224xf32>, vector<224x32xf32>, vector<1x32xf32> -> vector<1x32xf32>
    %86 = vector.extract_strided_slice %81 {offsets = [1, 0], sizes = [1, 224], strides = [1, 1]} : vector<7x224xf32> to vector<1x224xf32>
    %c1_93 = arith.constant 1 : index
    %c0_94 = arith.constant 0 : index
    %c0_95 = arith.constant 0 : index
    %87 = vector.load %arg8[%c1_93, %c0_94, %c0_95] : memref<7x224x32xf32, #tpu.memory_space<vmem>>, vector<1x224x32xf32>
    %88 = vector.shape_cast %87 : vector<1x224x32xf32> to vector<224x32xf32>
    %cst_96 = arith.constant dense<0.000000e+00> : vector<1x32xf32>
    %89 = tpu.matmul %86, %88, %cst_96 {dimension_numbers = #tpu.dot_dimension_numbers<[1], [0], [0], [1], [0, 0, 1, 1], [], []>} : vector<1x224xf32>, vector<224x32xf32>, vector<1x32xf32> -> vector<1x32xf32>
    %90 = arith.addf %85, %89 : vector<1x32xf32>
    %91 = vector.extract_strided_slice %81 {offsets = [2, 0], sizes = [1, 224], strides = [1, 1]} : vector<7x224xf32> to vector<1x224xf32>
    %c2_97 = arith.constant 2 : index
    %c0_98 = arith.constant 0 : index
    %c0_99 = arith.constant 0 : index
    %92 = vector.load %arg8[%c2_97, %c0_98, %c0_99] : memref<7x224x32xf32, #tpu.memory_space<vmem>>, vector<1x224x32xf32>
    %93 = vector.shape_cast %92 : vector<1x224x32xf32> to vector<224x32xf32>
    %cst_100 = arith.constant dense<0.000000e+00> : vector<1x32xf32>
    %94 = tpu.matmul %91, %93, %cst_100 {dimension_numbers = #tpu.dot_dimension_numbers<[1], [0], [0], [1], [0, 0, 1, 1], [], []>} : vector<1x224xf32>, vector<224x32xf32>, vector<1x32xf32> -> vector<1x32xf32>
    %95 = arith.addf %90, %94 : vector<1x32xf32>
    %96 = vector.extract_strided_slice %81 {offsets = [3, 0], sizes = [1, 224], strides = [1, 1]} : vector<7x224xf32> to vector<1x224xf32>
    %c3 = arith.constant 3 : index
    %c0_101 = arith.constant 0 : index
    %c0_102 = arith.constant 0 : index
    %97 = vector.load %arg8[%c3, %c0_101, %c0_102] : memref<7x224x32xf32, #tpu.memory_space<vmem>>, vector<1x224x32xf32>
    %98 = vector.shape_cast %97 : vector<1x224x32xf32> to vector<224x32xf32>
    %cst_103 = arith.constant dense<0.000000e+00> : vector<1x32xf32>
    %99 = tpu.matmul %96, %98, %cst_103 {dimension_numbers = #tpu.dot_dimension_numbers<[1], [0], [0], [1], [0, 0, 1, 1], [], []>} : vector<1x224xf32>, vector<224x32xf32>, vector<1x32xf32> -> vector<1x32xf32>
    %100 = arith.addf %95, %99 : vector<1x32xf32>
    %101 = vector.extract_strided_slice %81 {offsets = [4, 0], sizes = [1, 224], strides = [1, 1]} : vector<7x224xf32> to vector<1x224xf32>
    %c4 = arith.constant 4 : index
    %c0_104 = arith.constant 0 : index
    %c0_105 = arith.constant 0 : index
    %102 = vector.load %arg8[%c4, %c0_104, %c0_105] : memref<7x224x32xf32, #tpu.memory_space<vmem>>, vector<1x224x32xf32>
    %103 = vector.shape_cast %102 : vector<1x224x32xf32> to vector<224x32xf32>
    %cst_106 = arith.constant dense<0.000000e+00> : vector<1x32xf32>
    %104 = tpu.matmul %101, %103, %cst_106 {dimension_numbers = #tpu.dot_dimension_numbers<[1], [0], [0], [1], [0, 0, 1, 1], [], []>} : vector<1x224xf32>, vector<224x32xf32>, vector<1x32xf32> -> vector<1x32xf32>
    %105 = arith.addf %100, %104 : vector<1x32xf32>
    %106 = vector.extract_strided_slice %81 {offsets = [5, 0], sizes = [1, 224], strides = [1, 1]} : vector<7x224xf32> to vector<1x224xf32>
    %c5 = arith.constant 5 : index
    %c0_107 = arith.constant 0 : index
    %c0_108 = arith.constant 0 : index
    %107 = vector.load %arg8[%c5, %c0_107, %c0_108] : memref<7x224x32xf32, #tpu.memory_space<vmem>>, vector<1x224x32xf32>
    %108 = vector.shape_cast %107 : vector<1x224x32xf32> to vector<224x32xf32>
    %cst_109 = arith.constant dense<0.000000e+00> : vector<1x32xf32>
    %109 = tpu.matmul %106, %108, %cst_109 {dimension_numbers = #tpu.dot_dimension_numbers<[1], [0], [0], [1], [0, 0, 1, 1], [], []>} : vector<1x224xf32>, vector<224x32xf32>, vector<1x32xf32> -> vector<1x32xf32>
    %110 = arith.addf %105, %109 : vector<1x32xf32>
    %111 = vector.extract_strided_slice %81 {offsets = [6, 0], sizes = [1, 224], strides = [1, 1]} : vector<7x224xf32> to vector<1x224xf32>
    %c6 = arith.constant 6 : index
    %c0_110 = arith.constant 0 : index
    %c0_111 = arith.constant 0 : index
    %112 = vector.load %arg8[%c6, %c0_110, %c0_111] : memref<7x224x32xf32, #tpu.memory_space<vmem>>, vector<1x224x32xf32>
    %113 = vector.shape_cast %112 : vector<1x224x32xf32> to vector<224x32xf32>
    %cst_112 = arith.constant dense<0.000000e+00> : vector<1x32xf32>
    %114 = tpu.matmul %111, %113, %cst_112 {dimension_numbers = #tpu.dot_dimension_numbers<[1], [0], [0], [1], [0, 0, 1, 1], [], []>} : vector<1x224xf32>, vector<224x32xf32>, vector<1x32xf32> -> vector<1x32xf32>
    %115 = arith.addf %110, %114 : vector<1x32xf32>
    %c0_113 = arith.constant 0 : index
    %c0_114 = arith.constant 0 : index
    %116 = vector.load %arg9[%c0_113, %c0_114] : memref<1x32xf32, #tpu.memory_space<vmem>>, vector<1x32xf32>
    %117 = arith.addf %115, %116 : vector<1x32xf32>
    %118 = math.tanh %117 : vector<1x32xf32>
    %c0_115 = arith.constant 0 : index
    %c0_116 = arith.constant 0 : index
    %c0_117 = arith.constant 0 : index
    %119 = vector.load %arg10[%c0_115, %c0_116, %c0_117] : memref<1x1x32xf32, #tpu.memory_space<vmem>>, vector<1x1x32xf32>
    %120 = vector.shape_cast %119 : vector<1x1x32xf32> to vector<1x32xf32>
    %121 = vector.shape_cast %118 : vector<1x32xf32> to vector<1x1x32xf32>
    tpu.vector_store %arg10[%c0_115, %c0_116, %c0_117], %121 {strides = array<i32>} : memref<1x1x32xf32, #tpu.memory_space<vmem>>, vector<1x1x32xf32>,
    return
  }
  func.func @transform_0(%arg0: i32) -> (i32, i32, i32) {
    %c0_i32 = arith.constant 0 : i32
    %c0_i32_0 = arith.constant 0 : i32
    %c0_i32_1 = arith.constant 0 : i32
    return %arg0, %c0_i32, %c0_i32_0 : i32, i32, i32
  }
  func.func @transform_1(%arg0: i32) -> (i32, i32, i32) {
    %c0_i32 = arith.constant 0 : i32
    %c0_i32_0 = arith.constant 0 : i32
    %c0_i32_1 = arith.constant 0 : i32
    %c0_i32_2 = arith.constant 0 : i32
    return %c0_i32, %c0_i32_0, %c0_i32_1 : i32, i32, i32
  }
  func.func @transform_2(%arg0: i32) -> (i32, i32, i32, i32) {
    %c0_i32 = arith.constant 0 : i32
    %c0_i32_0 = arith.constant 0 : i32
    %c0_i32_1 = arith.constant 0 : i32
    %c0_i32_2 = arith.constant 0 : i32
    %c0_i32_3 = arith.constant 0 : i32
    return %c0_i32, %c0_i32_0, %c0_i32_1, %c0_i32_2 : i32, i32, i32, i32
  }
  func.func @transform_3(%arg0: i32) -> (i32, i32) {
    %c0_i32 = arith.constant 0 : i32
    %c0_i32_0 = arith.constant 0 : i32
    %c0_i32_1 = arith.constant 0 : i32
    return %c0_i32, %c0_i32_0 : i32, i32
  }
  func.func @transform_4(%arg0: i32) -> (i32, i32, i32) {
    %c0_i32 = arith.constant 0 : i32
    %c0_i32_0 = arith.constant 0 : i32
    %c0_i32_1 = arith.constant 0 : i32
    %c0_i32_2 = arith.constant 0 : i32
    return %c0_i32, %c0_i32_0, %c0_i32_1 : i32, i32, i32
  }
  func.func @transform_5(%arg0: i32) -> (i32, i32, i32, i32) {
    %c0_i32 = arith.constant 0 : i32
    %c0_i32_0 = arith.constant 0 : i32
    %c0_i32_1 = arith.constant 0 : i32
    %c0_i32_2 = arith.constant 0 : i32
    %c0_i32_3 = arith.constant 0 : i32
    return %c0_i32, %c0_i32_0, %c0_i32_1, %c0_i32_2 : i32, i32, i32, i32
  }
  func.func @transform_6(%arg0: i32) -> (i32, i32) {
    %c0_i32 = arith.constant 0 : i32
    %c0_i32_0 = arith.constant 0 : i32
    %c0_i32_1 = arith.constant 0 : i32
    return %c0_i32, %c0_i32_0 : i32, i32
  }
  func.func @transform_7(%arg0: i32) -> (i32, i32, i32) {
    %c0_i32 = arith.constant 0 : i32
    %c0_i32_0 = arith.constant 0 : i32
    %c0_i32_1 = arith.constant 0 : i32
    %c0_i32_2 = arith.constant 0 : i32
    return %c0_i32, %c0_i32_0, %c0_i32_1 : i32, i32, i32
  }
  func.func @transform_8(%arg0: i32) -> (i32, i32) {
    %c0_i32 = arith.constant 0 : i32
    %c0_i32_0 = arith.constant 0 : i32
    %c0_i32_1 = arith.constant 0 : i32
    return %c0_i32, %c0_i32_0 : i32, i32
  }
  func.func @transform_9(%arg0: i32) -> (i32, i32, i32) {
    %c0_i32 = arith.constant 0 : i32
    %c0_i32_0 = arith.constant 0 : i32
    %c0_i32_1 = arith.constant 0 : i32
    return %arg0, %c0_i32, %c0_i32_0 : i32, i32, i32
  }
}

</mosaic_0001>

<llo_original>
// kernel: cnn_forward.1
$region0: #{cnn_forward.1}
  #allocation0 [shape = 'u32[]', space=smem, size = 0x4, offset = 0x4, fixed_abs, tag = 'smem constant byte address 0x4 - core index']
  #allocation1 [shape = 'u32[144,128]{1,0:T(1,128)}', space=vmem, size = 0x12000, scoped, tag = 'internal scratch']
  %s0 = inlined_call_operand.vmem [shape: f32[2,28,28], index: 0, kind: input, shape index: {}]
  %s1 = inlined_call_operand.vmem [shape: f32[3,28,28], index: 1, kind: input, shape index: {}]
  %s2 = inlined_call_operand.vmem [shape: f32[2,3,28,224], index: 2, kind: input, shape index: {}]
  %s3 = inlined_call_operand.vmem [shape: f32[1,224], index: 3, kind: input, shape index: {}]
  %s4 = inlined_call_operand.vmem [shape: f32[3,14,14], index: 4, kind: input, shape index: {}]
  %s5 = inlined_call_operand.vmem [shape: f32[2,3,224,224], index: 5, kind: input, shape index: {}]
  %s6 = inlined_call_operand.vmem [shape: f32[1,224], index: 6, kind: input, shape index: {}]
  %s7 = inlined_call_operand.vmem [shape: f32[7,224,32], index: 7, kind: input, shape index: {}]
  %s8 = inlined_call_operand.vmem [shape: f32[1,32], index: 8, kind: input, shape index: {}]
  %s9 = inlined_call_operand.hbm [shape: f32[2,1,32], index: 9, kind: output, shape index: {}]
  %s10 = sld [smem:[#allocation0]]
  $region69: #{cnn_forward.1} parent=0
    _
  %s12 = ssub.s32 1, %s10
  %s13 = scalar_select 0, %s12, %s10
  $region1: #{cnn_forward.1} parent=0
    #allocation2 [shape = 'u8[1024]{0}', space=vmem, size = 0x400, scoped, tag = 'output window, operand 0']
    #allocation3 [shape = 's32[2]{0}', space=sflag, size = 0x8, scoped, tag = 'scoped memory for cnn_forward.1']
    %14 = vsyncpa [#allocation3], 0
    %s15 = scalar_lea.sflag [#allocation3], 1
    %16 = vsyncpa %s15, 0
    loop: start=0, step=1, limit=4
    $region2: #{cnn_forward.1} parent=1 // loop_pre_header
      _
    $region3: #{cnn_forward.1} parent=1 // loop_header
      %s18 = sphi 0, %s22
      %p19 = scmp.ge.s32.totalorder %s18, 4
      %s28 = sphi 0, %s30
      %s31 = sphi 0, %s28
      %s32 = sphi 0, %s31
      %s48 = sphi 0, %s32
      %s52 = sphi 0, %s52
      %s54 = sphi 0, %s52
      %s55 = sphi 0, %s54
      %s69 = sphi 0, %s55
      %s73 = sphi 0, %s73
      %s75 = sphi 0, %s73
      %s76 = sphi 0, %s75
      %s90 = sphi 0, %s76
      %s94 = sphi 0, %s94
      %s96 = sphi 0, %s94
      %s97 = sphi 0, %s96
      %s111 = sphi 0, %s97
      %s115 = sphi 0, %s115
      %s117 = sphi 0, %s115
      %s118 = sphi 0, %s117
      %s132 = sphi 0, %s118
      %s136 = sphi 0, %s136
      %s138 = sphi 0, %s136
      %s139 = sphi 0, %s138
      %s153 = sphi 0, %s139
      %s157 = sphi 0, %s157
      %s159 = sphi 0, %s157
      %s160 = sphi 0, %s159
      %s174 = sphi 0, %s160
      %s178 = sphi 0, %s178
      %s180 = sphi 0, %s178
      %s181 = sphi 0, %s180
      %s195 = sphi 0, %s181
      %s199 = sphi 0, %s199
      %s201 = sphi 0, %s199
      %s202 = sphi 0, %s201
      %s216 = sphi 0, %s202
      %s222 = sphi 0, %s224
      %s225 = sphi 0, %s222
      %s226 = sphi 0, %s225
      %s242 = sphi 0, %s226
    $region4: #{cnn_forward.1} parent=1 // loop_header_branch
      %21 = sbr.rel (%p19) target = $region8
    $region5: #{cnn_forward.1} parent=1 // loop_body
      %s23 = ssub.s32 %s18, 1
      %s24 = ssub.s32 %s18, 2
      %s25 = sadd.s32 %s18, 1
      %s26 = ssub.s32 %s18, %s25
      %p27 = scmp.eq.s32.totalorder %s26, 0
      %s29 = sadd.s32 %s28, 1
      %s30 = scalar_select %p27, %s28, %s29
      %p33 = pneg %p27
      %p34 = scmp.eq.s32.totalorder %s18, 1
      %p35 = por %p33, %p34
      %p36 = scmp.ne.s32.totalorder %s28, %s31
      %p37 = scmp.eq.s32.totalorder %s18, 0
      %p38 = por %p36, %p37
      %p39 = scmp.ne.s32.totalorder %s28, %s31
      %p40 = scmp.eq.s32.totalorder %s23, 1
      %p41 = por %p39, %p40
      %p42 = scmp.ne.s32.totalorder %s31, %s32
      %p43 = scmp.eq.s32.totalorder %s23, 0
      %p44 = por %p42, %p43
      %p45 = scmp.ne.s32.totalorder %s31, %s32
      %p46 = scmp.eq.s32.totalorder %s24, 1
      %p47 = por %p45, %p46
      %p49 = scmp.ne.s32.totalorder %s32, %s48
      %p50 = scmp.eq.s32.totalorder %s24, 0
      %p51 = por %p49, %p50
      %s53 = sadd.s32 %s52, 1
      %p56 = scmp.eq.s32.totalorder %s18, 1
      %p57 = scmp.ne.s32.totalorder %s52, %s54
      %p58 = scmp.eq.s32.totalorder %s18, 0
      %p59 = por %p57, %p58
      %p60 = scmp.ne.s32.totalorder %s52, %s54
      %p61 = scmp.eq.s32.totalorder %s23, 1
      %p62 = por %p60, %p61
      %p63 = scmp.ne.s32.totalorder %s54, %s55
      %p64 = scmp.eq.s32.totalorder %s23, 0
      %p65 = por %p63, %p64
      %p66 = scmp.ne.s32.totalorder %s54, %s55
      %p67 = scmp.eq.s32.totalorder %s24, 1
      %p68 = por %p66, %p67
      %p70 = scmp.ne.s32.totalorder %s55, %s69
      %p71 = scmp.eq.s32.totalorder %s24, 0
      %p72 = por %p70, %p71
      %s74 = sadd.s32 %s73, 1
      %p77 = scmp.eq.s32.totalorder %s18, 1
      %p78 = scmp.ne.s32.totalorder %s73, %s75
      %p79 = scmp.eq.s32.totalorder %s18, 0
      %p80 = por %p78, %p79
      %p81 = scmp.ne.s32.totalorder %s73, %s75
      %p82 = scmp.eq.s32.totalorder %s23, 1
      %p83 = por %p81, %p82
      %p84 = scmp.ne.s32.totalorder %s75, %s76
      %p85 = scmp.eq.s32.totalorder %s23, 0
      %p86 = por %p84, %p85
      %p87 = scmp.ne.s32.totalorder %s75, %s76
      %p88 = scmp.eq.s32.totalorder %s24, 1
      %p89 = por %p87, %p88
      %p91 = scmp.ne.s32.totalorder %s76, %s90
      %p92 = scmp.eq.s32.totalorder %s24, 0
      %p93 = por %p91, %p92
      %s95 = sadd.s32 %s94, 1
      %p98 = scmp.eq.s32.totalorder %s18, 1
      %p99 = scmp.ne.s32.totalorder %s94, %s96
      %p100 = scmp.eq.s32.totalorder %s18, 0
      %p101 = por %p99, %p100
      %p102 = scmp.ne.s32.totalorder %s94, %s96
      %p103 = scmp.eq.s32.totalorder %s23, 1
      %p104 = por %p102, %p103
      %p105 = scmp.ne.s32.totalorder %s96, %s97
      %p106 = scmp.eq.s32.totalorder %s23, 0
      %p107 = por %p105, %p106
      %p108 = scmp.ne.s32.totalorder %s96, %s97
      %p109 = scmp.eq.s32.totalorder %s24, 1
      %p110 = por %p108, %p109
      %p112 = scmp.ne.s32.totalorder %s97, %s111
      %p113 = scmp.eq.s32.totalorder %s24, 0
      %p114 = por %p112, %p113
      %s116 = sadd.s32 %s115, 1
      %p119 = scmp.eq.s32.totalorder %s18, 1
      %p120 = scmp.ne.s32.totalorder %s115, %s117
      %p121 = scmp.eq.s32.totalorder %s18, 0
      %p122 = por %p120, %p121
      %p123 = scmp.ne.s32.totalorder %s115, %s117
      %p124 = scmp.eq.s32.totalorder %s23, 1
      %p125 = por %p123, %p124
      %p126 = scmp.ne.s32.totalorder %s117, %s118
      %p127 = scmp.eq.s32.totalorder %s23, 0
      %p128 = por %p126, %p127
      %p129 = scmp.ne.s32.totalorder %s117, %s118
      %p130 = scmp.eq.s32.totalorder %s24, 1
      %p131 = por %p129, %p130
      %p133 = scmp.ne.s32.totalorder %s118, %s132
      %p134 = scmp.eq.s32.totalorder %s24, 0
      %p135 = por %p133, %p134
      %s137 = sadd.s32 %s136, 1
      %p140 = scmp.eq.s32.totalorder %s18, 1
      %p141 = scmp.ne.s32.totalorder %s136, %s138
      %p142 = scmp.eq.s32.totalorder %s18, 0
      %p143 = por %p141, %p142
      %p144 = scmp.ne.s32.totalorder %s136, %s138
      %p145 = scmp.eq.s32.totalorder %s23, 1
      %p146 = por %p144, %p145
      %p147 = scmp.ne.s32.totalorder %s138, %s139
      %p148 = scmp.eq.s32.totalorder %s23, 0
      %p149 = por %p147, %p148
      %p150 = scmp.ne.s32.totalorder %s138, %s139
      %p151 = scmp.eq.s32.totalorder %s24, 1
      %p152 = por %p150, %p151
      %p154 = scmp.ne.s32.totalorder %s139, %s153
      %p155 = scmp.eq.s32.totalorder %s24, 0
      %p156 = por %p154, %p155
      %s158 = sadd.s32 %s157, 1
      %p161 = scmp.eq.s32.totalorder %s18, 1
      %p162 = scmp.ne.s32.totalorder %s157, %s159
      %p163 = scmp.eq.s32.totalorder %s18, 0
      %p164 = por %p162, %p163
      %p165 = scmp.ne.s32.totalorder %s157, %s159
      %p166 = scmp.eq.s32.totalorder %s23, 1
      %p167 = por %p165, %p166
      %p168 = scmp.ne.s32.totalorder %s159, %s160
      %p169 = scmp.eq.s32.totalorder %s23, 0
      %p170 = por %p168, %p169
      %p171 = scmp.ne.s32.totalorder %s159, %s160
      %p172 = scmp.eq.s32.totalorder %s24, 1
      %p173 = por %p171, %p172
      %p175 = scmp.ne.s32.totalorder %s160, %s174
      %p176 = scmp.eq.s32.totalorder %s24, 0
      %p177 = por %p175, %p176
      %s179 = sadd.s32 %s178, 1
      %p182 = scmp.eq.s32.totalorder %s18, 1
      %p183 = scmp.ne.s32.totalorder %s178, %s180
      %p184 = scmp.eq.s32.totalorder %s18, 0
      %p185 = por %p183, %p184
      %p186 = scmp.ne.s32.totalorder %s178, %s180
      %p187 = scmp.eq.s32.totalorder %s23, 1
      %p188 = por %p186, %p187
      %p189 = scmp.ne.s32.totalorder %s180, %s181
      %p190 = scmp.eq.s32.totalorder %s23, 0
      %p191 = por %p189, %p190
      %p192 = scmp.ne.s32.totalorder %s180, %s181
      %p193 = scmp.eq.s32.totalorder %s24, 1
      %p194 = por %p192, %p193
      %p196 = scmp.ne.s32.totalorder %s181, %s195
      %p197 = scmp.eq.s32.totalorder %s24, 0
      %p198 = por %p196, %p197
      %s200 = sadd.s32 %s199, 1
      %p203 = scmp.eq.s32.totalorder %s18, 1
      %p204 = scmp.ne.s32.totalorder %s199, %s201
      %p205 = scmp.eq.s32.totalorder %s18, 0
      %p206 = por %p204, %p205
      %p207 = scmp.ne.s32.totalorder %s199, %s201
      %p208 = scmp.eq.s32.totalorder %s23, 1
      %p209 = por %p207, %p208
      %p210 = scmp.ne.s32.totalorder %s201, %s202
      %p211 = scmp.eq.s32.totalorder %s23, 0
      %p212 = por %p210, %p211
      %p213 = scmp.ne.s32.totalorder %s201, %s202
      %p214 = scmp.eq.s32.totalorder %s24, 1
      %p215 = por %p213, %p214
      %p217 = scmp.ne.s32.totalorder %s202, %s216
      %p218 = scmp.eq.s32.totalorder %s24, 0
      %p219 = por %p217, %p218
      %s220 = ssub.s32 %s18, %s25
      %p221 = scmp.eq.s32.totalorder %s220, 0
      %s223 = sadd.s32 %s222, 1
      %s224 = scalar_select %p221, %s222, %s223
      %p227 = pneg %p221
      %p228 = scmp.eq.s32.totalorder %s18, 1
      %p229 = por %p227, %p228
      %p230 = scmp.ne.s32.totalorder %s222, %s225
      %p231 = scmp.eq.s32.totalorder %s18, 0
      %p232 = por %p230, %p231
      %p233 = scmp.ne.s32.totalorder %s222, %s225
      %p234 = scmp.eq.s32.totalorder %s23, 1
      %p235 = por %p233, %p234
      %p236 = scmp.ne.s32.totalorder %s225, %s226
      %p237 = scmp.eq.s32.totalorder %s23, 0
      %p238 = por %p236, %p237
      %p239 = scmp.ne.s32.totalorder %s225, %s226
      %p240 = scmp.eq.s32.totalorder %s24, 1
      %p241 = por %p239, %p240
      %p243 = scmp.ne.s32.totalorder %s226, %s242
      %p244 = scmp.eq.s32.totalorder %s24, 0
      %p245 = por %p243, %p244
      %p246 = scmp.le.s32.totalorder 1, %s18
      %p247 = scmp.lt.s32.totalorder %s18, 3
      %p248 = pnand %p246, %p247
      %p249 = pneg %p248
      // Predicated region
      $region9: #{cnn_forward.1} parent=5 // pred_check
        _
      $region10: #{cnn_forward.1} parent=5 // pred_check_branch
        %251 = sbr.rel (%p248) target = $region12
      $region11: #{cnn_forward.1} parent=5 // pred_region
        %s252 = ssub.s32 %s18, 1
        // Predicated region
        $region13: #{cnn_forward.1} parent=11 // pred_check
          %p253 = pneg %p65
        $region14: #{cnn_forward.1} parent=11 // pred_check_branch
          %255 = sbr.rel (%p253) target = $region16
        $region15: #{cnn_forward.1} parent=11 // pred_region
          _
        $region16: #{cnn_forward.1} parent=11 // pred_fallthru
          _
        // Predicated region
        $region17: #{cnn_forward.1} parent=11 // pred_check
          %p256 = pneg %p86
        $region18: #{cnn_forward.1} parent=11 // pred_check_branch
          %258 = sbr.rel (%p256) target = $region20
        $region19: #{cnn_forward.1} parent=11 // pred_region
          _
        $region20: #{cnn_forward.1} parent=11 // pred_fallthru
          _
        // Predicated region
        $region21: #{cnn_forward.1} parent=11 // pred_check
          %p259 = pneg %p107
        $region22: #{cnn_forward.1} parent=11 // pred_check_branch
          %261 = sbr.rel (%p259) target = $region24
        $region23: #{cnn_forward.1} parent=11 // pred_region
          _
        $region24: #{cnn_forward.1} parent=11 // pred_fallthru
          _
        // Predicated region
        $region25: #{cnn_forward.1} parent=11 // pred_check
          %p262 = pneg %p128
        $region26: #{cnn_forward.1} parent=11 // pred_check_branch
          %264 = sbr.rel (%p262) target = $region28
        $region27: #{cnn_forward.1} parent=11 // pred_region
          _
        $region28: #{cnn_forward.1} parent=11 // pred_fallthru
          _
        // Predicated region
        $region29: #{cnn_forward.1} parent=11 // pred_check
          %p265 = pneg %p149
        $region30: #{cnn_forward.1} parent=11 // pred_check_branch
          %267 = sbr.rel (%p265) target = $region32
        $region31: #{cnn_forward.1} parent=11 // pred_region
          _
        $region32: #{cnn_forward.1} parent=11 // pred_fallthru
          _
        // Predicated region
        $region33: #{cnn_forward.1} parent=11 // pred_check
          %p268 = pneg %p170
        $region34: #{cnn_forward.1} parent=11 // pred_check_branch
          %270 = sbr.rel (%p268) target = $region36
        $region35: #{cnn_forward.1} parent=11 // pred_region
          _
        $region36: #{cnn_forward.1} parent=11 // pred_fallthru
          _
        // Predicated region
        $region37: #{cnn_forward.1} parent=11 // pred_check
          %p271 = pneg %p191
        $region38: #{cnn_forward.1} parent=11 // pred_check_branch
          %273 = sbr.rel (%p271) target = $region40
        $region39: #{cnn_forward.1} parent=11 // pred_region
          _
        $region40: #{cnn_forward.1} parent=11 // pred_fallthru
          _
        // Predicated region
        $region41: #{cnn_forward.1} parent=11 // pred_check
          %p274 = pneg %p212
        $region42: #{cnn_forward.1} parent=11 // pred_check_branch
          %276 = sbr.rel (%p274) target = $region44
        $region43: #{cnn_forward.1} parent=11 // pred_region
          _
        $region44: #{cnn_forward.1} parent=11 // pred_fallthru
          _
      $region12: #{cnn_forward.1} parent=5 // pred_fallthru
        _
      %p277 = scmp.lt.s32.totalorder %s18, 2
      // Predicated region
      $region45: #{cnn_forward.1} parent=5 // pred_check
        %p278 = pneg %p277
      $region46: #{cnn_forward.1} parent=5 // pred_check_branch
        %280 = sbr.rel (%p278) target = $region48
      $region47: #{cnn_forward.1} parent=5 // pred_region
        // Predicated region
        $region49: #{cnn_forward.1} parent=47 // pred_check
          %p281 = pneg %p38
        $region50: #{cnn_forward.1} parent=47 // pred_check_branch
          %283 = sbr.rel (%p281) target = $region52
        $region51: #{cnn_forward.1} parent=47 // pred_region
          %p284 = scmp.lt.s32.totalorder %s18, 1
          %s285 = scalar_select %p284, %s18, 1
          %s286 = smul.addr %s285, 4
          %s287 = smul.addr %s286, 8
          %s288 = scalar_lea.vmem %s0, %s287
        $region52: #{cnn_forward.1} parent=47 // pred_fallthru
          _
      $region48: #{cnn_forward.1} parent=5 // pred_fallthru
        _
      %p289 = scmp.le.s32.totalorder 1, %s18
      %p290 = scmp.lt.s32.totalorder %s18, 3
      %p291 = pnand %p289, %p290
      %p292 = pneg %p291
      // Predicated region
      $region53: #{cnn_forward.1} parent=5 // pred_check
        _
      $region54: #{cnn_forward.1} parent=5 // pred_check_branch
        %294 = sbr.rel (%p291) target = $region56
      $region55: #{cnn_forward.1} parent=5 // pred_region
        %s295 = ssub.s32 %s18, 1
        %p296 = scmp.lt.s32.totalorder %s23, 1
        %s297 = scalar_select %p296, %s23, 1
        %s298 = smul.addr %s297, 4
        %s299 = smul.addr %s298, 8
        %s300 = scalar_lea.vmem %s0, %s299
        %p301 = pneg %p44
        %p302 = pneg %p41
        %p303 = pneg %p65
        %p304 = pneg %p62
        %p305 = pneg %p86
        %p306 = pneg %p83
        %p307 = pneg %p107
        %p308 = pneg %p104
        %p309 = pneg %p128
        %p310 = pneg %p125
        %p311 = pneg %p149
        %p312 = pneg %p146
        %p313 = pneg %p170
        %p314 = pneg %p167
        %p315 = pneg %p191
        %p316 = pneg %p188
        %p317 = pneg %p212
        %p318 = pneg %p209
        %p319 = pneg %p238
        %p320 = pneg %p235
        %s321 = sand.u32 %s225, 1
        %s322 = scalar_lea.sflag [#allocation3], %s321
        %s323 = sand.u32 %s225, 1
        %s324 = scalar_lea.vmem [#allocation2], %s323
        %p325 = scmp.lt.s32.totalorder %s23, 1
        %s326 = scalar_select %p325, %s23, 1
        %s327 = smul.addr %s326, 4
        %s328 = smul.addr %s327, 8
        %s329 = scalar_lea.vmem %s0, %s328
        %v330 = vld [vmem:[%s329] sm:$0xff]
        %v331 = vld [vmem:[%s329 + $0x8] sm:$0xff]
        %v332 = vld [vmem:[%s329 + $0x10] sm:$0xff]
        %v333 = vld [vmem:[%s329 + $0x18] sm:$0xf]
        %v334 = vld [vmem:[%s1] sm:$0xff]
        %v335 = vld [vmem:[%s1 + $0x8] sm:$0xff]
        %v336 = vld [vmem:[%s1 + $0x10] sm:$0xff]
        %v337 = vld [vmem:[%s1 + $0x18] sm:$0xf]
        %vm338 = vcmask 228352
        %v340 = vsel %vm338, %v334, 0
        %v343 = vsel %vm338, %v335, 0
        %v346 = vsel %vm338, %v336, 0
        %v349 = vsel %vm338, %v337, 0
        %vm351 = vcmask 1043456
        %v353 = vsel %vm351, %v333, 0
        %355 = vmatprep.subr.mxu0 0.0
        %356 = vmatpush1.msra.mxu0 %v330
        %357 = vmatprep.subr.mxu0 0.0
        %358 = vmatpush1.msra.mxu0 %v331
        %359 = vmatprep.subr.mxu0 0.0
        %360 = vmatpush1.msra.mxu0 %v332
        %361 = vmatprep.subr.mxu0 0.0
        %362 = vmatpush1.msra.mxu0 %v353
        %363 = vmatprep.subr.mxu0 0.0
        %364 = vmatpush1.msra.mxu0 0.0
        %365 = vmatprep.subr.mxu0 0.0
        %366 = vmatpush1.msra.mxu0 0.0
        %367 = vmatprep.subr.mxu0 0.0
        %368 = vmatpush1.msra.mxu0 0.0
        %369 = vmatprep.subr.mxu0 0.0
        %370 = vmatpush1.msra.mxu0 0.0
        %371 = vmatprep.subr.mxu0 0.0
        %372 = vmatpush1.msra.mxu0 0.0
        %373 = vmatprep.subr.mxu0 0.0
        %374 = vmatpush1.msra.mxu0 0.0
        %375 = vmatprep.subr.mxu0 0.0
        %376 = vmatpush1.msra.mxu0 0.0
        %377 = vmatprep.subr.mxu0 0.0
        %378 = vmatpush1.msra.mxu0 0.0
        %379 = vmatprep.subr.mxu0 0.0
        %380 = vmatpush1.msra.mxu0 0.0
        %381 = vmatprep.subr.mxu0 0.0
        %382 = vmatpush1.msra.mxu0 0.0
        %383 = vmatprep.subr.mxu0 0.0
        %384 = vmatpush1.msra.mxu0 0.0
        %385 = vmatprep.subr.mxu0 0.0
        %386 = vmatpush1.msra.mxu0 0.0
        %387 = vmatprep.subr.mxu0 0.0
        %388 = vmatpush1.msra.mxu0 0.0
        %389 = vmatprep.subr.mxu0 0.0
        %390 = vmatpush1.msra.mxu0 0.0
        %391 = vmatprep.subr.mxu0 0.0
        %392 = vmatpush1.msra.mxu0 0.0
        %393 = vmatprep.subr.mxu0 0.0
        %394 = vmatpush1.msra.mxu0 0.0
        %395 = vmatprep.subr.mxu0 0.0
        %396 = vmatpush1.msra.mxu0 0.0
        %397 = vmatprep.subr.mxu0 0.0
        %398 = vmatpush1.msra.mxu0 0.0
        %399 = vmatprep.subr.mxu0 0.0
        %400 = vmatpush1.msra.mxu0 0.0
        %401 = vmatprep.subr.mxu0 0.0
        %402 = vmatpush1.msra.mxu0 0.0
        %403 = vmatprep.subr.mxu0 0.0
        %404 = vmatpush1.msra.mxu0 0.0
        %405 = vmatprep.subr.mxu0 0.0
        %406 = vmatpush1.msra.mxu0 0.0
        %407 = vmatprep.subr.mxu0 0.0
        %408 = vmatpush1.msra.mxu0 0.0
        %409 = vmatprep.subr.mxu0 0.0
        %410 = vmatpush1.msra.mxu0 0.0
        %411 = vmatprep.subr.mxu0 0.0
        %412 = vmatpush1.msra.mxu0 0.0
        %413 = vmatprep.subr.mxu0 0.0
        %414 = vmatpush1.msra.mxu0 0.0
        %415 = vmatprep.subr.mxu0 0.0
        %416 = vmatpush1.msra.mxu0 0.0
        %417 = vmatprep.subr.mxu0 0.0
        %418 = vmatpush1.msra.mxu0 0.0
        %419 = vmatprep.mubr.f32.mxu0 0.0
        %420 = vmatmul.mubr.f32.gmra.mrb[0].mxu0 %v340
        %v421 = vpop.f32.mrb[0].mxu0
        %v422 = vadd.f32 0.0, %v421
        %v423 = vpop.f32.mrb[0].mxu0
        %424 = vmatprep.mubr.f32.mxu0 0.0
        %425 = vmatmul.mubr.f32.gmra.mrb[0].mxu0 %v343
        %v426 = vpop.f32.mrb[0].mxu0
        %v427 = vadd.f32 0.0, %v426
        %v428 = vpop.f32.mrb[0].mxu0
        %429 = vmatprep.mubr.f32.mxu0 0.0
        %430 = vmatmul.mubr.f32.gmra.mrb[0].mxu0 %v346
        %v431 = vpop.f32.mrb[0].mxu0
        %v432 = vadd.f32 0.0, %v431
        %v433 = vpop.f32.mrb[0].mxu0
        %434 = vmatprep.mubr.f32.mxu0 0.0
        %435 = vmatmul.mubr.f32.gmra.mrb[0].mxu0 %v349
        %v436 = vpop.f32.mrb[0].mxu0
        %v437 = vadd.f32 0.0, %v436
        %v438 = vpop.f32.mrb[0].mxu0
        %439 = vdwg.mxu0
        %v440 = vld [vmem:[%s2] sm:$0xff]
        %v441 = vld [vmem:[%s2 + $0x8] sm:$0xff]
        %v442 = vld [vmem:[%s2 + $0x10] sm:$0xff]
        %v443 = vld [vmem:[%s2 + $0x18] sm:$0xff]
        %v444 = vld [vmem:[%s2 + $0x20] sm:$0xff]
        %v445 = vld [vmem:[%s2 + $0x28] sm:$0xff]
        %v446 = vld [vmem:[%s2 + $0x30] sm:$0xf]
        %v447 = vld [vmem:[%s2 + $0x38] sm:$0xf]
        %s448 = scalar_lea.vmem %s2, 192
        %v449 = vld [vmem:[%s448] sm:$0xff]
        %v450 = vld [vmem:[%s448 + $0x8] sm:$0xff]
        %v451 = vld [vmem:[%s448 + $0x10] sm:$0xff]
        %v452 = vld [vmem:[%s448 + $0x18] sm:$0xff]
        %v453 = vld [vmem:[%s448 + $0x20] sm:$0xff]
        %v454 = vld [vmem:[%s448 + $0x28] sm:$0xff]
        %v455 = vld [vmem:[%s448 + $0x30] sm:$0xf]
        %v456 = vld [vmem:[%s448 + $0x38] sm:$0xf]
        %s457 = scalar_lea.vmem %s1, 32
        %v458 = vld [vmem:[%s457] sm:$0xff]
        %v459 = vld [vmem:[%s457 + $0x8] sm:$0xff]
        %v460 = vld [vmem:[%s457 + $0x10] sm:$0xff]
        %v461 = vld [vmem:[%s457 + $0x18] sm:$0xf]
        %v463 = vsel %vm338, %v458, 0
        %v466 = vsel %vm338, %v459, 0
        %v469 = vsel %vm338, %v460, 0
        %v472 = vsel %vm338, %v461, 0
        %474 = vmatprep.subr.mxu0 0.0
        %475 = vmatpush1.msra.mxu0 %v330
        %476 = vmatprep.subr.mxu0 0.0
        %477 = vmatpush1.msra.mxu0 %v331
        %478 = vmatprep.subr.mxu0 0.0
        %479 = vmatpush1.msra.mxu0 %v332
        %480 = vmatprep.subr.mxu0 0.0
        %481 = vmatpush1.msra.mxu0 %v353
        %482 = vmatprep.subr.mxu0 0.0
        %483 = vmatpush1.msra.mxu0 0.0
        %484 = vmatprep.subr.mxu0 0.0
        %485 = vmatpush1.msra.mxu0 0.0
        %486 = vmatprep.subr.mxu0 0.0
        %487 = vmatpush1.msra.mxu0 0.0
        %488 = vmatprep.subr.mxu0 0.0
        %489 = vmatpush1.msra.mxu0 0.0
        %490 = vmatprep.subr.mxu0 0.0
        %491 = vmatpush1.msra.mxu0 0.0
        %492 = vmatprep.subr.mxu0 0.0
        %493 = vmatpush1.msra.mxu0 0.0
        %494 = vmatprep.subr.mxu0 0.0
        %495 = vmatpush1.msra.mxu0 0.0
        %496 = vmatprep.subr.mxu0 0.0
        %497 = vmatpush1.msra.mxu0 0.0
        %498 = vmatprep.subr.mxu0 0.0
        %499 = vmatpush1.msra.mxu0 0.0
        %500 = vmatprep.subr.mxu0 0.0
        %501 = vmatpush1.msra.mxu0 0.0
        %502 = vmatprep.subr.mxu0 0.0
        %503 = vmatpush1.msra.mxu0 0.0
        %504 = vmatprep.subr.mxu0 0.0
        %505 = vmatpush1.msra.mxu0 0.0
        %506 = vmatprep.subr.mxu0 0.0
        %507 = vmatpush1.msra.mxu0 0.0
        %508 = vmatprep.subr.mxu0 0.0
        %509 = vmatpush1.msra.mxu0 0.0
        %510 = vmatprep.subr.mxu0 0.0
        %511 = vmatpush1.msra.mxu0 0.0
        %512 = vmatprep.subr.mxu0 0.0
        %513 = vmatpush1.msra.mxu0 0.0
        %514 = vmatprep.subr.mxu0 0.0
        %515 = vmatpush1.msra.mxu0 0.0
        %516 = vmatprep.subr.mxu0 0.0
        %517 = vmatpush1.msra.mxu0 0.0
        %518 = vmatprep.subr.mxu0 0.0
        %519 = vmatpush1.msra.mxu0 0.0
        %520 = vmatprep.subr.mxu0 0.0
        %521 = vmatpush1.msra.mxu0 0.0
        %522 = vmatprep.subr.mxu0 0.0
        %523 = vmatpush1.msra.mxu0 0.0
        %524 = vmatprep.subr.mxu0 0.0
        %525 = vmatpush1.msra.mxu0 0.0
        %526 = vmatprep.subr.mxu0 0.0
        %527 = vmatpush1.msra.mxu0 0.0
        %528 = vmatprep.subr.mxu0 0.0
        %529 = vmatpush1.msra.mxu0 0.0
        %530 = vmatprep.subr.mxu0 0.0
        %531 = vmatpush1.msra.mxu0 0.0
        %532 = vmatprep.subr.mxu0 0.0
        %533 = vmatpush1.msra.mxu0 0.0
        %534 = vmatprep.subr.mxu0 0.0
        %535 = vmatpush1.msra.mxu0 0.0
        %536 = vmatprep.subr.mxu0 0.0
        %537 = vmatpush1.msra.mxu0 0.0
        %538 = vmatprep.mubr.f32.mxu0 0.0
        %539 = vmatmul.mubr.f32.gmra.mrb[0].mxu0 %v463
        %v540 = vpop.f32.mrb[0].mxu0
        %v541 = vadd.f32 0.0, %v540
        %v542 = vpop.f32.mrb[0].mxu0
        %543 = vmatprep.mubr.f32.mxu0 0.0
        %544 = vmatmul.mubr.f32.gmra.mrb[0].mxu0 %v466
        %v545 = vpop.f32.mrb[0].mxu0
        %v546 = vadd.f32 0.0, %v545
        %v547 = vpop.f32.mrb[0].mxu0
        %548 = vmatprep.mubr.f32.mxu0 0.0
        %549 = vmatmul.mubr.f32.gmra.mrb[0].mxu0 %v469
        %v550 = vpop.f32.mrb[0].mxu0
        %v551 = vadd.f32 0.0, %v550
        %v552 = vpop.f32.mrb[0].mxu0
        %553 = vmatprep.mubr.f32.mxu0 0.0
        %554 = vmatmul.mubr.f32.gmra.mrb[0].mxu0 %v472
        %v555 = vpop.f32.mrb[0].mxu0
        %v556 = vadd.f32 0.0, %v555
        %v557 = vpop.f32.mrb[0].mxu0
        %558 = vdwg.mxu0
        %s559 = scalar_lea.vmem %s2, 64
        %v560 = vld [vmem:[%s559] sm:$0xff]
        %v561 = vld [vmem:[%s559 + $0x8] sm:$0xff]
        %v562 = vld [vmem:[%s559 + $0x10] sm:$0xff]
        %v563 = vld [vmem:[%s559 + $0x18] sm:$0xff]
        %v564 = vld [vmem:[%s559 + $0x20] sm:$0xff]
        %v565 = vld [vmem:[%s559 + $0x28] sm:$0xff]
        %v566 = vld [vmem:[%s559 + $0x30] sm:$0xf]
        %v567 = vld [vmem:[%s559 + $0x38] sm:$0xf]
        %v569 = vsel %vm338, %v541, 0
        %v572 = vsel %vm338, %v546, 0
        %v575 = vsel %vm338, %v551, 0
        %v578 = vsel %vm338, %v556, 0
        %v581 = vsel %vm351, %v566, 0
        %v584 = vsel %vm351, %v567, 0
        %586 = vmatprep.subr.mxu0 %v561
        %587 = vmatpush1.msra.mxu0 %v560
        %588 = vmatprep.subr.mxu0 %v563
        %589 = vmatpush1.msra.mxu0 %v562
        %590 = vmatprep.subr.mxu0 %v565
        %591 = vmatpush1.msra.mxu0 %v564
        %592 = vmatprep.subr.mxu0 %v584
        %593 = vmatpush1.msra.mxu0 %v581
        %594 = vmatprep.subr.mxu0 0.0
        %595 = vmatpush1.msra.mxu0 0.0
        %596 = vmatprep.subr.mxu0 0.0
        %597 = vmatpush1.msra.mxu0 0.0
        %598 = vmatprep.subr.mxu0 0.0
        %599 = vmatpush1.msra.mxu0 0.0
        %600 = vmatprep.subr.mxu0 0.0
        %601 = vmatpush1.msra.mxu0 0.0
        %602 = vmatprep.subr.mxu0 0.0
        %603 = vmatpush1.msra.mxu0 0.0
        %604 = vmatprep.subr.mxu0 0.0
        %605 = vmatpush1.msra.mxu0 0.0
        %606 = vmatprep.subr.mxu0 0.0
        %607 = vmatpush1.msra.mxu0 0.0
        %608 = vmatprep.subr.mxu0 0.0
        %609 = vmatpush1.msra.mxu0 0.0
        %610 = vmatprep.subr.mxu0 0.0
        %611 = vmatpush1.msra.mxu0 0.0
        %612 = vmatprep.subr.mxu0 0.0
        %613 = vmatpush1.msra.mxu0 0.0
        %614 = vmatprep.subr.mxu0 0.0
        %615 = vmatpush1.msra.mxu0 0.0
        %616 = vmatprep.subr.mxu0 0.0
        %617 = vmatpush1.msra.mxu0 0.0
        %618 = vmatprep.subr.mxu0 0.0
        %619 = vmatpush1.msra.mxu0 0.0
        %620 = vmatprep.subr.mxu0 0.0
        %621 = vmatpush1.msra.mxu0 0.0
        %622 = vmatprep.subr.mxu0 0.0
        %623 = vmatpush1.msra.mxu0 0.0
        %624 = vmatprep.subr.mxu0 0.0
        %625 = vmatpush1.msra.mxu0 0.0
        %626 = vmatprep.subr.mxu0 0.0
        %627 = vmatpush1.msra.mxu0 0.0
        %628 = vmatprep.subr.mxu0 0.0
        %629 = vmatpush1.msra.mxu0 0.0
        %630 = vmatprep.subr.mxu0 0.0
        %631 = vmatpush1.msra.mxu0 0.0
        %632 = vmatprep.subr.mxu0 0.0
        %633 = vmatpush1.msra.mxu0 0.0
        %634 = vmatprep.subr.mxu0 0.0
        %635 = vmatpush1.msra.mxu0 0.0
        %636 = vmatprep.subr.mxu0 0.0
        %637 = vmatpush1.msra.mxu0 0.0
        %638 = vmatprep.subr.mxu0 0.0
        %639 = vmatpush1.msra.mxu0 0.0
        %640 = vmatprep.subr.mxu0 0.0
        %641 = vmatpush1.msra.mxu0 0.0
        %642 = vmatprep.subr.mxu0 0.0
        %643 = vmatpush1.msra.mxu0 0.0
        %644 = vmatprep.subr.mxu0 0.0
        %645 = vmatpush1.msra.mxu0 0.0
        %646 = vmatprep.subr.mxu0 0.0
        %647 = vmatpush1.msra.mxu0 0.0
        %648 = vmatprep.subr.mxu0 0.0
        %649 = vmatpush1.msra.mxu0 0.0
        %650 = vmatprep.mubr.f32.mxu0 0.0
        %651 = vmatmul.mubr.f32.gmra.mrb[0].mxu0 %v569
        %v652 = vpop.f32.mrb[0].mxu0
        %v653 = vadd.f32 0.0, %v652
        %v654 = vpop.f32.mrb[0].mxu0
        %v655 = vadd.f32 0.0, %v654
        %656 = vmatprep.mubr.f32.mxu0 0.0
        %657 = vmatmul.mubr.f32.gmra.mrb[0].mxu0 %v572
        %v658 = vpop.f32.mrb[0].mxu0
        %v659 = vadd.f32 0.0, %v658
        %v660 = vpop.f32.mrb[0].mxu0
        %v661 = vadd.f32 0.0, %v660
        %662 = vmatprep.mubr.f32.mxu0 0.0
        %663 = vmatmul.mubr.f32.gmra.mrb[0].mxu0 %v575
        %v664 = vpop.f32.mrb[0].mxu0
        %v665 = vadd.f32 0.0, %v664
        %v666 = vpop.f32.mrb[0].mxu0
        %v667 = vadd.f32 0.0, %v666
        %668 = vmatprep.mubr.f32.mxu0 0.0
        %669 = vmatmul.mubr.f32.gmra.mrb[0].mxu0 %v578
        %v670 = vpop.f32.mrb[0].mxu0
        %v671 = vadd.f32 0.0, %v670
        %v672 = vpop.f32.mrb[0].mxu0
        %v673 = vadd.f32 0.0, %v672
        %674 = vdwg.mxu0
        %s675 = scalar_lea.vmem %s2, 256
        %v676 = vld [vmem:[%s675] sm:$0xff]
        %v677 = vld [vmem:[%s675 + $0x8] sm:$0xff]
        %v678 = vld [vmem:[%s675 + $0x10] sm:$0xff]
        %v679 = vld [vmem:[%s675 + $0x18] sm:$0xff]
        %v680 = vld [vmem:[%s675 + $0x20] sm:$0xff]
        %v681 = vld [vmem:[%s675 + $0x28] sm:$0xff]
        %v682 = vld [vmem:[%s675 + $0x30] sm:$0xf]
        %v683 = vld [vmem:[%s675 + $0x38] sm:$0xf]
        %v685 = vsel %vm351, %v682, 0
        %v688 = vsel %vm351, %v683, 0
        %690 = vmatprep.subr.mxu0 %v677
        %691 = vmatpush1.msra.mxu0 %v676
        %692 = vmatprep.subr.mxu0 %v679
        %693 = vmatpush1.msra.mxu0 %v678
        %694 = vmatprep.subr.mxu0 %v681
        %695 = vmatpush1.msra.mxu0 %v680
        %696 = vmatprep.subr.mxu0 %v688
        %697 = vmatpush1.msra.mxu0 %v685
        %698 = vmatprep.subr.mxu0 0.0
        %699 = vmatpush1.msra.mxu0 0.0
        %700 = vmatprep.subr.mxu0 0.0
        %701 = vmatpush1.msra.mxu0 0.0
        %702 = vmatprep.subr.mxu0 0.0
        %703 = vmatpush1.msra.mxu0 0.0
        %704 = vmatprep.subr.mxu0 0.0
        %705 = vmatpush1.msra.mxu0 0.0
        %706 = vmatprep.subr.mxu0 0.0
        %707 = vmatpush1.msra.mxu0 0.0
        %708 = vmatprep.subr.mxu0 0.0
        %709 = vmatpush1.msra.mxu0 0.0
        %710 = vmatprep.subr.mxu0 0.0
        %711 = vmatpush1.msra.mxu0 0.0
        %712 = vmatprep.subr.mxu0 0.0
        %713 = vmatpush1.msra.mxu0 0.0
        %714 = vmatprep.subr.mxu0 0.0
        %715 = vmatpush1.msra.mxu0 0.0
        %716 = vmatprep.subr.mxu0 0.0
        %717 = vmatpush1.msra.mxu0 0.0
        %718 = vmatprep.subr.mxu0 0.0
        %719 = vmatpush1.msra.mxu0 0.0
        %720 = vmatprep.subr.mxu0 0.0
        %721 = vmatpush1.msra.mxu0 0.0
        %722 = vmatprep.subr.mxu0 0.0
        %723 = vmatpush1.msra.mxu0 0.0
        %724 = vmatprep.subr.mxu0 0.0
        %725 = vmatpush1.msra.mxu0 0.0
        %726 = vmatprep.subr.mxu0 0.0
        %727 = vmatpush1.msra.mxu0 0.0
        %728 = vmatprep.subr.mxu0 0.0
        %729 = vmatpush1.msra.mxu0 0.0
        %730 = vmatprep.subr.mxu0 0.0
        %731 = vmatpush1.msra.mxu0 0.0
        %732 = vmatprep.subr.mxu0 0.0
        %733 = vmatpush1.msra.mxu0 0.0
        %734 = vmatprep.subr.mxu0 0.0
        %735 = vmatpush1.msra.mxu0 0.0
        %736 = vmatprep.subr.mxu0 0.0
        %737 = vmatpush1.msra.mxu0 0.0
        %738 = vmatprep.subr.mxu0 0.0
        %739 = vmatpush1.msra.mxu0 0.0
        %740 = vmatprep.subr.mxu0 0.0
        %741 = vmatpush1.msra.mxu0 0.0
        %742 = vmatprep.subr.mxu0 0.0
        %743 = vmatpush1.msra.mxu0 0.0
        %744 = vmatprep.subr.mxu0 0.0
        %745 = vmatpush1.msra.mxu0 0.0
        %746 = vmatprep.subr.mxu0 0.0
        %747 = vmatpush1.msra.mxu0 0.0
        %748 = vmatprep.subr.mxu0 0.0
        %749 = vmatpush1.msra.mxu0 0.0
        %750 = vmatprep.subr.mxu0 0.0
        %751 = vmatpush1.msra.mxu0 0.0
        %752 = vmatprep.subr.mxu0 0.0
        %753 = vmatpush1.msra.mxu0 0.0
        %754 = vmatprep.mubr.f32.mxu0 0.0
        %755 = vmatmul.mubr.f32.gmra.mrb[0].mxu0 %v569
        %v756 = vpop.f32.mrb[0].mxu0
        %v757 = vadd.f32 0.0, %v756
        %v758 = vpop.f32.mrb[0].mxu0
        %v759 = vadd.f32 0.0, %v758
        %760 = vmatprep.mubr.f32.mxu0 0.0
        %761 = vmatmul.mubr.f32.gmra.mrb[0].mxu0 %v572
        %v762 = vpop.f32.mrb[0].mxu0
        %v763 = vadd.f32 0.0, %v762
        %v764 = vpop.f32.mrb[0].mxu0
        %v765 = vadd.f32 0.0, %v764
        %766 = vmatprep.mubr.f32.mxu0 0.0
        %767 = vmatmul.mubr.f32.gmra.mrb[0].mxu0 %v575
        %v768 = vpop.f32.mrb[0].mxu0
        %v769 = vadd.f32 0.0, %v768
        %v770 = vpop.f32.mrb[0].mxu0
        %v771 = vadd.f32 0.0, %v770
        %772 = vmatprep.mubr.f32.mxu0 0.0
        %773 = vmatmul.mubr.f32.gmra.mrb[0].mxu0 %v578
        %v774 = vpop.f32.mrb[0].mxu0
        %v775 = vadd.f32 0.0, %v774
        %v776 = vpop.f32.mrb[0].mxu0
        %v777 = vadd.f32 0.0, %v776
        %778 = vdwg.mxu0
        %v780 = vsel %vm338, %v422, 0
        %v783 = vsel %vm338, %v427, 0
        %v786 = vsel %vm338, %v432, 0
        %v789 = vsel %vm338, %v437, 0
        %v792 = vsel %vm351, %v446, 0
        %v795 = vsel %vm351, %v447, 0
        %797 = vmatprep.subr.mxu0 %v441
        %798 = vmatpush1.msra.mxu0 %v440
        %799 = vmatprep.subr.mxu0 %v443
        %800 = vmatpush1.msra.mxu0 %v442
        %801 = vmatprep.subr.mxu0 %v445
        %802 = vmatpush1.msra.mxu0 %v444
        %803 = vmatprep.subr.mxu0 %v795
        %804 = vmatpush1.msra.mxu0 %v792
        %805 = vmatprep.subr.mxu0 0.0
        %806 = vmatpush1.msra.mxu0 0.0
        %807 = vmatprep.subr.mxu0 0.0
        %808 = vmatpush1.msra.mxu0 0.0
        %809 = vmatprep.subr.mxu0 0.0
        %810 = vmatpush1.msra.mxu0 0.0
        %811 = vmatprep.subr.mxu0 0.0
        %812 = vmatpush1.msra.mxu0 0.0
        %813 = vmatprep.subr.mxu0 0.0
        %814 = vmatpush1.msra.mxu0 0.0
        %815 = vmatprep.subr.mxu0 0.0
        %816 = vmatpush1.msra.mxu0 0.0
        %817 = vmatprep.subr.mxu0 0.0
        %818 = vmatpush1.msra.mxu0 0.0
        %819 = vmatprep.subr.mxu0 0.0
        %820 = vmatpush1.msra.mxu0 0.0
        %821 = vmatprep.subr.mxu0 0.0
        %822 = vmatpush1.msra.mxu0 0.0
        %823 = vmatprep.subr.mxu0 0.0
        %824 = vmatpush1.msra.mxu0 0.0
        %825 = vmatprep.subr.mxu0 0.0
        %826 = vmatpush1.msra.mxu0 0.0
        %827 = vmatprep.subr.mxu0 0.0
        %828 = vmatpush1.msra.mxu0 0.0
        %829 = vmatprep.subr.mxu0 0.0
        %830 = vmatpush1.msra.mxu0 0.0
        %831 = vmatprep.subr.mxu0 0.0
        %832 = vmatpush1.msra.mxu0 0.0
        %833 = vmatprep.subr.mxu0 0.0
        %834 = vmatpush1.msra.mxu0 0.0
        %835 = vmatprep.subr.mxu0 0.0
        %836 = vmatpush1.msra.mxu0 0.0
        %837 = vmatprep.subr.mxu0 0.0
        %838 = vmatpush1.msra.mxu0 0.0
        %839 = vmatprep.subr.mxu0 0.0
        %840 = vmatpush1.msra.mxu0 0.0
        %841 = vmatprep.subr.mxu0 0.0
        %842 = vmatpush1.msra.mxu0 0.0
        %843 = vmatprep.subr.mxu0 0.0
        %844 = vmatpush1.msra.mxu0 0.0
        %845 = vmatprep.subr.mxu0 0.0
        %846 = vmatpush1.msra.mxu0 0.0
        %847 = vmatprep.subr.mxu0 0.0
        %848 = vmatpush1.msra.mxu0 0.0
        %849 = vmatprep.subr.mxu0 0.0
        %850 = vmatpush1.msra.mxu0 0.0
        %851 = vmatprep.subr.mxu0 0.0
        %852 = vmatpush1.msra.mxu0 0.0
        %853 = vmatprep.subr.mxu0 0.0
        %854 = vmatpush1.msra.mxu0 0.0
        %855 = vmatprep.subr.mxu0 0.0
        %856 = vmatpush1.msra.mxu0 0.0
        %857 = vmatprep.subr.mxu0 0.0
        %858 = vmatpush1.msra.mxu0 0.0
        %859 = vmatprep.subr.mxu0 0.0
        %860 = vmatpush1.msra.mxu0 0.0
        %861 = vmatprep.mubr.f32.mxu0 0.0
        %862 = vmatmul.mubr.f32.gmra.mrb[0].mxu0 %v780
        %v863 = vpop.f32.mrb[0].mxu0
        %v864 = vadd.f32 %v653, %v863
        %v865 = vpop.f32.mrb[0].mxu0
        %v866 = vadd.f32 %v655, %v865
        %867 = vmatprep.mubr.f32.mxu0 0.0
        %868 = vmatmul.mubr.f32.gmra.mrb[0].mxu0 %v783
        %v869 = vpop.f32.mrb[0].mxu0
        %v870 = vadd.f32 %v659, %v869
        %v871 = vpop.f32.mrb[0].mxu0
        %v872 = vadd.f32 %v661, %v871
        %873 = vmatprep.mubr.f32.mxu0 0.0
        %874 = vmatmul.mubr.f32.gmra.mrb[0].mxu0 %v786
        %v875 = vpop.f32.mrb[0].mxu0
        %v876 = vadd.f32 %v665, %v875
        %v877 = vpop.f32.mrb[0].mxu0
        %v878 = vadd.f32 %v667, %v877
        %879 = vmatprep.mubr.f32.mxu0 0.0
        %880 = vmatmul.mubr.f32.gmra.mrb[0].mxu0 %v789
        %v881 = vpop.f32.mrb[0].mxu0
        %v882 = vadd.f32 %v671, %v881
        %v883 = vpop.f32.mrb[0].mxu0
        %v884 = vadd.f32 %v673, %v883
        %885 = vdwg.mxu0
        %v887 = vsel %vm351, %v455, 0
        %v890 = vsel %vm351, %v456, 0
        %892 = vmatprep.subr.mxu0 %v450
        %893 = vmatpush1.msra.mxu0 %v449
        %894 = vmatprep.subr.mxu0 %v452
        %895 = vmatpush1.msra.mxu0 %v451
        %896 = vmatprep.subr.mxu0 %v454
        %897 = vmatpush1.msra.mxu0 %v453
        %898 = vmatprep.subr.mxu0 %v890
        %899 = vmatpush1.msra.mxu0 %v887
        %900 = vmatprep.subr.mxu0 0.0
        %901 = vmatpush1.msra.mxu0 0.0
        %902 = vmatprep.subr.mxu0 0.0
        %903 = vmatpush1.msra.mxu0 0.0
        %904 = vmatprep.subr.mxu0 0.0
        %905 = vmatpush1.msra.mxu0 0.0
        %906 = vmatprep.subr.mxu0 0.0
        %907 = vmatpush1.msra.mxu0 0.0
        %908 = vmatprep.subr.mxu0 0.0
        %909 = vmatpush1.msra.mxu0 0.0
        %910 = vmatprep.subr.mxu0 0.0
        %911 = vmatpush1.msra.mxu0 0.0
        %912 = vmatprep.subr.mxu0 0.0
        %913 = vmatpush1.msra.mxu0 0.0
        %914 = vmatprep.subr.mxu0 0.0
        %915 = vmatpush1.msra.mxu0 0.0
        %916 = vmatprep.subr.mxu0 0.0
        %917 = vmatpush1.msra.mxu0 0.0
        %918 = vmatprep.subr.mxu0 0.0
        %919 = vmatpush1.msra.mxu0 0.0
        %920 = vmatprep.subr.mxu0 0.0
        %921 = vmatpush1.msra.mxu0 0.0
        %922 = vmatprep.subr.mxu0 0.0
        %923 = vmatpush1.msra.mxu0 0.0
        %924 = vmatprep.subr.mxu0 0.0
        %925 = vmatpush1.msra.mxu0 0.0
        %926 = vmatprep.subr.mxu0 0.0
        %927 = vmatpush1.msra.mxu0 0.0
        %928 = vmatprep.subr.mxu0 0.0
        %929 = vmatpush1.msra.mxu0 0.0
        %930 = vmatprep.subr.mxu0 0.0
        %931 = vmatpush1.msra.mxu0 0.0
        %932 = vmatprep.subr.mxu0 0.0
        %933 = vmatpush1.msra.mxu0 0.0
        %934 = vmatprep.subr.mxu0 0.0
        %935 = vmatpush1.msra.mxu0 0.0
        %936 = vmatprep.subr.mxu0 0.0
        %937 = vmatpush1.msra.mxu0 0.0
        %938 = vmatprep.subr.mxu0 0.0
        %939 = vmatpush1.msra.mxu0 0.0
        %940 = vmatprep.subr.mxu0 0.0
        %941 = vmatpush1.msra.mxu0 0.0
        %942 = vmatprep.subr.mxu0 0.0
        %943 = vmatpush1.msra.mxu0 0.0
        %944 = vmatprep.subr.mxu0 0.0
        %945 = vmatpush1.msra.mxu0 0.0
        %946 = vmatprep.subr.mxu0 0.0
        %947 = vmatpush1.msra.mxu0 0.0
        %948 = vmatprep.subr.mxu0 0.0
        %949 = vmatpush1.msra.mxu0 0.0
        %950 = vmatprep.subr.mxu0 0.0
        %951 = vmatpush1.msra.mxu0 0.0
        %952 = vmatprep.subr.mxu0 0.0
        %953 = vmatpush1.msra.mxu0 0.0
        %954 = vmatprep.subr.mxu0 0.0
        %955 = vmatpush1.msra.mxu0 0.0
        %956 = vmatprep.mubr.f32.mxu0 0.0
        %957 = vmatmul.mubr.f32.gmra.mrb[0].mxu0 %v780
        %v958 = vpop.f32.mrb[0].mxu0
        %v959 = vadd.f32 %v757, %v958
        %v960 = vpop.f32.mrb[0].mxu0
        %v961 = vadd.f32 %v759, %v960
        %962 = vmatprep.mubr.f32.mxu0 0.0
        %963 = vmatmul.mubr.f32.gmra.mrb[0].mxu0 %v783
        %v964 = vpop.f32.mrb[0].mxu0
        %v965 = vadd.f32 %v763, %v964
        %v966 = vpop.f32.mrb[0].mxu0
        %v967 = vadd.f32 %v765, %v966
        %968 = vmatprep.mubr.f32.mxu0 0.0
        %969 = vmatmul.mubr.f32.gmra.mrb[0].mxu0 %v786
        %v970 = vpop.f32.mrb[0].mxu0
        %v971 = vadd.f32 %v769, %v970
        %v972 = vpop.f32.mrb[0].mxu0
        %v973 = vadd.f32 %v771, %v972
        %974 = vmatprep.mubr.f32.mxu0 0.0
        %975 = vmatmul.mubr.f32.gmra.mrb[0].mxu0 %v789
        %v976 = vpop.f32.mrb[0].mxu0
        %v977 = vadd.f32 %v775, %v976
        %v978 = vpop.f32.mrb[0].mxu0
        %v979 = vadd.f32 %v777, %v978
        %980 = vdwg.mxu0
        %s981 = scalar_lea.vmem %s1, 64
        %v982 = vld [vmem:[%s981] sm:$0xff]
        %v983 = vld [vmem:[%s981 + $0x8] sm:$0xff]
        %v984 = vld [vmem:[%s981 + $0x10] sm:$0xff]
        %v985 = vld [vmem:[%s981 + $0x18] sm:$0xf]
        %v987 = vsel %vm338, %v982, 0
        %v990 = vsel %vm338, %v983, 0
        %v993 = vsel %vm338, %v984, 0
        %v996 = vsel %vm338, %v985, 0
        %998 = vmatprep.subr.mxu0 0.0
        %999 = vmatpush1.msra.mxu0 %v330
        %1000 = vmatprep.subr.mxu0 0.0
        %1001 = vmatpush1.msra.mxu0 %v331
        %1002 = vmatprep.subr.mxu0 0.0
        %1003 = vmatpush1.msra.mxu0 %v332
        %1004 = vmatprep.subr.mxu0 0.0
        %1005 = vmatpush1.msra.mxu0 %v353
        %1006 = vmatprep.subr.mxu0 0.0
        %1007 = vmatpush1.msra.mxu0 0.0
        %1008 = vmatprep.subr.mxu0 0.0
        %1009 = vmatpush1.msra.mxu0 0.0
        %1010 = vmatprep.subr.mxu0 0.0
        %1011 = vmatpush1.msra.mxu0 0.0
        %1012 = vmatprep.subr.mxu0 0.0
        %1013 = vmatpush1.msra.mxu0 0.0
        %1014 = vmatprep.subr.mxu0 0.0
        %1015 = vmatpush1.msra.mxu0 0.0
        %1016 = vmatprep.subr.mxu0 0.0
        %1017 = vmatpush1.msra.mxu0 0.0
        %1018 = vmatprep.subr.mxu0 0.0
        %1019 = vmatpush1.msra.mxu0 0.0
        %1020 = vmatprep.subr.mxu0 0.0
        %1021 = vmatpush1.msra.mxu0 0.0
        %1022 = vmatprep.subr.mxu0 0.0
        %1023 = vmatpush1.msra.mxu0 0.0
        %1024 = vmatprep.subr.mxu0 0.0
        %1025 = vmatpush1.msra.mxu0 0.0
        %1026 = vmatprep.subr.mxu0 0.0
        %1027 = vmatpush1.msra.mxu0 0.0
        %1028 = vmatprep.subr.mxu0 0.0
        %1029 = vmatpush1.msra.mxu0 0.0
        %1030 = vmatprep.subr.mxu0 0.0
        %1031 = vmatpush1.msra.mxu0 0.0
        %1032 = vmatprep.subr.mxu0 0.0
        %1033 = vmatpush1.msra.mxu0 0.0
        %1034 = vmatprep.subr.mxu0 0.0
        %1035 = vmatpush1.msra.mxu0 0.0
        %1036 = vmatprep.subr.mxu0 0.0
        %1037 = vmatpush1.msra.mxu0 0.0
        %1038 = vmatprep.subr.mxu0 0.0
        %1039 = vmatpush1.msra.mxu0 0.0
        %1040 = vmatprep.subr.mxu0 0.0
        %1041 = vmatpush1.msra.mxu0 0.0
        %1042 = vmatprep.subr.mxu0 0.0
        %1043 = vmatpush1.msra.mxu0 0.0
        %1044 = vmatprep.subr.mxu0 0.0
        %1045 = vmatpush1.msra.mxu0 0.0
        %1046 = vmatprep.subr.mxu0 0.0
        %1047 = vmatpush1.msra.mxu0 0.0
        %1048 = vmatprep.subr.mxu0 0.0
        %1049 = vmatpush1.msra.mxu0 0.0
        %1050 = vmatprep.subr.mxu0 0.0
        %1051 = vmatpush1.msra.mxu0 0.0
        %1052 = vmatprep.subr.mxu0 0.0
        %1053 = vmatpush1.msra.mxu0 0.0
        %1054 = vmatprep.subr.mxu0 0.0
        %1055 = vmatpush1.msra.mxu0 0.0
        %1056 = vmatprep.subr.mxu0 0.0
        %1057 = vmatpush1.msra.mxu0 0.0
        %1058 = vmatprep.subr.mxu0 0.0
        %1059 = vmatpush1.msra.mxu0 0.0
        %1060 = vmatprep.subr.mxu0 0.0
        %1061 = vmatpush1.msra.mxu0 0.0
        %1062 = vmatprep.mubr.f32.mxu0 0.0
        %1063 = vmatmul.mubr.f32.gmra.mrb[0].mxu0 %v987
        %v1064 = vpop.f32.mrb[0].mxu0
        %v1065 = vadd.f32 0.0, %v1064
        %v1066 = vpop.f32.mrb[0].mxu0
        %1067 = vmatprep.mubr.f32.mxu0 0.0
        %1068 = vmatmul.mubr.f32.gmra.mrb[0].mxu0 %v990
        %v1069 = vpop.f32.mrb[0].mxu0
        %v1070 = vadd.f32 0.0, %v1069
        %v1071 = vpop.f32.mrb[0].mxu0
        %1072 = vmatprep.mubr.f32.mxu0 0.0
        %1073 = vmatmul.mubr.f32.gmra.mrb[0].mxu0 %v993
        %v1074 = vpop.f32.mrb[0].mxu0
        %v1075 = vadd.f32 0.0, %v1074
        %v1076 = vpop.f32.mrb[0].mxu0
        %1077 = vmatprep.mubr.f32.mxu0 0.0
        %1078 = vmatmul.mubr.f32.gmra.mrb[0].mxu0 %v996
        %v1079 = vpop.f32.mrb[0].mxu0
        %v1080 = vadd.f32 0.0, %v1079
        %v1081 = vpop.f32.mrb[0].mxu0
        %1082 = vdwg.mxu0
        %s1083 = scalar_lea.vmem %s2, 128
        %v1084 = vld [vmem:[%s1083] sm:$0xff]
        %v1085 = vld [vmem:[%s1083 + $0x8] sm:$0xff]
        %v1086 = vld [vmem:[%s1083 + $0x10] sm:$0xff]
        %v1087 = vld [vmem:[%s1083 + $0x18] sm:$0xff]
        %v1088 = vld [vmem:[%s1083 + $0x20] sm:$0xff]
        %v1089 = vld [vmem:[%s1083 + $0x28] sm:$0xff]
        %v1090 = vld [vmem:[%s1083 + $0x30] sm:$0xf]
        %v1091 = vld [vmem:[%s1083 + $0x38] sm:$0xf]
        %v1093 = vsel %vm338, %v1065, 0
        %v1096 = vsel %vm338, %v1070, 0
        %v1099 = vsel %vm338, %v1075, 0
        %v1102 = vsel %vm338, %v1080, 0
        %v1105 = vsel %vm351, %v1090, 0
        %v1108 = vsel %vm351, %v1091, 0
        %1110 = vmatprep.subr.mxu0 %v1085
        %1111 = vmatpush1.msra.mxu0 %v1084
        %1112 = vmatprep.subr.mxu0 %v1087
        %1113 = vmatpush1.msra.mxu0 %v1086
        %1114 = vmatprep.subr.mxu0 %v1089
        %1115 = vmatpush1.msra.mxu0 %v1088
        %1116 = vmatprep.subr.mxu0 %v1108
        %1117 = vmatpush1.msra.mxu0 %v1105
        %1118 = vmatprep.subr.mxu0 0.0
        %1119 = vmatpush1.msra.mxu0 0.0
        %1120 = vmatprep.subr.mxu0 0.0
        %1121 = vmatpush1.msra.mxu0 0.0
        %1122 = vmatprep.subr.mxu0 0.0
        %1123 = vmatpush1.msra.mxu0 0.0
        %1124 = vmatprep.subr.mxu0 0.0
        %1125 = vmatpush1.msra.mxu0 0.0
        %1126 = vmatprep.subr.mxu0 0.0
        %1127 = vmatpush1.msra.mxu0 0.0
        %1128 = vmatprep.subr.mxu0 0.0
        %1129 = vmatpush1.msra.mxu0 0.0
        %1130 = vmatprep.subr.mxu0 0.0
        %1131 = vmatpush1.msra.mxu0 0.0
        %1132 = vmatprep.subr.mxu0 0.0
        %1133 = vmatpush1.msra.mxu0 0.0
        %1134 = vmatprep.subr.mxu0 0.0
        %1135 = vmatpush1.msra.mxu0 0.0
        %1136 = vmatprep.subr.mxu0 0.0
        %1137 = vmatpush1.msra.mxu0 0.0
        %1138 = vmatprep.subr.mxu0 0.0
        %1139 = vmatpush1.msra.mxu0 0.0
        %1140 = vmatprep.subr.mxu0 0.0
        %1141 = vmatpush1.msra.mxu0 0.0
        %1142 = vmatprep.subr.mxu0 0.0
        %1143 = vmatpush1.msra.mxu0 0.0
        %1144 = vmatprep.subr.mxu0 0.0
        %1145 = vmatpush1.msra.mxu0 0.0
        %1146 = vmatprep.subr.mxu0 0.0
        %1147 = vmatpush1.msra.mxu0 0.0
        %1148 = vmatprep.subr.mxu0 0.0
        %1149 = vmatpush1.msra.mxu0 0.0
        %1150 = vmatprep.subr.mxu0 0.0
        %1151 = vmatpush1.msra.mxu0 0.0
        %1152 = vmatprep.subr.mxu0 0.0
        %1153 = vmatpush1.msra.mxu0 0.0
        %1154 = vmatprep.subr.mxu0 0.0
        %1155 = vmatpush1.msra.mxu0 0.0
        %1156 = vmatprep.subr.mxu0 0.0
        %1157 = vmatpush1.msra.mxu0 0.0
        %1158 = vmatprep.subr.mxu0 0.0
        %1159 = vmatpush1.msra.mxu0 0.0
        %1160 = vmatprep.subr.mxu0 0.0
        %1161 = vmatpush1.msra.mxu0 0.0
        %1162 = vmatprep.subr.mxu0 0.0
        %1163 = vmatpush1.msra.mxu0 0.0
        %1164 = vmatprep.subr.mxu0 0.0
        %1165 = vmatpush1.msra.mxu0 0.0
        %1166 = vmatprep.subr.mxu0 0.0
        %1167 = vmatpush1.msra.mxu0 0.0
        %1168 = vmatprep.subr.mxu0 0.0
        %1169 = vmatpush1.msra.mxu0 0.0
        %1170 = vmatprep.subr.mxu0 0.0
        %1171 = vmatpush1.msra.mxu0 0.0
        %1172 = vmatprep.subr.mxu0 0.0
        %1173 = vmatpush1.msra.mxu0 0.0
        %1174 = vmatprep.mubr.f32.mxu0 0.0
        %1175 = vmatmul.mubr.f32.gmra.mrb[0].mxu0 %v1093
        %v1176 = vpop.f32.mrb[0].mxu0
        %v1177 = vadd.f32 0.0, %v1176
        %v1178 = vpop.f32.mrb[0].mxu0
        %v1179 = vadd.f32 0.0, %v1178
        %1180 = vmatprep.mubr.f32.mxu0 0.0
        %1181 = vmatmul.mubr.f32.gmra.mrb[0].mxu0 %v1096
        %v1182 = vpop.f32.mrb[0].mxu0
        %v1183 = vadd.f32 0.0, %v1182
        %v1184 = vpop.f32.mrb[0].mxu0
        %v1185 = vadd.f32 0.0, %v1184
        %1186 = vmatprep.mubr.f32.mxu0 0.0
        %1187 = vmatmul.mubr.f32.gmra.mrb[0].mxu0 %v1099
        %v1188 = vpop.f32.mrb[0].mxu0
        %v1189 = vadd.f32 0.0, %v1188
        %v1190 = vpop.f32.mrb[0].mxu0
        %v1191 = vadd.f32 0.0, %v1190
        %1192 = vmatprep.mubr.f32.mxu0 0.0
        %1193 = vmatmul.mubr.f32.gmra.mrb[0].mxu0 %v1102
        %v1194 = vpop.f32.mrb[0].mxu0
        %v1195 = vadd.f32 0.0, %v1194
        %v1196 = vpop.f32.mrb[0].mxu0
        %v1197 = vadd.f32 0.0, %v1196
        %1198 = vdwg.mxu0
        %s1199 = scalar_lea.vmem %s2, 320
        %v1200 = vld [vmem:[%s1199] sm:$0xff]
        %v1201 = vld [vmem:[%s1199 + $0x8] sm:$0xff]
        %v1202 = vld [vmem:[%s1199 + $0x10] sm:$0xff]
        %v1203 = vld [vmem:[%s1199 + $0x18] sm:$0xff]
        %v1204 = vld [vmem:[%s1199 + $0x20] sm:$0xff]
        %v1205 = vld [vmem:[%s1199 + $0x28] sm:$0xff]
        %v1206 = vld [vmem:[%s1199 + $0x30] sm:$0xf]
        %v1207 = vld [vmem:[%s1199 + $0x38] sm:$0xf]
        %v1209 = vsel %vm351, %v1206, 0
        %v1212 = vsel %vm351, %v1207, 0
        %1214 = vmatprep.subr.mxu0 %v1201
        %1215 = vmatpush1.msra.mxu0 %v1200
        %1216 = vmatprep.subr.mxu0 %v1203
        %1217 = vmatpush1.msra.mxu0 %v1202
        %1218 = vmatprep.subr.mxu0 %v1205
        %1219 = vmatpush1.msra.mxu0 %v1204
        %1220 = vmatprep.subr.mxu0 %v1212
        %1221 = vmatpush1.msra.mxu0 %v1209
        %1222 = vmatprep.subr.mxu0 0.0
        %1223 = vmatpush1.msra.mxu0 0.0
        %1224 = vmatprep.subr.mxu0 0.0
        %1225 = vmatpush1.msra.mxu0 0.0
        %1226 = vmatprep.subr.mxu0 0.0
        %1227 = vmatpush1.msra.mxu0 0.0
        %1228 = vmatprep.subr.mxu0 0.0
        %1229 = vmatpush1.msra.mxu0 0.0
        %1230 = vmatprep.subr.mxu0 0.0
        %1231 = vmatpush1.msra.mxu0 0.0
        %1232 = vmatprep.subr.mxu0 0.0
        %1233 = vmatpush1.msra.mxu0 0.0
        %1234 = vmatprep.subr.mxu0 0.0
        %1235 = vmatpush1.msra.mxu0 0.0
        %1236 = vmatprep.subr.mxu0 0.0
        %1237 = vmatpush1.msra.mxu0 0.0
        %1238 = vmatprep.subr.mxu0 0.0
        %1239 = vmatpush1.msra.mxu0 0.0
        %1240 = vmatprep.subr.mxu0 0.0
        %1241 = vmatpush1.msra.mxu0 0.0
        %1242 = vmatprep.subr.mxu0 0.0
        %1243 = vmatpush1.msra.mxu0 0.0
        %1244 = vmatprep.subr.mxu0 0.0
        %1245 = vmatpush1.msra.mxu0 0.0
        %1246 = vmatprep.subr.mxu0 0.0
        %1247 = vmatpush1.msra.mxu0 0.0
        %1248 = vmatprep.subr.mxu0 0.0
        %1249 = vmatpush1.msra.mxu0 0.0
        %1250 = vmatprep.subr.mxu0 0.0
        %1251 = vmatpush1.msra.mxu0 0.0
        %1252 = vmatprep.subr.mxu0 0.0
        %1253 = vmatpush1.msra.mxu0 0.0
        %1254 = vmatprep.subr.mxu0 0.0
        %1255 = vmatpush1.msra.mxu0 0.0
        %1256 = vmatprep.subr.mxu0 0.0
        %1257 = vmatpush1.msra.mxu0 0.0
        %1258 = vmatprep.subr.mxu0 0.0
        %1259 = vmatpush1.msra.mxu0 0.0
        %1260 = vmatprep.subr.mxu0 0.0
        %1261 = vmatpush1.msra.mxu0 0.0
        %1262 = vmatprep.subr.mxu0 0.0
        %1263 = vmatpush1.msra.mxu0 0.0
        %1264 = vmatprep.subr.mxu0 0.0
        %1265 = vmatpush1.msra.mxu0 0.0
        %1266 = vmatprep.subr.mxu0 0.0
        %1267 = vmatpush1.msra.mxu0 0.0
        %1268 = vmatprep.subr.mxu0 0.0
        %1269 = vmatpush1.msra.mxu0 0.0
        %1270 = vmatprep.subr.mxu0 0.0
        %1271 = vmatpush1.msra.mxu0 0.0
        %1272 = vmatprep.subr.mxu0 0.0
        %1273 = vmatpush1.msra.mxu0 0.0
        %1274 = vmatprep.subr.mxu0 0.0
        %1275 = vmatpush1.msra.mxu0 0.0
        %1276 = vmatprep.subr.mxu0 0.0
        %1277 = vmatpush1.msra.mxu0 0.0
        %1278 = vmatprep.mubr.f32.mxu0 0.0
        %1279 = vmatmul.mubr.f32.gmra.mrb[0].mxu0 %v1093
        %v1280 = vpop.f32.mrb[0].mxu0
        %v1281 = vadd.f32 0.0, %v1280
        %v1282 = vpop.f32.mrb[0].mxu0
        %v1283 = vadd.f32 0.0, %v1282
        %1284 = vmatprep.mubr.f32.mxu0 0.0
        %1285 = vmatmul.mubr.f32.gmra.mrb[0].mxu0 %v1096
        %v1286 = vpop.f32.mrb[0].mxu0
        %v1287 = vadd.f32 0.0, %v1286
        %v1288 = vpop.f32.mrb[0].mxu0
        %v1289 = vadd.f32 0.0, %v1288
        %1290 = vmatprep.mubr.f32.mxu0 0.0
        %1291 = vmatmul.mubr.f32.gmra.mrb[0].mxu0 %v1099
        %v1292 = vpop.f32.mrb[0].mxu0
        %v1293 = vadd.f32 0.0, %v1292
        %v1294 = vpop.f32.mrb[0].mxu0
        %v1295 = vadd.f32 0.0, %v1294
        %1296 = vmatprep.mubr.f32.mxu0 0.0
        %1297 = vmatmul.mubr.f32.gmra.mrb[0].mxu0 %v1102
        %v1298 = vpop.f32.mrb[0].mxu0
        %v1299 = vadd.f32 0.0, %v1298
        %v1300 = vpop.f32.mrb[0].mxu0
        %v1301 = vadd.f32 0.0, %v1300
        %1302 = vdwg.mxu0
        %v1303 = vadd.f32 %v864, %v1177
        %v1304 = vadd.f32 %v866, %v1179
        %v1305 = vadd.f32 %v870, %v1183
        %v1306 = vadd.f32 %v872, %v1185
        %v1307 = vadd.f32 %v876, %v1189
        %v1308 = vadd.f32 %v878, %v1191
        %v1309 = vadd.f32 %v882, %v1195
        %v1310 = vadd.f32 %v884, %v1197
        %v1311 = vadd.f32 %v959, %v1281
        %v1312 = vadd.f32 %v961, %v1283
        %v1313 = vadd.f32 %v965, %v1287
        %v1314 = vadd.f32 %v967, %v1289
        %v1315 = vadd.f32 %v971, %v1293
        %v1316 = vadd.f32 %v973, %v1295
        %v1317 = vadd.f32 %v977, %v1299
        %v1318 = vadd.f32 %v979, %v1301
        %v1319 = vmax.f32 %v1303, %v1311
        %v1320 = vmax.f32 %v1304, %v1312
        %v1321 = vmax.f32 %v1305, %v1313
        %v1322 = vmax.f32 %v1306, %v1314
        %v1323 = vmax.f32 %v1307, %v1315
        %v1324 = vmax.f32 %v1308, %v1316
        %v1325 = vmax.f32 %v1309, %v1317
        %v1326 = vmax.f32 %v1310, %v1318
        %vm1333 = vcmask 1041408
        %v1334 = vrot.slane %v1321, 6
        %v1335 = vrot.slane %v1323, 6
        %v1336 = vsel %vm1333, %v1334, %v1335
        %v1337 = vrot.slane %v1322, 6
        %v1338 = vrot.slane %v1324, 6
        %v1339 = vsel %vm1333, %v1337, %v1338
        %v1340 = vrot.slane %v1325, 6
        %v1341 = vsel %vm1333, %v1335, %v1340
        %v1342 = vrot.slane %v1326, 6
        %v1343 = vsel %vm1333, %v1338, %v1342
        %v1348 = vmax.f32 %v1319, %v1336
        %v1349 = vmax.f32 %v1320, %v1339
        %v1350 = vmax.f32 %v1321, %v1341
        %v1351 = vmax.f32 %v1322, %v1343
        %v1352 = vld [vmem:[%s3] sm:$0x3]
        %v1354 = vlaneseq
        %v1355 = vshrl.u32 %v1354, 7
        %v1356 = vsub.s32 0, %v1355
        %v1357 = vrot.slane %v1352, %v1356
        %v1358 = vlaneseq
        %v1359 = vshrl.u32 %v1358, 7
        %v1360 = vsub.s32 1, %v1359
        %v1361 = vrot.slane %v1352, %v1360
        %v1364 = vadd.f32 %v1348, %v1357
        %v1365 = vadd.f32 %v1349, %v1361
        %v1366 = vadd.f32 %v1350, %v1357
        %v1367 = vadd.f32 %v1351, %v1361
        %v1368 = vmax.f32 %v1364, 0.0
        %v1369 = vmax.f32 %v1365, 0.0
        %v1370 = vmax.f32 %v1366, 0.0
        %v1371 = vmax.f32 %v1367, 0.0
        %v1372 = vld [vmem:[%s4] sm:$0xff]
        %v1373 = vld [vmem:[%s4 + $0x8] sm:$0x3f]
        %vm1374 = vcmask 113664
        %v1376 = vsel %vm1374, %v1372, 0
        %v1379 = vsel %vm1374, %v1373, 0
        %vm1381 = vcmask 1045504
        %v1383 = vsel %vm1381, %v1370, 0
        %v1386 = vsel %vm1381, %v1371, 0
        %1388 = vmatprep.subr.mxu0 %v1369
        %1389 = vmatpush1.msra.mxu0 %v1368
        %1390 = vmatprep.subr.mxu0 %v1386
        %1391 = vmatpush1.msra.mxu0 %v1383
        %1392 = vmatprep.subr.mxu0 0.0
        %1393 = vmatpush1.msra.mxu0 0.0
        %1394 = vmatprep.subr.mxu0 0.0
        %1395 = vmatpush1.msra.mxu0 0.0
        %1396 = vmatprep.subr.mxu0 0.0
        %1397 = vmatpush1.msra.mxu0 0.0
        %1398 = vmatprep.subr.mxu0 0.0
        %1399 = vmatpush1.msra.mxu0 0.0
        %1400 = vmatprep.subr.mxu0 0.0
        %1401 = vmatpush1.msra.mxu0 0.0
        %1402 = vmatprep.subr.mxu0 0.0
        %1403 = vmatpush1.msra.mxu0 0.0
        %1404 = vmatprep.subr.mxu0 0.0
        %1405 = vmatpush1.msra.mxu0 0.0
        %1406 = vmatprep.subr.mxu0 0.0
        %1407 = vmatpush1.msra.mxu0 0.0
        %1408 = vmatprep.subr.mxu0 0.0
        %1409 = vmatpush1.msra.mxu0 0.0
        %1410 = vmatprep.subr.mxu0 0.0
        %1411 = vmatpush1.msra.mxu0 0.0
        %1412 = vmatprep.subr.mxu0 0.0
        %1413 = vmatpush1.msra.mxu0 0.0
        %1414 = vmatprep.subr.mxu0 0.0
        %1415 = vmatpush1.msra.mxu0 0.0
        %1416 = vmatprep.subr.mxu0 0.0
        %1417 = vmatpush1.msra.mxu0 0.0
        %1418 = vmatprep.subr.mxu0 0.0
        %1419 = vmatpush1.msra.mxu0 0.0
        %1420 = vmatprep.subr.mxu0 0.0
        %1421 = vmatpush1.msra.mxu0 0.0
        %1422 = vmatprep.subr.mxu0 0.0
        %1423 = vmatpush1.msra.mxu0 0.0
        %1424 = vmatprep.subr.mxu0 0.0
        %1425 = vmatpush1.msra.mxu0 0.0
        %1426 = vmatprep.subr.mxu0 0.0
        %1427 = vmatpush1.msra.mxu0 0.0
        %1428 = vmatprep.subr.mxu0 0.0
        %1429 = vmatpush1.msra.mxu0 0.0
        %1430 = vmatprep.subr.mxu0 0.0
        %1431 = vmatpush1.msra.mxu0 0.0
        %1432 = vmatprep.subr.mxu0 0.0
        %1433 = vmatpush1.msra.mxu0 0.0
        %1434 = vmatprep.subr.mxu0 0.0
        %1435 = vmatpush1.msra.mxu0 0.0
        %1436 = vmatprep.subr.mxu0 0.0
        %1437 = vmatpush1.msra.mxu0 0.0
        %1438 = vmatprep.subr.mxu0 0.0
        %1439 = vmatpush1.msra.mxu0 0.0
        %1440 = vmatprep.subr.mxu0 0.0
        %1441 = vmatpush1.msra.mxu0 0.0
        %1442 = vmatprep.subr.mxu0 0.0
        %1443 = vmatpush1.msra.mxu0 0.0
        %1444 = vmatprep.subr.mxu0 0.0
        %1445 = vmatpush1.msra.mxu0 0.0
        %1446 = vmatprep.subr.mxu0 0.0
        %1447 = vmatpush1.msra.mxu0 0.0
        %1448 = vmatprep.subr.mxu0 0.0
        %1449 = vmatpush1.msra.mxu0 0.0
        %1450 = vmatprep.subr.mxu0 0.0
        %1451 = vmatpush1.msra.mxu0 0.0
        %1452 = vmatprep.mubr.f32.mxu0 0.0
        %1453 = vmatmul.mubr.f32.gmra.mrb[0].mxu0 %v1376
        %v1454 = vpop.f32.mrb[0].mxu0
        %v1455 = vadd.f32 0.0, %v1454
        %v1456 = vpop.f32.mrb[0].mxu0
        %v1457 = vadd.f32 0.0, %v1456
        %1458 = vmatprep.mubr.f32.mxu0 0.0
        %1459 = vmatmul.mubr.f32.gmra.mrb[0].mxu0 %v1379
        %v1460 = vpop.f32.mrb[0].mxu0
        %v1461 = vadd.f32 0.0, %v1460
        %v1462 = vpop.f32.mrb[0].mxu0
        %v1463 = vadd.f32 0.0, %v1462
        %1464 = vdwg.mxu0
        %v1465 = vld [vmem:[%s5] sm:$0xff]
        %v1466 = vld [vmem:[%s5 + $0x8] sm:$0xff]
        %v1467 = vld [vmem:[%s5 + $0x10] sm:$0xff]
        %v1468 = vld [vmem:[%s5 + $0x18] sm:$0xff]
        %v1469 = vld [vmem:[%s5 + $0x20] sm:$0xff]
        %v1470 = vld [vmem:[%s5 + $0x28] sm:$0xff]
        %v1471 = vld [vmem:[%s5 + $0x30] sm:$0xff]
        %v1472 = vld [vmem:[%s5 + $0x38] sm:$0xff]
        %v1473 = vld [vmem:[%s5 + $0x40] sm:$0xff]
        %v1474 = vld [vmem:[%s5 + $0x48] sm:$0xff]
        %v1475 = vld [vmem:[%s5 + $0x50] sm:$0xff]
        %v1476 = vld [vmem:[%s5 + $0x58] sm:$0xff]
        %v1477 = vld [vmem:[%s5 + $0x60] sm:$0xff]
        %v1478 = vld [vmem:[%s5 + $0x68] sm:$0xff]
        %v1479 = vld [vmem:[%s5 + $0x70] sm:$0xff]
        %v1480 = vld [vmem:[%s5 + $0x78] sm:$0xff]
        %v1481 = vld [vmem:[%s5 + $0x80] sm:$0xff]
        %v1482 = vld [vmem:[%s5 + $0x88] sm:$0xff]
        %v1483 = vld [vmem:[%s5 + $0x90] sm:$0xff]
        %v1484 = vld [vmem:[%s5 + $0x98] sm:$0xff]
        %v1485 = vld [vmem:[%s5 + $0xa0] sm:$0xff]
        %v1486 = vld [vmem:[%s5 + $0xa8] sm:$0xff]
        %v1487 = vld [vmem:[%s5 + $0xb0] sm:$0xff]
        %v1488 = vld [vmem:[%s5 + $0xb8] sm:$0xff]
        %v1489 = vld [vmem:[%s5 + $0xc0] sm:$0xff]
        %v1490 = vld [vmem:[%s5 + $0xc8] sm:$0xff]
        %v1491 = vld [vmem:[%s5 + $0xd0] sm:$0xff]
        %v1492 = vld [vmem:[%s5 + $0xd8] sm:$0xff]
        %v1493 = vld [vmem:[%s5 + $0xe0] sm:$0xff]
        %v1494 = vld [vmem:[%s5 + $0xe8] sm:$0xff]
        %v1495 = vld [vmem:[%s5 + $0xf0] sm:$0xff]
        %v1496 = vld [vmem:[%s5 + $0xf8] sm:$0xff]
        %v1497 = vld [vmem:[%s5 + $0x100] sm:$0xff]
        %v1498 = vld [vmem:[%s5 + $0x108] sm:$0xff]
        %v1499 = vld [vmem:[%s5 + $0x110] sm:$0xff]
        %v1500 = vld [vmem:[%s5 + $0x118] sm:$0xff]
        %v1501 = vld [vmem:[%s5 + $0x120] sm:$0xff]
        %v1502 = vld [vmem:[%s5 + $0x128] sm:$0xff]
        %v1503 = vld [vmem:[%s5 + $0x130] sm:$0xff]
        %v1504 = vld [vmem:[%s5 + $0x138] sm:$0xff]
        %v1505 = vld [vmem:[%s5 + $0x140] sm:$0xff]
        %v1506 = vld [vmem:[%s5 + $0x148] sm:$0xff]
        %v1507 = vld [vmem:[%s5 + $0x150] sm:$0xff]
        %v1508 = vld [vmem:[%s5 + $0x158] sm:$0xff]
        %v1509 = vld [vmem:[%s5 + $0x160] sm:$0xff]
        %v1510 = vld [vmem:[%s5 + $0x168] sm:$0xff]
        %v1511 = vld [vmem:[%s5 + $0x170] sm:$0xff]
        %v1512 = vld [vmem:[%s5 + $0x178] sm:$0xff]
        %v1513 = vld [vmem:[%s5 + $0x180] sm:$0xff]
        %v1514 = vld [vmem:[%s5 + $0x188] sm:$0xff]
        %v1515 = vld [vmem:[%s5 + $0x190] sm:$0xff]
        %v1516 = vld [vmem:[%s5 + $0x198] sm:$0xff]
        %v1517 = vld [vmem:[%s5 + $0x1a0] sm:$0xff]
        %v1518 = vld [vmem:[%s5 + $0x1a8] sm:$0xff]
        %v1519 = vld [vmem:[%s5 + $0x1b0] sm:$0xff]
        %v1520 = vld [vmem:[%s5 + $0x1b8] sm:$0xff]
        %s1521 = scalar_lea.vmem %s5, 1344
        %v1522 = vld [vmem:[%s1521] sm:$0xff]
        %v1523 = vld [vmem:[%s1521 + $0x8] sm:$0xff]
        %v1524 = vld [vmem:[%s1521 + $0x10] sm:$0xff]
        %v1525 = vld [vmem:[%s1521 + $0x18] sm:$0xff]
        %v1526 = vld [vmem:[%s1521 + $0x20] sm:$0xff]
        %v1527 = vld [vmem:[%s1521 + $0x28] sm:$0xff]
        %v1528 = vld [vmem:[%s1521 + $0x30] sm:$0xff]
        %v1529 = vld [vmem:[%s1521 + $0x38] sm:$0xff]
        %v1530 = vld [vmem:[%s1521 + $0x40] sm:$0xff]
        %v1531 = vld [vmem:[%s1521 + $0x48] sm:$0xff]
        %v1532 = vld [vmem:[%s1521 + $0x50] sm:$0xff]
        %v1533 = vld [vmem:[%s1521 + $0x58] sm:$0xff]
        %v1534 = vld [vmem:[%s1521 + $0x60] sm:$0xff]
        %v1535 = vld [vmem:[%s1521 + $0x68] sm:$0xff]
        %v1536 = vld [vmem:[%s1521 + $0x70] sm:$0xff]
        %v1537 = vld [vmem:[%s1521 + $0x78] sm:$0xff]
        %v1538 = vld [vmem:[%s1521 + $0x80] sm:$0xff]
        %v1539 = vld [vmem:[%s1521 + $0x88] sm:$0xff]
        %v1540 = vld [vmem:[%s1521 + $0x90] sm:$0xff]
        %v1541 = vld [vmem:[%s1521 + $0x98] sm:$0xff]
        %v1542 = vld [vmem:[%s1521 + $0xa0] sm:$0xff]
        %v1543 = vld [vmem:[%s1521 + $0xa8] sm:$0xff]
        %v1544 = vld [vmem:[%s1521 + $0xb0] sm:$0xff]
        %v1545 = vld [vmem:[%s1521 + $0xb8] sm:$0xff]
        %v1546 = vld [vmem:[%s1521 + $0xc0] sm:$0xff]
        %v1547 = vld [vmem:[%s1521 + $0xc8] sm:$0xff]
        %v1548 = vld [vmem:[%s1521 + $0xd0] sm:$0xff]
        %v1549 = vld [vmem:[%s1521 + $0xd8] sm:$0xff]
        %v1550 = vld [vmem:[%s1521 + $0xe0] sm:$0xff]
        %v1551 = vld [vmem:[%s1521 + $0xe8] sm:$0xff]
        %v1552 = vld [vmem:[%s1521 + $0xf0] sm:$0xff]
        %v1553 = vld [vmem:[%s1521 + $0xf8] sm:$0xff]
        %v1554 = vld [vmem:[%s1521 + $0x100] sm:$0xff]
        %v1555 = vld [vmem:[%s1521 + $0x108] sm:$0xff]
        %v1556 = vld [vmem:[%s1521 + $0x110] sm:$0xff]
        %v1557 = vld [vmem:[%s1521 + $0x118] sm:$0xff]
        %v1558 = vld [vmem:[%s1521 + $0x120] sm:$0xff]
        %v1559 = vld [vmem:[%s1521 + $0x128] sm:$0xff]
        %v1560 = vld [vmem:[%s1521 + $0x130] sm:$0xff]
        %v1561 = vld [vmem:[%s1521 + $0x138] sm:$0xff]
        %v1562 = vld [vmem:[%s1521 + $0x140] sm:$0xff]
        %v1563 = vld [vmem:[%s1521 + $0x148] sm:$0xff]
        %v1564 = vld [vmem:[%s1521 + $0x150] sm:$0xff]
        %v1565 = vld [vmem:[%s1521 + $0x158] sm:$0xff]
        %v1566 = vld [vmem:[%s1521 + $0x160] sm:$0xff]
        %v1567 = vld [vmem:[%s1521 + $0x168] sm:$0xff]
        %v1568 = vld [vmem:[%s1521 + $0x170] sm:$0xff]
        %v1569 = vld [vmem:[%s1521 + $0x178] sm:$0xff]
        %v1570 = vld [vmem:[%s1521 + $0x180] sm:$0xff]
        %v1571 = vld [vmem:[%s1521 + $0x188] sm:$0xff]
        %v1572 = vld [vmem:[%s1521 + $0x190] sm:$0xff]
        %v1573 = vld [vmem:[%s1521 + $0x198] sm:$0xff]
        %v1574 = vld [vmem:[%s1521 + $0x1a0] sm:$0xff]
        %v1575 = vld [vmem:[%s1521 + $0x1a8] sm:$0xff]
        %v1576 = vld [vmem:[%s1521 + $0x1b0] sm:$0xff]
        %v1577 = vld [vmem:[%s1521 + $0x1b8] sm:$0xff]
        %s1578 = scalar_lea.vmem %s4, 16
        %v1579 = vld [vmem:[%s1578] sm:$0xff]
        %v1580 = vld [vmem:[%s1578 + $0x8] sm:$0x3f]
        %v1582 = vsel %vm1374, %v1579, 0
        %v1585 = vsel %vm1374, %v1580, 0
        %1587 = vmatprep.subr.mxu0 %v1369
        %1588 = vmatpush1.msra.mxu0 %v1368
        %1589 = vmatprep.subr.mxu0 %v1386
        %1590 = vmatpush1.msra.mxu0 %v1383
        %1591 = vmatprep.subr.mxu0 0.0
        %1592 = vmatpush1.msra.mxu0 0.0
        %1593 = vmatprep.subr.mxu0 0.0
        %1594 = vmatpush1.msra.mxu0 0.0
        %1595 = vmatprep.subr.mxu0 0.0
        %1596 = vmatpush1.msra.mxu0 0.0
        %1597 = vmatprep.subr.mxu0 0.0
        %1598 = vmatpush1.msra.mxu0 0.0
        %1599 = vmatprep.subr.mxu0 0.0
        %1600 = vmatpush1.msra.mxu0 0.0
        %1601 = vmatprep.subr.mxu0 0.0
        %1602 = vmatpush1.msra.mxu0 0.0
        %1603 = vmatprep.subr.mxu0 0.0
        %1604 = vmatpush1.msra.mxu0 0.0
        %1605 = vmatprep.subr.mxu0 0.0
        %1606 = vmatpush1.msra.mxu0 0.0
        %1607 = vmatprep.subr.mxu0 0.0
        %1608 = vmatpush1.msra.mxu0 0.0
        %1609 = vmatprep.subr.mxu0 0.0
        %1610 = vmatpush1.msra.mxu0 0.0
        %1611 = vmatprep.subr.mxu0 0.0
        %1612 = vmatpush1.msra.mxu0 0.0
        %1613 = vmatprep.subr.mxu0 0.0
        %1614 = vmatpush1.msra.mxu0 0.0
        %1615 = vmatprep.subr.mxu0 0.0
        %1616 = vmatpush1.msra.mxu0 0.0
        %1617 = vmatprep.subr.mxu0 0.0
        %1618 = vmatpush1.msra.mxu0 0.0
        %1619 = vmatprep.subr.mxu0 0.0
        %1620 = vmatpush1.msra.mxu0 0.0
        %1621 = vmatprep.subr.mxu0 0.0
        %1622 = vmatpush1.msra.mxu0 0.0
        %1623 = vmatprep.subr.mxu0 0.0
        %1624 = vmatpush1.msra.mxu0 0.0
        %1625 = vmatprep.subr.mxu0 0.0
        %1626 = vmatpush1.msra.mxu0 0.0
        %1627 = vmatprep.subr.mxu0 0.0
        %1628 = vmatpush1.msra.mxu0 0.0
        %1629 = vmatprep.subr.mxu0 0.0
        %1630 = vmatpush1.msra.mxu0 0.0
        %1631 = vmatprep.subr.mxu0 0.0
        %1632 = vmatpush1.msra.mxu0 0.0
        %1633 = vmatprep.subr.mxu0 0.0
        %1634 = vmatpush1.msra.mxu0 0.0
        %1635 = vmatprep.subr.mxu0 0.0
        %1636 = vmatpush1.msra.mxu0 0.0
        %1637 = vmatprep.subr.mxu0 0.0
        %1638 = vmatpush1.msra.mxu0 0.0
        %1639 = vmatprep.subr.mxu0 0.0
        %1640 = vmatpush1.msra.mxu0 0.0
        %1641 = vmatprep.subr.mxu0 0.0
        %1642 = vmatpush1.msra.mxu0 0.0
        %1643 = vmatprep.subr.mxu0 0.0
        %1644 = vmatpush1.msra.mxu0 0.0
        %1645 = vmatprep.subr.mxu0 0.0
        %1646 = vmatpush1.msra.mxu0 0.0
        %1647 = vmatprep.subr.mxu0 0.0
        %1648 = vmatpush1.msra.mxu0 0.0
        %1649 = vmatprep.subr.mxu0 0.0
        %1650 = vmatpush1.msra.mxu0 0.0
        %1651 = vmatprep.mubr.f32.mxu0 0.0
        %1652 = vmatmul.mubr.f32.gmra.mrb[0].mxu0 %v1582
        %v1653 = vpop.f32.mrb[0].mxu0
        %v1654 = vadd.f32 0.0, %v1653
        %v1655 = vpop.f32.mrb[0].mxu0
        %v1656 = vadd.f32 0.0, %v1655
        %1657 = vmatprep.mubr.f32.mxu0 0.0
        %1658 = vmatmul.mubr.f32.gmra.mrb[0].mxu0 %v1585
        %v1659 = vpop.f32.mrb[0].mxu0
        %v1660 = vadd.f32 0.0, %v1659
        %v1661 = vpop.f32.mrb[0].mxu0
        %v1662 = vadd.f32 0.0, %v1661
        %1663 = vdwg.mxu0
        %s1664 = scalar_lea.vmem %s5, 448
        %v1665 = vld [vmem:[%s1664] sm:$0xff]
        %v1666 = vld [vmem:[%s1664 + $0x8] sm:$0xff]
        %v1667 = vld [vmem:[%s1664 + $0x10] sm:$0xff]
        %v1668 = vld [vmem:[%s1664 + $0x18] sm:$0xff]
        %v1669 = vld [vmem:[%s1664 + $0x20] sm:$0xff]
        %v1670 = vld [vmem:[%s1664 + $0x28] sm:$0xff]
        %v1671 = vld [vmem:[%s1664 + $0x30] sm:$0xff]
        %v1672 = vld [vmem:[%s1664 + $0x38] sm:$0xff]
        %v1673 = vld [vmem:[%s1664 + $0x40] sm:$0xff]
        %v1674 = vld [vmem:[%s1664 + $0x48] sm:$0xff]
        %v1675 = vld [vmem:[%s1664 + $0x50] sm:$0xff]
        %v1676 = vld [vmem:[%s1664 + $0x58] sm:$0xff]
        %v1677 = vld [vmem:[%s1664 + $0x60] sm:$0xff]
        %v1678 = vld [vmem:[%s1664 + $0x68] sm:$0xff]
        %v1679 = vld [vmem:[%s1664 + $0x70] sm:$0xff]
        %v1680 = vld [vmem:[%s1664 + $0x78] sm:$0xff]
        %v1681 = vld [vmem:[%s1664 + $0x80] sm:$0xff]
        %v1682 = vld [vmem:[%s1664 + $0x88] sm:$0xff]
        %v1683 = vld [vmem:[%s1664 + $0x90] sm:$0xff]
        %v1684 = vld [vmem:[%s1664 + $0x98] sm:$0xff]
        %v1685 = vld [vmem:[%s1664 + $0xa0] sm:$0xff]
        %v1686 = vld [vmem:[%s1664 + $0xa8] sm:$0xff]
        %v1687 = vld [vmem:[%s1664 + $0xb0] sm:$0xff]
        %v1688 = vld [vmem:[%s1664 + $0xb8] sm:$0xff]
        %v1689 = vld [vmem:[%s1664 + $0xc0] sm:$0xff]
        %v1690 = vld [vmem:[%s1664 + $0xc8] sm:$0xff]
        %v1691 = vld [vmem:[%s1664 + $0xd0] sm:$0xff]
        %v1692 = vld [vmem:[%s1664 + $0xd8] sm:$0xff]
        %v1693 = vld [vmem:[%s1664 + $0xe0] sm:$0xff]
        %v1694 = vld [vmem:[%s1664 + $0xe8] sm:$0xff]
        %v1695 = vld [vmem:[%s1664 + $0xf0] sm:$0xff]
        %v1696 = vld [vmem:[%s1664 + $0xf8] sm:$0xff]
        %v1697 = vld [vmem:[%s1664 + $0x100] sm:$0xff]
        %v1698 = vld [vmem:[%s1664 + $0x108] sm:$0xff]
        %v1699 = vld [vmem:[%s1664 + $0x110] sm:$0xff]
        %v1700 = vld [vmem:[%s1664 + $0x118] sm:$0xff]
        %v1701 = vld [vmem:[%s1664 + $0x120] sm:$0xff]
        %v1702 = vld [vmem:[%s1664 + $0x128] sm:$0xff]
        %v1703 = vld [vmem:[%s1664 + $0x130] sm:$0xff]
        %v1704 = vld [vmem:[%s1664 + $0x138] sm:$0xff]
        %v1705 = vld [vmem:[%s1664 + $0x140] sm:$0xff]
        %v1706 = vld [vmem:[%s1664 + $0x148] sm:$0xff]
        %v1707 = vld [vmem:[%s1664 + $0x150] sm:$0xff]
        %v1708 = vld [vmem:[%s1664 + $0x158] sm:$0xff]
        %v1709 = vld [vmem:[%s1664 + $0x160] sm:$0xff]
        %v1710 = vld [vmem:[%s1664 + $0x168] sm:$0xff]
        %v1711 = vld [vmem:[%s1664 + $0x170] sm:$0xff]
        %v1712 = vld [vmem:[%s1664 + $0x178] sm:$0xff]
        %v1713 = vld [vmem:[%s1664 + $0x180] sm:$0xff]
        %v1714 = vld [vmem:[%s1664 + $0x188] sm:$0xff]
        %v1715 = vld [vmem:[%s1664 + $0x190] sm:$0xff]
        %v1716 = vld [vmem:[%s1664 + $0x198] sm:$0xff]
        %v1717 = vld [vmem:[%s1664 + $0x1a0] sm:$0xff]
        %v1718 = vld [vmem:[%s1664 + $0x1a8] sm:$0xff]
        %v1719 = vld [vmem:[%s1664 + $0x1b0] sm:$0xff]
        %v1720 = vld [vmem:[%s1664 + $0x1b8] sm:$0xff]
        %vm1721 = vcmask 785408
        %v1723 = vsel %vm1721, %v1656, 0
        %v1726 = vsel %vm1721, %v1662, 0
        %1728 = vmatprep.subr.mxu0 %v1666
        %1729 = vmatpush1.msra.mxu0 %v1665
        %1730 = vmatprep.subr.mxu0 %v1668
        %1731 = vmatpush1.msra.mxu0 %v1667
        %1732 = vmatprep.subr.mxu0 %v1670
        %1733 = vmatpush1.msra.mxu0 %v1669
        %1734 = vmatprep.subr.mxu0 %v1672
        %1735 = vmatpush1.msra.mxu0 %v1671
        %1736 = vmatprep.subr.mxu0 %v1674
        %1737 = vmatpush1.msra.mxu0 %v1673
        %1738 = vmatprep.subr.mxu0 %v1676
        %1739 = vmatpush1.msra.mxu0 %v1675
        %1740 = vmatprep.subr.mxu0 %v1678
        %1741 = vmatpush1.msra.mxu0 %v1677
        %1742 = vmatprep.subr.mxu0 %v1680
        %1743 = vmatpush1.msra.mxu0 %v1679
        %1744 = vmatprep.subr.mxu0 %v1682
        %1745 = vmatpush1.msra.mxu0 %v1681
        %1746 = vmatprep.subr.mxu0 %v1684
        %1747 = vmatpush1.msra.mxu0 %v1683
        %1748 = vmatprep.subr.mxu0 %v1686
        %1749 = vmatpush1.msra.mxu0 %v1685
        %1750 = vmatprep.subr.mxu0 %v1688
        %1751 = vmatpush1.msra.mxu0 %v1687
        %1752 = vmatprep.subr.mxu0 %v1690
        %1753 = vmatpush1.msra.mxu0 %v1689
        %1754 = vmatprep.subr.mxu0 %v1692
        %1755 = vmatpush1.msra.mxu0 %v1691
        %1756 = vmatprep.subr.mxu0 %v1694
        %1757 = vmatpush1.msra.mxu0 %v1693
        %1758 = vmatprep.subr.mxu0 %v1696
        %1759 = vmatpush1.msra.mxu0 %v1695
        %1760 = vmatprep.subr.mxu0 %v1698
        %1761 = vmatpush1.msra.mxu0 %v1697
        %1762 = vmatprep.subr.mxu0 %v1700
        %1763 = vmatpush1.msra.mxu0 %v1699
        %1764 = vmatprep.subr.mxu0 %v1702
        %1765 = vmatpush1.msra.mxu0 %v1701
        %1766 = vmatprep.subr.mxu0 %v1704
        %1767 = vmatpush1.msra.mxu0 %v1703
        %1768 = vmatprep.subr.mxu0 %v1706
        %1769 = vmatpush1.msra.mxu0 %v1705
        %1770 = vmatprep.subr.mxu0 %v1708
        %1771 = vmatpush1.msra.mxu0 %v1707
        %1772 = vmatprep.subr.mxu0 %v1710
        %1773 = vmatpush1.msra.mxu0 %v1709
        %1774 = vmatprep.subr.mxu0 %v1712
        %1775 = vmatpush1.msra.mxu0 %v1711
        %1776 = vmatprep.subr.mxu0 %v1714
        %1777 = vmatpush1.msra.mxu0 %v1713
        %1778 = vmatprep.subr.mxu0 %v1716
        %1779 = vmatpush1.msra.mxu0 %v1715
        %1780 = vmatprep.subr.mxu0 %v1718
        %1781 = vmatpush1.msra.mxu0 %v1717
        %1782 = vmatprep.subr.mxu0 %v1720
        %1783 = vmatpush1.msra.mxu0 %v1719
        %1784 = vmatprep.subr.mxu0 0.0
        %1785 = vmatpush1.msra.mxu0 0.0
        %1786 = vmatprep.subr.mxu0 0.0
        %1787 = vmatpush1.msra.mxu0 0.0
        %1788 = vmatprep.subr.mxu0 0.0
        %1789 = vmatpush1.msra.mxu0 0.0
        %1790 = vmatprep.subr.mxu0 0.0
        %1791 = vmatpush1.msra.mxu0 0.0
        %1792 = vmatprep.mubr.f32.mxu0 %v1723
        %1793 = vmatmul.mubr.f32.gmra.mrb[0].mxu0 %v1654
        %v1794 = vpop.f32.mrb[0].mxu0
        %v1795 = vadd.f32 0.0, %v1794
        %v1796 = vpop.f32.mrb[0].mxu0
        %v1797 = vadd.f32 0.0, %v1796
        %1798 = vmatprep.mubr.f32.mxu0 %v1726
        %1799 = vmatmul.mubr.f32.gmra.mrb[0].mxu0 %v1660
        %v1800 = vpop.f32.mrb[0].mxu0
        %v1801 = vadd.f32 0.0, %v1800
        %v1802 = vpop.f32.mrb[0].mxu0
        %v1803 = vadd.f32 0.0, %v1802
        %1804 = vdwg.mxu0
        %s1805 = scalar_lea.vmem %s5, 1792
        %v1806 = vld [vmem:[%s1805] sm:$0xff]
        %v1807 = vld [vmem:[%s1805 + $0x8] sm:$0xff]
        %v1808 = vld [vmem:[%s1805 + $0x10] sm:$0xff]
        %v1809 = vld [vmem:[%s1805 + $0x18] sm:$0xff]
        %v1810 = vld [vmem:[%s1805 + $0x20] sm:$0xff]
        %v1811 = vld [vmem:[%s1805 + $0x28] sm:$0xff]
        %v1812 = vld [vmem:[%s1805 + $0x30] sm:$0xff]
        %v1813 = vld [vmem:[%s1805 + $0x38] sm:$0xff]
        %v1814 = vld [vmem:[%s1805 + $0x40] sm:$0xff]
        %v1815 = vld [vmem:[%s1805 + $0x48] sm:$0xff]
        %v1816 = vld [vmem:[%s1805 + $0x50] sm:$0xff]
        %v1817 = vld [vmem:[%s1805 + $0x58] sm:$0xff]
        %v1818 = vld [vmem:[%s1805 + $0x60] sm:$0xff]
        %v1819 = vld [vmem:[%s1805 + $0x68] sm:$0xff]
        %v1820 = vld [vmem:[%s1805 + $0x70] sm:$0xff]
        %v1821 = vld [vmem:[%s1805 + $0x78] sm:$0xff]
        %v1822 = vld [vmem:[%s1805 + $0x80] sm:$0xff]
        %v1823 = vld [vmem:[%s1805 + $0x88] sm:$0xff]
        %v1824 = vld [vmem:[%s1805 + $0x90] sm:$0xff]
        %v1825 = vld [vmem:[%s1805 + $0x98] sm:$0xff]
        %v1826 = vld [vmem:[%s1805 + $0xa0] sm:$0xff]
        %v1827 = vld [vmem:[%s1805 + $0xa8] sm:$0xff]
        %v1828 = vld [vmem:[%s1805 + $0xb0] sm:$0xff]
        %v1829 = vld [vmem:[%s1805 + $0xb8] sm:$0xff]
        %v1830 = vld [vmem:[%s1805 + $0xc0] sm:$0xff]
        %v1831 = vld [vmem:[%s1805 + $0xc8] sm:$0xff]
        %v1832 = vld [vmem:[%s1805 + $0xd0] sm:$0xff]
        %v1833 = vld [vmem:[%s1805 + $0xd8] sm:$0xff]
        %v1834 = vld [vmem:[%s1805 + $0xe0] sm:$0xff]
        %v1835 = vld [vmem:[%s1805 + $0xe8] sm:$0xff]
        %v1836 = vld [vmem:[%s1805 + $0xf0] sm:$0xff]
        %v1837 = vld [vmem:[%s1805 + $0xf8] sm:$0xff]
        %v1838 = vld [vmem:[%s1805 + $0x100] sm:$0xff]
        %v1839 = vld [vmem:[%s1805 + $0x108] sm:$0xff]
        %v1840 = vld [vmem:[%s1805 + $0x110] sm:$0xff]
        %v1841 = vld [vmem:[%s1805 + $0x118] sm:$0xff]
        %v1842 = vld [vmem:[%s1805 + $0x120] sm:$0xff]
        %v1843 = vld [vmem:[%s1805 + $0x128] sm:$0xff]
        %v1844 = vld [vmem:[%s1805 + $0x130] sm:$0xff]
        %v1845 = vld [vmem:[%s1805 + $0x138] sm:$0xff]
        %v1846 = vld [vmem:[%s1805 + $0x140] sm:$0xff]
        %v1847 = vld [vmem:[%s1805 + $0x148] sm:$0xff]
        %v1848 = vld [vmem:[%s1805 + $0x150] sm:$0xff]
        %v1849 = vld [vmem:[%s1805 + $0x158] sm:$0xff]
        %v1850 = vld [vmem:[%s1805 + $0x160] sm:$0xff]
        %v1851 = vld [vmem:[%s1805 + $0x168] sm:$0xff]
        %v1852 = vld [vmem:[%s1805 + $0x170] sm:$0xff]
        %v1853 = vld [vmem:[%s1805 + $0x178] sm:$0xff]
        %v1854 = vld [vmem:[%s1805 + $0x180] sm:$0xff]
        %v1855 = vld [vmem:[%s1805 + $0x188] sm:$0xff]
        %v1856 = vld [vmem:[%s1805 + $0x190] sm:$0xff]
        %v1857 = vld [vmem:[%s1805 + $0x198] sm:$0xff]
        %v1858 = vld [vmem:[%s1805 + $0x1a0] sm:$0xff]
        %v1859 = vld [vmem:[%s1805 + $0x1a8] sm:$0xff]
        %v1860 = vld [vmem:[%s1805 + $0x1b0] sm:$0xff]
        %v1861 = vld [vmem:[%s1805 + $0x1b8] sm:$0xff]
        %1862 = vmatprep.subr.mxu0 %v1807
        %1863 = vmatpush1.msra.mxu0 %v1806
        %1864 = vmatprep.subr.mxu0 %v1809
        %1865 = vmatpush1.msra.mxu0 %v1808
        %1866 = vmatprep.subr.mxu0 %v1811
        %1867 = vmatpush1.msra.mxu0 %v1810
        %1868 = vmatprep.subr.mxu0 %v1813
        %1869 = vmatpush1.msra.mxu0 %v1812
        %1870 = vmatprep.subr.mxu0 %v1815
        %1871 = vmatpush1.msra.mxu0 %v1814
        %1872 = vmatprep.subr.mxu0 %v1817
        %1873 = vmatpush1.msra.mxu0 %v1816
        %1874 = vmatprep.subr.mxu0 %v1819
        %1875 = vmatpush1.msra.mxu0 %v1818
        %1876 = vmatprep.subr.mxu0 %v1821
        %1877 = vmatpush1.msra.mxu0 %v1820
        %1878 = vmatprep.subr.mxu0 %v1823
        %1879 = vmatpush1.msra.mxu0 %v1822
        %1880 = vmatprep.subr.mxu0 %v1825
        %1881 = vmatpush1.msra.mxu0 %v1824
        %1882 = vmatprep.subr.mxu0 %v1827
        %1883 = vmatpush1.msra.mxu0 %v1826
        %1884 = vmatprep.subr.mxu0 %v1829
        %1885 = vmatpush1.msra.mxu0 %v1828
        %1886 = vmatprep.subr.mxu0 %v1831
        %1887 = vmatpush1.msra.mxu0 %v1830
        %1888 = vmatprep.subr.mxu0 %v1833
        %1889 = vmatpush1.msra.mxu0 %v1832
        %1890 = vmatprep.subr.mxu0 %v1835
        %1891 = vmatpush1.msra.mxu0 %v1834
        %1892 = vmatprep.subr.mxu0 %v1837
        %1893 = vmatpush1.msra.mxu0 %v1836
        %1894 = vmatprep.subr.mxu0 %v1839
        %1895 = vmatpush1.msra.mxu0 %v1838
        %1896 = vmatprep.subr.mxu0 %v1841
        %1897 = vmatpush1.msra.mxu0 %v1840
        %1898 = vmatprep.subr.mxu0 %v1843
        %1899 = vmatpush1.msra.mxu0 %v1842
        %1900 = vmatprep.subr.mxu0 %v1845
        %1901 = vmatpush1.msra.mxu0 %v1844
        %1902 = vmatprep.subr.mxu0 %v1847
        %1903 = vmatpush1.msra.mxu0 %v1846
        %1904 = vmatprep.subr.mxu0 %v1849
        %1905 = vmatpush1.msra.mxu0 %v1848
        %1906 = vmatprep.subr.mxu0 %v1851
        %1907 = vmatpush1.msra.mxu0 %v1850
        %1908 = vmatprep.subr.mxu0 %v1853
        %1909 = vmatpush1.msra.mxu0 %v1852
        %1910 = vmatprep.subr.mxu0 %v1855
        %1911 = vmatpush1.msra.mxu0 %v1854
        %1912 = vmatprep.subr.mxu0 %v1857
        %1913 = vmatpush1.msra.mxu0 %v1856
        %1914 = vmatprep.subr.mxu0 %v1859
        %1915 = vmatpush1.msra.mxu0 %v1858
        %1916 = vmatprep.subr.mxu0 %v1861
        %1917 = vmatpush1.msra.mxu0 %v1860
        %1918 = vmatprep.subr.mxu0 0.0
        %1919 = vmatpush1.msra.mxu0 0.0
        %1920 = vmatprep.subr.mxu0 0.0
        %1921 = vmatpush1.msra.mxu0 0.0
        %1922 = vmatprep.subr.mxu0 0.0
        %1923 = vmatpush1.msra.mxu0 0.0
        %1924 = vmatprep.subr.mxu0 0.0
        %1925 = vmatpush1.msra.mxu0 0.0
        %1926 = vmatprep.mubr.f32.mxu0 %v1723
        %1927 = vmatmul.mubr.f32.gmra.mrb[0].mxu0 %v1654
        %v1928 = vpop.f32.mrb[0].mxu0
        %v1929 = vadd.f32 0.0, %v1928
        %v1930 = vpop.f32.mrb[0].mxu0
        %v1931 = vadd.f32 0.0, %v1930
        %1932 = vmatprep.mubr.f32.mxu0 %v1726
        %1933 = vmatmul.mubr.f32.gmra.mrb[0].mxu0 %v1660
        %v1934 = vpop.f32.mrb[0].mxu0
        %v1935 = vadd.f32 0.0, %v1934
        %v1936 = vpop.f32.mrb[0].mxu0
        %v1937 = vadd.f32 0.0, %v1936
        %1938 = vdwg.mxu0
        %v1940 = vsel %vm1721, %v1457, 0
        %v1943 = vsel %vm1721, %v1463, 0
        %1945 = vmatprep.subr.mxu0 %v1466
        %1946 = vmatpush1.msra.mxu0 %v1465
        %1947 = vmatprep.subr.mxu0 %v1468
        %1948 = vmatpush1.msra.mxu0 %v1467
        %1949 = vmatprep.subr.mxu0 %v1470
        %1950 = vmatpush1.msra.mxu0 %v1469
        %1951 = vmatprep.subr.mxu0 %v1472
        %1952 = vmatpush1.msra.mxu0 %v1471
        %1953 = vmatprep.subr.mxu0 %v1474
        %1954 = vmatpush1.msra.mxu0 %v1473
        %1955 = vmatprep.subr.mxu0 %v1476
        %1956 = vmatpush1.msra.mxu0 %v1475
        %1957 = vmatprep.subr.mxu0 %v1478
        %1958 = vmatpush1.msra.mxu0 %v1477
        %1959 = vmatprep.subr.mxu0 %v1480
        %1960 = vmatpush1.msra.mxu0 %v1479
        %1961 = vmatprep.subr.mxu0 %v1482
        %1962 = vmatpush1.msra.mxu0 %v1481
        %1963 = vmatprep.subr.mxu0 %v1484
        %1964 = vmatpush1.msra.mxu0 %v1483
        %1965 = vmatprep.subr.mxu0 %v1486
        %1966 = vmatpush1.msra.mxu0 %v1485
        %1967 = vmatprep.subr.mxu0 %v1488
        %1968 = vmatpush1.msra.mxu0 %v1487
        %1969 = vmatprep.subr.mxu0 %v1490
        %1970 = vmatpush1.msra.mxu0 %v1489
        %1971 = vmatprep.subr.mxu0 %v1492
        %1972 = vmatpush1.msra.mxu0 %v1491
        %1973 = vmatprep.subr.mxu0 %v1494
        %1974 = vmatpush1.msra.mxu0 %v1493
        %1975 = vmatprep.subr.mxu0 %v1496
        %1976 = vmatpush1.msra.mxu0 %v1495
        %1977 = vmatprep.subr.mxu0 %v1498
        %1978 = vmatpush1.msra.mxu0 %v1497
        %1979 = vmatprep.subr.mxu0 %v1500
        %1980 = vmatpush1.msra.mxu0 %v1499
        %1981 = vmatprep.subr.mxu0 %v1502
        %1982 = vmatpush1.msra.mxu0 %v1501
        %1983 = vmatprep.subr.mxu0 %v1504
        %1984 = vmatpush1.msra.mxu0 %v1503
        %1985 = vmatprep.subr.mxu0 %v1506
        %1986 = vmatpush1.msra.mxu0 %v1505
        %1987 = vmatprep.subr.mxu0 %v1508
        %1988 = vmatpush1.msra.mxu0 %v1507
        %1989 = vmatprep.subr.mxu0 %v1510
        %1990 = vmatpush1.msra.mxu0 %v1509
        %1991 = vmatprep.subr.mxu0 %v1512
        %1992 = vmatpush1.msra.mxu0 %v1511
        %1993 = vmatprep.subr.mxu0 %v1514
        %1994 = vmatpush1.msra.mxu0 %v1513
        %1995 = vmatprep.subr.mxu0 %v1516
        %1996 = vmatpush1.msra.mxu0 %v1515
        %1997 = vmatprep.subr.mxu0 %v1518
        %1998 = vmatpush1.msra.mxu0 %v1517
        %1999 = vmatprep.subr.mxu0 %v1520
        %2000 = vmatpush1.msra.mxu0 %v1519
        %2001 = vmatprep.subr.mxu0 0.0
        %2002 = vmatpush1.msra.mxu0 0.0
        %2003 = vmatprep.subr.mxu0 0.0
        %2004 = vmatpush1.msra.mxu0 0.0
        %2005 = vmatprep.subr.mxu0 0.0
        %2006 = vmatpush1.msra.mxu0 0.0
        %2007 = vmatprep.subr.mxu0 0.0
        %2008 = vmatpush1.msra.mxu0 0.0
        %2009 = vmatprep.mubr.f32.mxu0 %v1940
        %2010 = vmatmul.mubr.f32.gmra.mrb[0].mxu0 %v1455
        %v2011 = vpop.f32.mrb[0].mxu0
        %v2012 = vadd.f32 %v1795, %v2011
        %v2013 = vpop.f32.mrb[0].mxu0
        %v2014 = vadd.f32 %v1797, %v2013
        %2015 = vmatprep.mubr.f32.mxu0 %v1943
        %2016 = vmatmul.mubr.f32.gmra.mrb[0].mxu0 %v1461
        %v2017 = vpop.f32.mrb[0].mxu0
        %v2018 = vadd.f32 %v1801, %v2017
        %v2019 = vpop.f32.mrb[0].mxu0
        %v2020 = vadd.f32 %v1803, %v2019
        %2021 = vdwg.mxu0
        %2022 = vmatprep.subr.mxu0 %v1523
        %2023 = vmatpush1.msra.mxu0 %v1522
        %2024 = vmatprep.subr.mxu0 %v1525
        %2025 = vmatpush1.msra.mxu0 %v1524
        %2026 = vmatprep.subr.mxu0 %v1527
        %2027 = vmatpush1.msra.mxu0 %v1526
        %2028 = vmatprep.subr.mxu0 %v1529
        %2029 = vmatpush1.msra.mxu0 %v1528
        %2030 = vmatprep.subr.mxu0 %v1531
        %2031 = vmatpush1.msra.mxu0 %v1530
        %2032 = vmatprep.subr.mxu0 %v1533
        %2033 = vmatpush1.msra.mxu0 %v1532
        %2034 = vmatprep.subr.mxu0 %v1535
        %2035 = vmatpush1.msra.mxu0 %v1534
        %2036 = vmatprep.subr.mxu0 %v1537
        %2037 = vmatpush1.msra.mxu0 %v1536
        %2038 = vmatprep.subr.mxu0 %v1539
        %2039 = vmatpush1.msra.mxu0 %v1538
        %2040 = vmatprep.subr.mxu0 %v1541
        %2041 = vmatpush1.msra.mxu0 %v1540
        %2042 = vmatprep.subr.mxu0 %v1543
        %2043 = vmatpush1.msra.mxu0 %v1542
        %2044 = vmatprep.subr.mxu0 %v1545
        %2045 = vmatpush1.msra.mxu0 %v1544
        %2046 = vmatprep.subr.mxu0 %v1547
        %2047 = vmatpush1.msra.mxu0 %v1546
        %2048 = vmatprep.subr.mxu0 %v1549
        %2049 = vmatpush1.msra.mxu0 %v1548
        %2050 = vmatprep.subr.mxu0 %v1551
        %2051 = vmatpush1.msra.mxu0 %v1550
        %2052 = vmatprep.subr.mxu0 %v1553
        %2053 = vmatpush1.msra.mxu0 %v1552
        %2054 = vmatprep.subr.mxu0 %v1555
        %2055 = vmatpush1.msra.mxu0 %v1554
        %2056 = vmatprep.subr.mxu0 %v1557
        %2057 = vmatpush1.msra.mxu0 %v1556
        %2058 = vmatprep.subr.mxu0 %v1559
        %2059 = vmatpush1.msra.mxu0 %v1558
        %2060 = vmatprep.subr.mxu0 %v1561
        %2061 = vmatpush1.msra.mxu0 %v1560
        %2062 = vmatprep.subr.mxu0 %v1563
        %2063 = vmatpush1.msra.mxu0 %v1562
        %2064 = vmatprep.subr.mxu0 %v1565
        %2065 = vmatpush1.msra.mxu0 %v1564
        %2066 = vmatprep.subr.mxu0 %v1567
        %2067 = vmatpush1.msra.mxu0 %v1566
        %2068 = vmatprep.subr.mxu0 %v1569
        %2069 = vmatpush1.msra.mxu0 %v1568
        %2070 = vmatprep.subr.mxu0 %v1571
        %2071 = vmatpush1.msra.mxu0 %v1570
        %2072 = vmatprep.subr.mxu0 %v1573
        %2073 = vmatpush1.msra.mxu0 %v1572
        %2074 = vmatprep.subr.mxu0 %v1575
        %2075 = vmatpush1.msra.mxu0 %v1574
        %2076 = vmatprep.subr.mxu0 %v1577
        %2077 = vmatpush1.msra.mxu0 %v1576
        %2078 = vmatprep.subr.mxu0 0.0
        %2079 = vmatpush1.msra.mxu0 0.0
        %2080 = vmatprep.subr.mxu0 0.0
        %2081 = vmatpush1.msra.mxu0 0.0
        %2082 = vmatprep.subr.mxu0 0.0
        %2083 = vmatpush1.msra.mxu0 0.0
        %2084 = vmatprep.subr.mxu0 0.0
        %2085 = vmatpush1.msra.mxu0 0.0
        %2086 = vmatprep.mubr.f32.mxu0 %v1940
        %2087 = vmatmul.mubr.f32.gmra.mrb[0].mxu0 %v1455
        %v2088 = vpop.f32.mrb[0].mxu0
        %v2089 = vadd.f32 %v1929, %v2088
        %v2090 = vpop.f32.mrb[0].mxu0
        %v2091 = vadd.f32 %v1931, %v2090
        %2092 = vmatprep.mubr.f32.mxu0 %v1943
        %2093 = vmatmul.mubr.f32.gmra.mrb[0].mxu0 %v1461
        %v2094 = vpop.f32.mrb[0].mxu0
        %v2095 = vadd.f32 %v1935, %v2094
        %v2096 = vpop.f32.mrb[0].mxu0
        %v2097 = vadd.f32 %v1937, %v2096
        %2098 = vdwg.mxu0
        %s2099 = scalar_lea.vmem %s4, 32
        %v2100 = vld [vmem:[%s2099] sm:$0xff]
        %v2101 = vld [vmem:[%s2099 + $0x8] sm:$0x3f]
        %v2103 = vsel %vm1374, %v2100, 0
        %v2106 = vsel %vm1374, %v2101, 0
        %2108 = vmatprep.subr.mxu0 %v1369
        %2109 = vmatpush1.msra.mxu0 %v1368
        %2110 = vmatprep.subr.mxu0 %v1386
        %2111 = vmatpush1.msra.mxu0 %v1383
        %2112 = vmatprep.subr.mxu0 0.0
        %2113 = vmatpush1.msra.mxu0 0.0
        %2114 = vmatprep.subr.mxu0 0.0
        %2115 = vmatpush1.msra.mxu0 0.0
        %2116 = vmatprep.subr.mxu0 0.0
        %2117 = vmatpush1.msra.mxu0 0.0
        %2118 = vmatprep.subr.mxu0 0.0
        %2119 = vmatpush1.msra.mxu0 0.0
        %2120 = vmatprep.subr.mxu0 0.0
        %2121 = vmatpush1.msra.mxu0 0.0
        %2122 = vmatprep.subr.mxu0 0.0
        %2123 = vmatpush1.msra.mxu0 0.0
        %2124 = vmatprep.subr.mxu0 0.0
        %2125 = vmatpush1.msra.mxu0 0.0
        %2126 = vmatprep.subr.mxu0 0.0
        %2127 = vmatpush1.msra.mxu0 0.0
        %2128 = vmatprep.subr.mxu0 0.0
        %2129 = vmatpush1.msra.mxu0 0.0
        %2130 = vmatprep.subr.mxu0 0.0
        %2131 = vmatpush1.msra.mxu0 0.0
        %2132 = vmatprep.subr.mxu0 0.0
        %2133 = vmatpush1.msra.mxu0 0.0
        %2134 = vmatprep.subr.mxu0 0.0
        %2135 = vmatpush1.msra.mxu0 0.0
        %2136 = vmatprep.subr.mxu0 0.0
        %2137 = vmatpush1.msra.mxu0 0.0
        %2138 = vmatprep.subr.mxu0 0.0
        %2139 = vmatpush1.msra.mxu0 0.0
        %2140 = vmatprep.subr.mxu0 0.0
        %2141 = vmatpush1.msra.mxu0 0.0
        %2142 = vmatprep.subr.mxu0 0.0
        %2143 = vmatpush1.msra.mxu0 0.0
        %2144 = vmatprep.subr.mxu0 0.0
        %2145 = vmatpush1.msra.mxu0 0.0
        %2146 = vmatprep.subr.mxu0 0.0
        %2147 = vmatpush1.msra.mxu0 0.0
        %2148 = vmatprep.subr.mxu0 0.0
        %2149 = vmatpush1.msra.mxu0 0.0
        %2150 = vmatprep.subr.mxu0 0.0
        %2151 = vmatpush1.msra.mxu0 0.0
        %2152 = vmatprep.subr.mxu0 0.0
        %2153 = vmatpush1.msra.mxu0 0.0
        %2154 = vmatprep.subr.mxu0 0.0
        %2155 = vmatpush1.msra.mxu0 0.0
        %2156 = vmatprep.subr.mxu0 0.0
        %2157 = vmatpush1.msra.mxu0 0.0
        %2158 = vmatprep.subr.mxu0 0.0
        %2159 = vmatpush1.msra.mxu0 0.0
        %2160 = vmatprep.subr.mxu0 0.0
        %2161 = vmatpush1.msra.mxu0 0.0
        %2162 = vmatprep.subr.mxu0 0.0
        %2163 = vmatpush1.msra.mxu0 0.0
        %2164 = vmatprep.subr.mxu0 0.0
        %2165 = vmatpush1.msra.mxu0 0.0
        %2166 = vmatprep.subr.mxu0 0.0
        %2167 = vmatpush1.msra.mxu0 0.0
        %2168 = vmatprep.subr.mxu0 0.0
        %2169 = vmatpush1.msra.mxu0 0.0
        %2170 = vmatprep.subr.mxu0 0.0
        %2171 = vmatpush1.msra.mxu0 0.0
        %2172 = vmatprep.mubr.f32.mxu0 0.0
        %2173 = vmatmul.mubr.f32.gmra.mrb[0].mxu0 %v2103
        %v2174 = vpop.f32.mrb[0].mxu0
        %v2175 = vadd.f32 0.0, %v2174
        %v2176 = vpop.f32.mrb[0].mxu0
        %v2177 = vadd.f32 0.0, %v2176
        %2178 = vmatprep.mubr.f32.mxu0 0.0
        %2179 = vmatmul.mubr.f32.gmra.mrb[0].mxu0 %v2106
        %v2180 = vpop.f32.mrb[0].mxu0
        %v2181 = vadd.f32 0.0, %v2180
        %v2182 = vpop.f32.mrb[0].mxu0
        %v2183 = vadd.f32 0.0, %v2182
        %2184 = vdwg.mxu0
        %s2185 = scalar_lea.vmem %s5, 896
        %v2186 = vld [vmem:[%s2185] sm:$0xff]
        %v2187 = vld [vmem:[%s2185 + $0x8] sm:$0xff]
        %v2188 = vld [vmem:[%s2185 + $0x10] sm:$0xff]
        %v2189 = vld [vmem:[%s2185 + $0x18] sm:$0xff]
        %v2190 = vld [vmem:[%s2185 + $0x20] sm:$0xff]
        %v2191 = vld [vmem:[%s2185 + $0x28] sm:$0xff]
        %v2192 = vld [vmem:[%s2185 + $0x30] sm:$0xff]
        %v2193 = vld [vmem:[%s2185 + $0x38] sm:$0xff]
        %v2194 = vld [vmem:[%s2185 + $0x40] sm:$0xff]
        %v2195 = vld [vmem:[%s2185 + $0x48] sm:$0xff]
        %v2196 = vld [vmem:[%s2185 + $0x50] sm:$0xff]
        %v2197 = vld [vmem:[%s2185 + $0x58] sm:$0xff]
        %v2198 = vld [vmem:[%s2185 + $0x60] sm:$0xff]
        %v2199 = vld [vmem:[%s2185 + $0x68] sm:$0xff]
        %v2200 = vld [vmem:[%s2185 + $0x70] sm:$0xff]
        %v2201 = vld [vmem:[%s2185 + $0x78] sm:$0xff]
        %v2202 = vld [vmem:[%s2185 + $0x80] sm:$0xff]
        %v2203 = vld [vmem:[%s2185 + $0x88] sm:$0xff]
        %v2204 = vld [vmem:[%s2185 + $0x90] sm:$0xff]
        %v2205 = vld [vmem:[%s2185 + $0x98] sm:$0xff]
        %v2206 = vld [vmem:[%s2185 + $0xa0] sm:$0xff]
        %v2207 = vld [vmem:[%s2185 + $0xa8] sm:$0xff]
        %v2208 = vld [vmem:[%s2185 + $0xb0] sm:$0xff]
        %v2209 = vld [vmem:[%s2185 + $0xb8] sm:$0xff]
        %v2210 = vld [vmem:[%s2185 + $0xc0] sm:$0xff]
        %v2211 = vld [vmem:[%s2185 + $0xc8] sm:$0xff]
        %v2212 = vld [vmem:[%s2185 + $0xd0] sm:$0xff]
        %v2213 = vld [vmem:[%s2185 + $0xd8] sm:$0xff]
        %v2214 = vld [vmem:[%s2185 + $0xe0] sm:$0xff]
        %v2215 = vld [vmem:[%s2185 + $0xe8] sm:$0xff]
        %v2216 = vld [vmem:[%s2185 + $0xf0] sm:$0xff]
        %v2217 = vld [vmem:[%s2185 + $0xf8] sm:$0xff]
        %v2218 = vld [vmem:[%s2185 + $0x100] sm:$0xff]
        %v2219 = vld [vmem:[%s2185 + $0x108] sm:$0xff]
        %v2220 = vld [vmem:[%s2185 + $0x110] sm:$0xff]
        %v2221 = vld [vmem:[%s2185 + $0x118] sm:$0xff]
        %v2222 = vld [vmem:[%s2185 + $0x120] sm:$0xff]
        %v2223 = vld [vmem:[%s2185 + $0x128] sm:$0xff]
        %v2224 = vld [vmem:[%s2185 + $0x130] sm:$0xff]
        %v2225 = vld [vmem:[%s2185 + $0x138] sm:$0xff]
        %v2226 = vld [vmem:[%s2185 + $0x140] sm:$0xff]
        %v2227 = vld [vmem:[%s2185 + $0x148] sm:$0xff]
        %v2228 = vld [vmem:[%s2185 + $0x150] sm:$0xff]
        %v2229 = vld [vmem:[%s2185 + $0x158] sm:$0xff]
        %v2230 = vld [vmem:[%s2185 + $0x160] sm:$0xff]
        %v2231 = vld [vmem:[%s2185 + $0x168] sm:$0xff]
        %v2232 = vld [vmem:[%s2185 + $0x170] sm:$0xff]
        %v2233 = vld [vmem:[%s2185 + $0x178] sm:$0xff]
        %v2234 = vld [vmem:[%s2185 + $0x180] sm:$0xff]
        %v2235 = vld [vmem:[%s2185 + $0x188] sm:$0xff]
        %v2236 = vld [vmem:[%s2185 + $0x190] sm:$0xff]
        %v2237 = vld [vmem:[%s2185 + $0x198] sm:$0xff]
        %v2238 = vld [vmem:[%s2185 + $0x1a0] sm:$0xff]
        %v2239 = vld [vmem:[%s2185 + $0x1a8] sm:$0xff]
        %v2240 = vld [vmem:[%s2185 + $0x1b0] sm:$0xff]
        %v2241 = vld [vmem:[%s2185 + $0x1b8] sm:$0xff]
        %v2243 = vsel %vm1721, %v2177, 0
        %v2246 = vsel %vm1721, %v2183, 0
        %2248 = vmatprep.subr.mxu0 %v2187
        %2249 = vmatpush1.msra.mxu0 %v2186
        %2250 = vmatprep.subr.mxu0 %v2189
        %2251 = vmatpush1.msra.mxu0 %v2188
        %2252 = vmatprep.subr.mxu0 %v2191
        %2253 = vmatpush1.msra.mxu0 %v2190
        %2254 = vmatprep.subr.mxu0 %v2193
        %2255 = vmatpush1.msra.mxu0 %v2192
        %2256 = vmatprep.subr.mxu0 %v2195
        %2257 = vmatpush1.msra.mxu0 %v2194
        %2258 = vmatprep.subr.mxu0 %v2197
        %2259 = vmatpush1.msra.mxu0 %v2196
        %2260 = vmatprep.subr.mxu0 %v2199
        %2261 = vmatpush1.msra.mxu0 %v2198
        %2262 = vmatprep.subr.mxu0 %v2201
        %2263 = vmatpush1.msra.mxu0 %v2200
        %2264 = vmatprep.subr.mxu0 %v2203
        %2265 = vmatpush1.msra.mxu0 %v2202
        %2266 = vmatprep.subr.mxu0 %v2205
        %2267 = vmatpush1.msra.mxu0 %v2204
        %2268 = vmatprep.subr.mxu0 %v2207
        %2269 = vmatpush1.msra.mxu0 %v2206
        %2270 = vmatprep.subr.mxu0 %v2209
        %2271 = vmatpush1.msra.mxu0 %v2208
        %2272 = vmatprep.subr.mxu0 %v2211
        %2273 = vmatpush1.msra.mxu0 %v2210
        %2274 = vmatprep.subr.mxu0 %v2213
        %2275 = vmatpush1.msra.mxu0 %v2212
        %2276 = vmatprep.subr.mxu0 %v2215
        %2277 = vmatpush1.msra.mxu0 %v2214
        %2278 = vmatprep.subr.mxu0 %v2217
        %2279 = vmatpush1.msra.mxu0 %v2216
        %2280 = vmatprep.subr.mxu0 %v2219
        %2281 = vmatpush1.msra.mxu0 %v2218
        %2282 = vmatprep.subr.mxu0 %v2221
        %2283 = vmatpush1.msra.mxu0 %v2220
        %2284 = vmatprep.subr.mxu0 %v2223
        %2285 = vmatpush1.msra.mxu0 %v2222
        %2286 = vmatprep.subr.mxu0 %v2225
        %2287 = vmatpush1.msra.mxu0 %v2224
        %2288 = vmatprep.subr.mxu0 %v2227
        %2289 = vmatpush1.msra.mxu0 %v2226
        %2290 = vmatprep.subr.mxu0 %v2229
        %2291 = vmatpush1.msra.mxu0 %v2228
        %2292 = vmatprep.subr.mxu0 %v2231
        %2293 = vmatpush1.msra.mxu0 %v2230
        %2294 = vmatprep.subr.mxu0 %v2233
        %2295 = vmatpush1.msra.mxu0 %v2232
        %2296 = vmatprep.subr.mxu0 %v2235
        %2297 = vmatpush1.msra.mxu0 %v2234
        %2298 = vmatprep.subr.mxu0 %v2237
        %2299 = vmatpush1.msra.mxu0 %v2236
        %2300 = vmatprep.subr.mxu0 %v2239
        %2301 = vmatpush1.msra.mxu0 %v2238
        %2302 = vmatprep.subr.mxu0 %v2241
        %2303 = vmatpush1.msra.mxu0 %v2240
        %2304 = vmatprep.subr.mxu0 0.0
        %2305 = vmatpush1.msra.mxu0 0.0
        %2306 = vmatprep.subr.mxu0 0.0
        %2307 = vmatpush1.msra.mxu0 0.0
        %2308 = vmatprep.subr.mxu0 0.0
        %2309 = vmatpush1.msra.mxu0 0.0
        %2310 = vmatprep.subr.mxu0 0.0
        %2311 = vmatpush1.msra.mxu0 0.0
        %2312 = vmatprep.mubr.f32.mxu0 %v2243
        %2313 = vmatmul.mubr.f32.gmra.mrb[0].mxu0 %v2175
        %v2314 = vpop.f32.mrb[0].mxu0
        %v2315 = vadd.f32 0.0, %v2314
        %v2316 = vpop.f32.mrb[0].mxu0
        %v2317 = vadd.f32 0.0, %v2316
        %2318 = vmatprep.mubr.f32.mxu0 %v2246
        %2319 = vmatmul.mubr.f32.gmra.mrb[0].mxu0 %v2181
        %v2320 = vpop.f32.mrb[0].mxu0
        %v2321 = vadd.f32 0.0, %v2320
        %v2322 = vpop.f32.mrb[0].mxu0
        %v2323 = vadd.f32 0.0, %v2322
        %2324 = vdwg.mxu0
        %s2325 = scalar_lea.vmem %s5, 2240
        %v2326 = vld [vmem:[%s2325] sm:$0xff]
        %v2327 = vld [vmem:[%s2325 + $0x8] sm:$0xff]
        %v2328 = vld [vmem:[%s2325 + $0x10] sm:$0xff]
        %v2329 = vld [vmem:[%s2325 + $0x18] sm:$0xff]
        %v2330 = vld [vmem:[%s2325 + $0x20] sm:$0xff]
        %v2331 = vld [vmem:[%s2325 + $0x28] sm:$0xff]
        %v2332 = vld [vmem:[%s2325 + $0x30] sm:$0xff]
        %v2333 = vld [vmem:[%s2325 + $0x38] sm:$0xff]
        %v2334 = vld [vmem:[%s2325 + $0x40] sm:$0xff]
        %v2335 = vld [vmem:[%s2325 + $0x48] sm:$0xff]
        %v2336 = vld [vmem:[%s2325 + $0x50] sm:$0xff]
        %v2337 = vld [vmem:[%s2325 + $0x58] sm:$0xff]
        %v2338 = vld [vmem:[%s2325 + $0x60] sm:$0xff]
        %v2339 = vld [vmem:[%s2325 + $0x68] sm:$0xff]
        %v2340 = vld [vmem:[%s2325 + $0x70] sm:$0xff]
        %v2341 = vld [vmem:[%s2325 + $0x78] sm:$0xff]
        %v2342 = vld [vmem:[%s2325 + $0x80] sm:$0xff]
        %v2343 = vld [vmem:[%s2325 + $0x88] sm:$0xff]
        %v2344 = vld [vmem:[%s2325 + $0x90] sm:$0xff]
        %v2345 = vld [vmem:[%s2325 + $0x98] sm:$0xff]
        %v2346 = vld [vmem:[%s2325 + $0xa0] sm:$0xff]
        %v2347 = vld [vmem:[%s2325 + $0xa8] sm:$0xff]
        %v2348 = vld [vmem:[%s2325 + $0xb0] sm:$0xff]
        %v2349 = vld [vmem:[%s2325 + $0xb8] sm:$0xff]
        %v2350 = vld [vmem:[%s2325 + $0xc0] sm:$0xff]
        %v2351 = vld [vmem:[%s2325 + $0xc8] sm:$0xff]
        %v2352 = vld [vmem:[%s2325 + $0xd0] sm:$0xff]
        %v2353 = vld [vmem:[%s2325 + $0xd8] sm:$0xff]
        %v2354 = vld [vmem:[%s2325 + $0xe0] sm:$0xff]
        %v2355 = vld [vmem:[%s2325 + $0xe8] sm:$0xff]
        %v2356 = vld [vmem:[%s2325 + $0xf0] sm:$0xff]
        %v2357 = vld [vmem:[%s2325 + $0xf8] sm:$0xff]
        %v2358 = vld [vmem:[%s2325 + $0x100] sm:$0xff]
        %v2359 = vld [vmem:[%s2325 + $0x108] sm:$0xff]
        %v2360 = vld [vmem:[%s2325 + $0x110] sm:$0xff]
        %v2361 = vld [vmem:[%s2325 + $0x118] sm:$0xff]
        %v2362 = vld [vmem:[%s2325 + $0x120] sm:$0xff]
        %v2363 = vld [vmem:[%s2325 + $0x128] sm:$0xff]
        %v2364 = vld [vmem:[%s2325 + $0x130] sm:$0xff]
        %v2365 = vld [vmem:[%s2325 + $0x138] sm:$0xff]
        %v2366 = vld [vmem:[%s2325 + $0x140] sm:$0xff]
        %v2367 = vld [vmem:[%s2325 + $0x148] sm:$0xff]
        %v2368 = vld [vmem:[%s2325 + $0x150] sm:$0xff]
        %v2369 = vld [vmem:[%s2325 + $0x158] sm:$0xff]
        %v2370 = vld [vmem:[%s2325 + $0x160] sm:$0xff]
        %v2371 = vld [vmem:[%s2325 + $0x168] sm:$0xff]
        %v2372 = vld [vmem:[%s2325 + $0x170] sm:$0xff]
        %v2373 = vld [vmem:[%s2325 + $0x178] sm:$0xff]
        %v2374 = vld [vmem:[%s2325 + $0x180] sm:$0xff]
        %v2375 = vld [vmem:[%s2325 + $0x188] sm:$0xff]
        %v2376 = vld [vmem:[%s2325 + $0x190] sm:$0xff]
        %v2377 = vld [vmem:[%s2325 + $0x198] sm:$0xff]
        %v2378 = vld [vmem:[%s2325 + $0x1a0] sm:$0xff]
        %v2379 = vld [vmem:[%s2325 + $0x1a8] sm:$0xff]
        %v2380 = vld [vmem:[%s2325 + $0x1b0] sm:$0xff]
        %v2381 = vld [vmem:[%s2325 + $0x1b8] sm:$0xff]
        %2382 = vmatprep.subr.mxu0 %v2327
        %2383 = vmatpush1.msra.mxu0 %v2326
        %2384 = vmatprep.subr.mxu0 %v2329
        %2385 = vmatpush1.msra.mxu0 %v2328
        %2386 = vmatprep.subr.mxu0 %v2331
        %2387 = vmatpush1.msra.mxu0 %v2330
        %2388 = vmatprep.subr.mxu0 %v2333
        %2389 = vmatpush1.msra.mxu0 %v2332
        %2390 = vmatprep.subr.mxu0 %v2335
        %2391 = vmatpush1.msra.mxu0 %v2334
        %2392 = vmatprep.subr.mxu0 %v2337
        %2393 = vmatpush1.msra.mxu0 %v2336
        %2394 = vmatprep.subr.mxu0 %v2339
        %2395 = vmatpush1.msra.mxu0 %v2338
        %2396 = vmatprep.subr.mxu0 %v2341
        %2397 = vmatpush1.msra.mxu0 %v2340
        %2398 = vmatprep.subr.mxu0 %v2343
        %2399 = vmatpush1.msra.mxu0 %v2342
        %2400 = vmatprep.subr.mxu0 %v2345
        %2401 = vmatpush1.msra.mxu0 %v2344
        %2402 = vmatprep.subr.mxu0 %v2347
        %2403 = vmatpush1.msra.mxu0 %v2346
        %2404 = vmatprep.subr.mxu0 %v2349
        %2405 = vmatpush1.msra.mxu0 %v2348
        %2406 = vmatprep.subr.mxu0 %v2351
        %2407 = vmatpush1.msra.mxu0 %v2350
        %2408 = vmatprep.subr.mxu0 %v2353
        %2409 = vmatpush1.msra.mxu0 %v2352
        %2410 = vmatprep.subr.mxu0 %v2355
        %2411 = vmatpush1.msra.mxu0 %v2354
        %2412 = vmatprep.subr.mxu0 %v2357
        %2413 = vmatpush1.msra.mxu0 %v2356
        %2414 = vmatprep.subr.mxu0 %v2359
        %2415 = vmatpush1.msra.mxu0 %v2358
        %2416 = vmatprep.subr.mxu0 %v2361
        %2417 = vmatpush1.msra.mxu0 %v2360
        %2418 = vmatprep.subr.mxu0 %v2363
        %2419 = vmatpush1.msra.mxu0 %v2362
        %2420 = vmatprep.subr.mxu0 %v2365
        %2421 = vmatpush1.msra.mxu0 %v2364
        %2422 = vmatprep.subr.mxu0 %v2367
        %2423 = vmatpush1.msra.mxu0 %v2366
        %2424 = vmatprep.subr.mxu0 %v2369
        %2425 = vmatpush1.msra.mxu0 %v2368
        %2426 = vmatprep.subr.mxu0 %v2371
        %2427 = vmatpush1.msra.mxu0 %v2370
        %2428 = vmatprep.subr.mxu0 %v2373
        %2429 = vmatpush1.msra.mxu0 %v2372
        %2430 = vmatprep.subr.mxu0 %v2375
        %2431 = vmatpush1.msra.mxu0 %v2374
        %2432 = vmatprep.subr.mxu0 %v2377
        %2433 = vmatpush1.msra.mxu0 %v2376
        %2434 = vmatprep.subr.mxu0 %v2379
        %2435 = vmatpush1.msra.mxu0 %v2378
        %2436 = vmatprep.subr.mxu0 %v2381
        %2437 = vmatpush1.msra.mxu0 %v2380
        %2438 = vmatprep.subr.mxu0 0.0
        %2439 = vmatpush1.msra.mxu0 0.0
        %2440 = vmatprep.subr.mxu0 0.0
        %2441 = vmatpush1.msra.mxu0 0.0
        %2442 = vmatprep.subr.mxu0 0.0
        %2443 = vmatpush1.msra.mxu0 0.0
        %2444 = vmatprep.subr.mxu0 0.0
        %2445 = vmatpush1.msra.mxu0 0.0
        %2446 = vmatprep.mubr.f32.mxu0 %v2243
        %2447 = vmatmul.mubr.f32.gmra.mrb[0].mxu0 %v2175
        %v2448 = vpop.f32.mrb[0].mxu0
        %v2449 = vadd.f32 0.0, %v2448
        %v2450 = vpop.f32.mrb[0].mxu0
        %v2451 = vadd.f32 0.0, %v2450
        %2452 = vmatprep.mubr.f32.mxu0 %v2246
        %2453 = vmatmul.mubr.f32.gmra.mrb[0].mxu0 %v2181
        %v2454 = vpop.f32.mrb[0].mxu0
        %v2455 = vadd.f32 0.0, %v2454
        %v2456 = vpop.f32.mrb[0].mxu0
        %v2457 = vadd.f32 0.0, %v2456
        %2458 = vdwg.mxu0
        %v2459 = vadd.f32 %v2012, %v2315
        %v2460 = vadd.f32 %v2014, %v2317
        %v2461 = vadd.f32 %v2018, %v2321
        %v2462 = vadd.f32 %v2020, %v2323
        %v2463 = vadd.f32 %v2089, %v2449
        %v2464 = vadd.f32 %v2091, %v2451
        %v2465 = vadd.f32 %v2095, %v2455
        %v2466 = vadd.f32 %v2097, %v2457
        %v2467 = vmax.f32 %v2459, %v2463
        %v2468 = vmax.f32 %v2460, %v2464
        %v2469 = vmax.f32 %v2461, %v2465
        %v2470 = vmax.f32 %v2462, %v2466
        %vm2475 = vcmask 1040384
        %v2476 = vrot.slane %v2467, 7
        %v2477 = vrot.slane %v2469, 7
        %v2478 = vsel %vm2475, %v2476, %v2477
        %v2479 = vrot.slane %v2468, 7
        %v2480 = vrot.slane %v2470, 7
        %v2481 = vsel %vm2475, %v2479, %v2480
        %v2484 = vmax.f32 %v2467, %v2478
        %v2485 = vmax.f32 %v2468, %v2481
        %v2486 = vld [vmem:[%s6] sm:$0x3]
        %v2488 = vlaneseq
        %v2489 = vshrl.u32 %v2488, 7
        %v2490 = vsub.s32 0, %v2489
        %v2491 = vrot.slane %v2486, %v2490
        %v2492 = vlaneseq
        %v2493 = vshrl.u32 %v2492, 7
        %v2494 = vsub.s32 1, %v2493
        %v2495 = vrot.slane %v2486, %v2494
        %v2498 = vadd.f32 %v2484, %v2491
        %v2499 = vadd.f32 %v2485, %v2495
        %v2500 = vmax.f32 %v2498, 0.0
        %v2501 = vmax.f32 %v2499, 0.0
        %v2502 = vld [vmem:[%s7] sm:$0xff]
        %v2503 = vld [vmem:[%s7 + $0x8] sm:$0xff]
        %v2504 = vld [vmem:[%s7 + $0x10] sm:$0xff]
        %v2505 = vld [vmem:[%s7 + $0x18] sm:$0xff]
        %v2506 = vld [vmem:[%s7 + $0x20] sm:$0xff]
        %v2507 = vld [vmem:[%s7 + $0x28] sm:$0xff]
        %v2508 = vld [vmem:[%s7 + $0x30] sm:$0xff]
        %v2509 = vld [vmem:[%s7 + $0x38] sm:$0xff]
        %v2510 = vld [vmem:[%s7 + $0x40] sm:$0xff]
        %v2511 = vld [vmem:[%s7 + $0x48] sm:$0xff]
        %v2512 = vld [vmem:[%s7 + $0x50] sm:$0xff]
        %v2513 = vld [vmem:[%s7 + $0x58] sm:$0xff]
        %v2514 = vld [vmem:[%s7 + $0x60] sm:$0xff]
        %v2515 = vld [vmem:[%s7 + $0x68] sm:$0xff]
        %v2516 = vld [vmem:[%s7 + $0x70] sm:$0xff]
        %v2517 = vld [vmem:[%s7 + $0x78] sm:$0xff]
        %v2518 = vld [vmem:[%s7 + $0x80] sm:$0xff]
        %v2519 = vld [vmem:[%s7 + $0x88] sm:$0xff]
        %v2520 = vld [vmem:[%s7 + $0x90] sm:$0xff]
        %v2521 = vld [vmem:[%s7 + $0x98] sm:$0xff]
        %v2522 = vld [vmem:[%s7 + $0xa0] sm:$0xff]
        %v2523 = vld [vmem:[%s7 + $0xa8] sm:$0xff]
        %v2524 = vld [vmem:[%s7 + $0xb0] sm:$0xff]
        %v2525 = vld [vmem:[%s7 + $0xb8] sm:$0xff]
        %v2526 = vld [vmem:[%s7 + $0xc0] sm:$0xff]
        %v2527 = vld [vmem:[%s7 + $0xc8] sm:$0xff]
        %v2528 = vld [vmem:[%s7 + $0xd0] sm:$0xff]
        %v2529 = vld [vmem:[%s7 + $0xd8] sm:$0xff]
        %s2530 = scalar_lea.vmem %s7, 224
        %v2531 = vld [vmem:[%s2530] sm:$0xff]
        %v2532 = vld [vmem:[%s2530 + $0x8] sm:$0xff]
        %v2533 = vld [vmem:[%s2530 + $0x10] sm:$0xff]
        %v2534 = vld [vmem:[%s2530 + $0x18] sm:$0xff]
        %v2535 = vld [vmem:[%s2530 + $0x20] sm:$0xff]
        %v2536 = vld [vmem:[%s2530 + $0x28] sm:$0xff]
        %v2537 = vld [vmem:[%s2530 + $0x30] sm:$0xff]
        %v2538 = vld [vmem:[%s2530 + $0x38] sm:$0xff]
        %v2539 = vld [vmem:[%s2530 + $0x40] sm:$0xff]
        %v2540 = vld [vmem:[%s2530 + $0x48] sm:$0xff]
        %v2541 = vld [vmem:[%s2530 + $0x50] sm:$0xff]
        %v2542 = vld [vmem:[%s2530 + $0x58] sm:$0xff]
        %v2543 = vld [vmem:[%s2530 + $0x60] sm:$0xff]
        %v2544 = vld [vmem:[%s2530 + $0x68] sm:$0xff]
        %v2545 = vld [vmem:[%s2530 + $0x70] sm:$0xff]
        %v2546 = vld [vmem:[%s2530 + $0x78] sm:$0xff]
        %v2547 = vld [vmem:[%s2530 + $0x80] sm:$0xff]
        %v2548 = vld [vmem:[%s2530 + $0x88] sm:$0xff]
        %v2549 = vld [vmem:[%s2530 + $0x90] sm:$0xff]
        %v2550 = vld [vmem:[%s2530 + $0x98] sm:$0xff]
        %v2551 = vld [vmem:[%s2530 + $0xa0] sm:$0xff]
        %v2552 = vld [vmem:[%s2530 + $0xa8] sm:$0xff]
        %v2553 = vld [vmem:[%s2530 + $0xb0] sm:$0xff]
        %v2554 = vld [vmem:[%s2530 + $0xb8] sm:$0xff]
        %v2555 = vld [vmem:[%s2530 + $0xc0] sm:$0xff]
        %v2556 = vld [vmem:[%s2530 + $0xc8] sm:$0xff]
        %v2557 = vld [vmem:[%s2530 + $0xd0] sm:$0xff]
        %v2558 = vld [vmem:[%s2530 + $0xd8] sm:$0xff]
        %v2561 = vrot.slane %v2500, 1
        %v2562 = vrot.slane %v2501, 1
        %v2564 = vsel %vm1721, %v2562, 0
        %2566 = vmatprep.subr.mxu0 0.0
        %2567 = vmatpush1.msra.mxu0 %v2531
        %2568 = vmatprep.subr.mxu0 0.0
        %2569 = vmatpush1.msra.mxu0 %v2532
        %2570 = vmatprep.subr.mxu0 0.0
        %2571 = vmatpush1.msra.mxu0 %v2533
        %2572 = vmatprep.subr.mxu0 0.0
        %2573 = vmatpush1.msra.mxu0 %v2534
        %2574 = vmatprep.subr.mxu0 0.0
        %2575 = vmatpush1.msra.mxu0 %v2535
        %2576 = vmatprep.subr.mxu0 0.0
        %2577 = vmatpush1.msra.mxu0 %v2536
        %2578 = vmatprep.subr.mxu0 0.0
        %2579 = vmatpush1.msra.mxu0 %v2537
        %2580 = vmatprep.subr.mxu0 0.0
        %2581 = vmatpush1.msra.mxu0 %v2538
        %2582 = vmatprep.subr.mxu0 0.0
        %2583 = vmatpush1.msra.mxu0 %v2539
        %2584 = vmatprep.subr.mxu0 0.0
        %2585 = vmatpush1.msra.mxu0 %v2540
        %2586 = vmatprep.subr.mxu0 0.0
        %2587 = vmatpush1.msra.mxu0 %v2541
        %2588 = vmatprep.subr.mxu0 0.0
        %2589 = vmatpush1.msra.mxu0 %v2542
        %2590 = vmatprep.subr.mxu0 0.0
        %2591 = vmatpush1.msra.mxu0 %v2543
        %2592 = vmatprep.subr.mxu0 0.0
        %2593 = vmatpush1.msra.mxu0 %v2544
        %2594 = vmatprep.subr.mxu0 0.0
        %2595 = vmatpush1.msra.mxu0 %v2545
        %2596 = vmatprep.subr.mxu0 0.0
        %2597 = vmatpush1.msra.mxu0 %v2546
        %2598 = vmatprep.subr.mxu0 0.0
        %2599 = vmatpush1.msra.mxu0 %v2547
        %2600 = vmatprep.subr.mxu0 0.0
        %2601 = vmatpush1.msra.mxu0 %v2548
        %2602 = vmatprep.subr.mxu0 0.0
        %2603 = vmatpush1.msra.mxu0 %v2549
        %2604 = vmatprep.subr.mxu0 0.0
        %2605 = vmatpush1.msra.mxu0 %v2550
        %2606 = vmatprep.subr.mxu0 0.0
        %2607 = vmatpush1.msra.mxu0 %v2551
        %2608 = vmatprep.subr.mxu0 0.0
        %2609 = vmatpush1.msra.mxu0 %v2552
        %2610 = vmatprep.subr.mxu0 0.0
        %2611 = vmatpush1.msra.mxu0 %v2553
        %2612 = vmatprep.subr.mxu0 0.0
        %2613 = vmatpush1.msra.mxu0 %v2554
        %2614 = vmatprep.subr.mxu0 0.0
        %2615 = vmatpush1.msra.mxu0 %v2555
        %2616 = vmatprep.subr.mxu0 0.0
        %2617 = vmatpush1.msra.mxu0 %v2556
        %2618 = vmatprep.subr.mxu0 0.0
        %2619 = vmatpush1.msra.mxu0 %v2557
        %2620 = vmatprep.subr.mxu0 0.0
        %2621 = vmatpush1.msra.mxu0 %v2558
        %2622 = vmatprep.subr.mxu0 0.0
        %2623 = vmatpush1.msra.mxu0 0.0
        %2624 = vmatprep.subr.mxu0 0.0
        %2625 = vmatpush1.msra.mxu0 0.0
        %2626 = vmatprep.subr.mxu0 0.0
        %2627 = vmatpush1.msra.mxu0 0.0
        %2628 = vmatprep.subr.mxu0 0.0
        %2629 = vmatpush1.msra.mxu0 0.0
        %2630 = vmatprep.mubr.f32.mxu0 %v2564
        %2631 = vmatmul.mubr.f32.gmra.mrb[0].mxu0 %v2561
        %v2632 = vpop.f32.mrb[0].mxu0
        %v2633 = vadd.f32 0.0, %v2632
        %v2634 = vpop.f32.mrb[0].mxu0
        %2635 = vdwg.mxu0
        %v2636 = vsel %vm1721, %v2501, 0
        %2638 = vmatprep.subr.mxu0 0.0
        %2639 = vmatpush1.msra.mxu0 %v2502
        %2640 = vmatprep.subr.mxu0 0.0
        %2641 = vmatpush1.msra.mxu0 %v2503
        %2642 = vmatprep.subr.mxu0 0.0
        %2643 = vmatpush1.msra.mxu0 %v2504
        %2644 = vmatprep.subr.mxu0 0.0
        %2645 = vmatpush1.msra.mxu0 %v2505
        %2646 = vmatprep.subr.mxu0 0.0
        %2647 = vmatpush1.msra.mxu0 %v2506
        %2648 = vmatprep.subr.mxu0 0.0
        %2649 = vmatpush1.msra.mxu0 %v2507
        %2650 = vmatprep.subr.mxu0 0.0
        %2651 = vmatpush1.msra.mxu0 %v2508
        %2652 = vmatprep.subr.mxu0 0.0
        %2653 = vmatpush1.msra.mxu0 %v2509
        %2654 = vmatprep.subr.mxu0 0.0
        %2655 = vmatpush1.msra.mxu0 %v2510
        %2656 = vmatprep.subr.mxu0 0.0
        %2657 = vmatpush1.msra.mxu0 %v2511
        %2658 = vmatprep.subr.mxu0 0.0
        %2659 = vmatpush1.msra.mxu0 %v2512
        %2660 = vmatprep.subr.mxu0 0.0
        %2661 = vmatpush1.msra.mxu0 %v2513
        %2662 = vmatprep.subr.mxu0 0.0
        %2663 = vmatpush1.msra.mxu0 %v2514
        %2664 = vmatprep.subr.mxu0 0.0
        %2665 = vmatpush1.msra.mxu0 %v2515
        %2666 = vmatprep.subr.mxu0 0.0
        %2667 = vmatpush1.msra.mxu0 %v2516
        %2668 = vmatprep.subr.mxu0 0.0
        %2669 = vmatpush1.msra.mxu0 %v2517
        %2670 = vmatprep.subr.mxu0 0.0
        %2671 = vmatpush1.msra.mxu0 %v2518
        %2672 = vmatprep.subr.mxu0 0.0
        %2673 = vmatpush1.msra.mxu0 %v2519
        %2674 = vmatprep.subr.mxu0 0.0
        %2675 = vmatpush1.msra.mxu0 %v2520
        %2676 = vmatprep.subr.mxu0 0.0
        %2677 = vmatpush1.msra.mxu0 %v2521
        %2678 = vmatprep.subr.mxu0 0.0
        %2679 = vmatpush1.msra.mxu0 %v2522
        %2680 = vmatprep.subr.mxu0 0.0
        %2681 = vmatpush1.msra.mxu0 %v2523
        %2682 = vmatprep.subr.mxu0 0.0
        %2683 = vmatpush1.msra.mxu0 %v2524
        %2684 = vmatprep.subr.mxu0 0.0
        %2685 = vmatpush1.msra.mxu0 %v2525
        %2686 = vmatprep.subr.mxu0 0.0
        %2687 = vmatpush1.msra.mxu0 %v2526
        %2688 = vmatprep.subr.mxu0 0.0
        %2689 = vmatpush1.msra.mxu0 %v2527
        %2690 = vmatprep.subr.mxu0 0.0
        %2691 = vmatpush1.msra.mxu0 %v2528
        %2692 = vmatprep.subr.mxu0 0.0
        %2693 = vmatpush1.msra.mxu0 %v2529
        %2694 = vmatprep.subr.mxu0 0.0
        %2695 = vmatpush1.msra.mxu0 0.0
        %2696 = vmatprep.subr.mxu0 0.0
        %2697 = vmatpush1.msra.mxu0 0.0
        %2698 = vmatprep.subr.mxu0 0.0
        %2699 = vmatpush1.msra.mxu0 0.0
        %2700 = vmatprep.subr.mxu0 0.0
        %2701 = vmatpush1.msra.mxu0 0.0
        %2702 = vmatprep.mubr.f32.mxu0 %v2636
        %2703 = vmatmul.mubr.f32.gmra.mrb[0].mxu0 %v2500
        %v2704 = vpop.f32.mrb[0].mxu0
        %v2705 = vadd.f32 %v2633, %v2704
        %v2706 = vpop.f32.mrb[0].mxu0
        %2707 = vdwg.mxu0
        %s2708 = scalar_lea.vmem %s7, 448
        %v2709 = vld [vmem:[%s2708] sm:$0xff]
        %v2710 = vld [vmem:[%s2708 + $0x8] sm:$0xff]
        %v2711 = vld [vmem:[%s2708 + $0x10] sm:$0xff]
        %v2712 = vld [vmem:[%s2708 + $0x18] sm:$0xff]
        %v2713 = vld [vmem:[%s2708 + $0x20] sm:$0xff]
        %v2714 = vld [vmem:[%s2708 + $0x28] sm:$0xff]
        %v2715 = vld [vmem:[%s2708 + $0x30] sm:$0xff]
        %v2716 = vld [vmem:[%s2708 + $0x38] sm:$0xff]
        %v2717 = vld [vmem:[%s2708 + $0x40] sm:$0xff]
        %v2718 = vld [vmem:[%s2708 + $0x48] sm:$0xff]
        %v2719 = vld [vmem:[%s2708 + $0x50] sm:$0xff]
        %v2720 = vld [vmem:[%s2708 + $0x58] sm:$0xff]
        %v2721 = vld [vmem:[%s2708 + $0x60] sm:$0xff]
        %v2722 = vld [vmem:[%s2708 + $0x68] sm:$0xff]
        %v2723 = vld [vmem:[%s2708 + $0x70] sm:$0xff]
        %v2724 = vld [vmem:[%s2708 + $0x78] sm:$0xff]
        %v2725 = vld [vmem:[%s2708 + $0x80] sm:$0xff]
        %v2726 = vld [vmem:[%s2708 + $0x88] sm:$0xff]
        %v2727 = vld [vmem:[%s2708 + $0x90] sm:$0xff]
        %v2728 = vld [vmem:[%s2708 + $0x98] sm:$0xff]
        %v2729 = vld [vmem:[%s2708 + $0xa0] sm:$0xff]
        %v2730 = vld [vmem:[%s2708 + $0xa8] sm:$0xff]
        %v2731 = vld [vmem:[%s2708 + $0xb0] sm:$0xff]
        %v2732 = vld [vmem:[%s2708 + $0xb8] sm:$0xff]
        %v2733 = vld [vmem:[%s2708 + $0xc0] sm:$0xff]
        %v2734 = vld [vmem:[%s2708 + $0xc8] sm:$0xff]
        %v2735 = vld [vmem:[%s2708 + $0xd0] sm:$0xff]
        %v2736 = vld [vmem:[%s2708 + $0xd8] sm:$0xff]
        %v2737 = vrot.slane %v2500, 2
        %v2738 = vrot.slane %v2501, 2
        %v2740 = vsel %vm1721, %v2738, 0
        %2742 = vmatprep.subr.mxu0 0.0
        %2743 = vmatpush1.msra.mxu0 %v2709
        %2744 = vmatprep.subr.mxu0 0.0
        %2745 = vmatpush1.msra.mxu0 %v2710
        %2746 = vmatprep.subr.mxu0 0.0
        %2747 = vmatpush1.msra.mxu0 %v2711
        %2748 = vmatprep.subr.mxu0 0.0
        %2749 = vmatpush1.msra.mxu0 %v2712
        %2750 = vmatprep.subr.mxu0 0.0
        %2751 = vmatpush1.msra.mxu0 %v2713
        %2752 = vmatprep.subr.mxu0 0.0
        %2753 = vmatpush1.msra.mxu0 %v2714
        %2754 = vmatprep.subr.mxu0 0.0
        %2755 = vmatpush1.msra.mxu0 %v2715
        %2756 = vmatprep.subr.mxu0 0.0
        %2757 = vmatpush1.msra.mxu0 %v2716
        %2758 = vmatprep.subr.mxu0 0.0
        %2759 = vmatpush1.msra.mxu0 %v2717
        %2760 = vmatprep.subr.mxu0 0.0
        %2761 = vmatpush1.msra.mxu0 %v2718
        %2762 = vmatprep.subr.mxu0 0.0
        %2763 = vmatpush1.msra.mxu0 %v2719
        %2764 = vmatprep.subr.mxu0 0.0
        %2765 = vmatpush1.msra.mxu0 %v2720
        %2766 = vmatprep.subr.mxu0 0.0
        %2767 = vmatpush1.msra.mxu0 %v2721
        %2768 = vmatprep.subr.mxu0 0.0
        %2769 = vmatpush1.msra.mxu0 %v2722
        %2770 = vmatprep.subr.mxu0 0.0
        %2771 = vmatpush1.msra.mxu0 %v2723
        %2772 = vmatprep.subr.mxu0 0.0
        %2773 = vmatpush1.msra.mxu0 %v2724
        %2774 = vmatprep.subr.mxu0 0.0
        %2775 = vmatpush1.msra.mxu0 %v2725
        %2776 = vmatprep.subr.mxu0 0.0
        %2777 = vmatpush1.msra.mxu0 %v2726
        %2778 = vmatprep.subr.mxu0 0.0
        %2779 = vmatpush1.msra.mxu0 %v2727
        %2780 = vmatprep.subr.mxu0 0.0
        %2781 = vmatpush1.msra.mxu0 %v2728
        %2782 = vmatprep.subr.mxu0 0.0
        %2783 = vmatpush1.msra.mxu0 %v2729
        %2784 = vmatprep.subr.mxu0 0.0
        %2785 = vmatpush1.msra.mxu0 %v2730
        %2786 = vmatprep.subr.mxu0 0.0
        %2787 = vmatpush1.msra.mxu0 %v2731
        %2788 = vmatprep.subr.mxu0 0.0
        %2789 = vmatpush1.msra.mxu0 %v2732
        %2790 = vmatprep.subr.mxu0 0.0
        %2791 = vmatpush1.msra.mxu0 %v2733
        %2792 = vmatprep.subr.mxu0 0.0
        %2793 = vmatpush1.msra.mxu0 %v2734
        %2794 = vmatprep.subr.mxu0 0.0
        %2795 = vmatpush1.msra.mxu0 %v2735
        %2796 = vmatprep.subr.mxu0 0.0
        %2797 = vmatpush1.msra.mxu0 %v2736
        %2798 = vmatprep.subr.mxu0 0.0
        %2799 = vmatpush1.msra.mxu0 0.0
        %2800 = vmatprep.subr.mxu0 0.0
        %2801 = vmatpush1.msra.mxu0 0.0
        %2802 = vmatprep.subr.mxu0 0.0
        %2803 = vmatpush1.msra.mxu0 0.0
        %2804 = vmatprep.subr.mxu0 0.0
        %2805 = vmatpush1.msra.mxu0 0.0
        %2806 = vmatprep.mubr.f32.mxu0 %v2740
        %2807 = vmatmul.mubr.f32.gmra.mrb[0].mxu0 %v2737
        %v2808 = vpop.f32.mrb[0].mxu0
        %v2809 = vadd.f32 0.0, %v2808
        %v2810 = vpop.f32.mrb[0].mxu0
        %2811 = vdwg.mxu0
        %v2812 = vadd.f32 %v2705, %v2809
        %s2813 = scalar_lea.vmem %s7, 672
        %v2814 = vld [vmem:[%s2813] sm:$0xff]
        %v2815 = vld [vmem:[%s2813 + $0x8] sm:$0xff]
        %v2816 = vld [vmem:[%s2813 + $0x10] sm:$0xff]
        %v2817 = vld [vmem:[%s2813 + $0x18] sm:$0xff]
        %v2818 = vld [vmem:[%s2813 + $0x20] sm:$0xff]
        %v2819 = vld [vmem:[%s2813 + $0x28] sm:$0xff]
        %v2820 = vld [vmem:[%s2813 + $0x30] sm:$0xff]
        %v2821 = vld [vmem:[%s2813 + $0x38] sm:$0xff]
        %v2822 = vld [vmem:[%s2813 + $0x40] sm:$0xff]
        %v2823 = vld [vmem:[%s2813 + $0x48] sm:$0xff]
        %v2824 = vld [vmem:[%s2813 + $0x50] sm:$0xff]
        %v2825 = vld [vmem:[%s2813 + $0x58] sm:$0xff]
        %v2826 = vld [vmem:[%s2813 + $0x60] sm:$0xff]
        %v2827 = vld [vmem:[%s2813 + $0x68] sm:$0xff]
        %v2828 = vld [vmem:[%s2813 + $0x70] sm:$0xff]
        %v2829 = vld [vmem:[%s2813 + $0x78] sm:$0xff]
        %v2830 = vld [vmem:[%s2813 + $0x80] sm:$0xff]
        %v2831 = vld [vmem:[%s2813 + $0x88] sm:$0xff]
        %v2832 = vld [vmem:[%s2813 + $0x90] sm:$0xff]
        %v2833 = vld [vmem:[%s2813 + $0x98] sm:$0xff]
        %v2834 = vld [vmem:[%s2813 + $0xa0] sm:$0xff]
        %v2835 = vld [vmem:[%s2813 + $0xa8] sm:$0xff]
        %v2836 = vld [vmem:[%s2813 + $0xb0] sm:$0xff]
        %v2837 = vld [vmem:[%s2813 + $0xb8] sm:$0xff]
        %v2838 = vld [vmem:[%s2813 + $0xc0] sm:$0xff]
        %v2839 = vld [vmem:[%s2813 + $0xc8] sm:$0xff]
        %v2840 = vld [vmem:[%s2813 + $0xd0] sm:$0xff]
        %v2841 = vld [vmem:[%s2813 + $0xd8] sm:$0xff]
        %v2842 = vrot.slane %v2500, 3
        %v2843 = vrot.slane %v2501, 3
        %v2845 = vsel %vm1721, %v2843, 0
        %2847 = vmatprep.subr.mxu0 0.0
        %2848 = vmatpush1.msra.mxu0 %v2814
        %2849 = vmatprep.subr.mxu0 0.0
        %2850 = vmatpush1.msra.mxu0 %v2815
        %2851 = vmatprep.subr.mxu0 0.0
        %2852 = vmatpush1.msra.mxu0 %v2816
        %2853 = vmatprep.subr.mxu0 0.0
        %2854 = vmatpush1.msra.mxu0 %v2817
        %2855 = vmatprep.subr.mxu0 0.0
        %2856 = vmatpush1.msra.mxu0 %v2818
        %2857 = vmatprep.subr.mxu0 0.0
        %2858 = vmatpush1.msra.mxu0 %v2819
        %2859 = vmatprep.subr.mxu0 0.0
        %2860 = vmatpush1.msra.mxu0 %v2820
        %2861 = vmatprep.subr.mxu0 0.0
        %2862 = vmatpush1.msra.mxu0 %v2821
        %2863 = vmatprep.subr.mxu0 0.0
        %2864 = vmatpush1.msra.mxu0 %v2822
        %2865 = vmatprep.subr.mxu0 0.0
        %2866 = vmatpush1.msra.mxu0 %v2823
        %2867 = vmatprep.subr.mxu0 0.0
        %2868 = vmatpush1.msra.mxu0 %v2824
        %2869 = vmatprep.subr.mxu0 0.0
        %2870 = vmatpush1.msra.mxu0 %v2825
        %2871 = vmatprep.subr.mxu0 0.0
        %2872 = vmatpush1.msra.mxu0 %v2826
        %2873 = vmatprep.subr.mxu0 0.0
        %2874 = vmatpush1.msra.mxu0 %v2827
        %2875 = vmatprep.subr.mxu0 0.0
        %2876 = vmatpush1.msra.mxu0 %v2828
        %2877 = vmatprep.subr.mxu0 0.0
        %2878 = vmatpush1.msra.mxu0 %v2829
        %2879 = vmatprep.subr.mxu0 0.0
        %2880 = vmatpush1.msra.mxu0 %v2830
        %2881 = vmatprep.subr.mxu0 0.0
        %2882 = vmatpush1.msra.mxu0 %v2831
        %2883 = vmatprep.subr.mxu0 0.0
        %2884 = vmatpush1.msra.mxu0 %v2832
        %2885 = vmatprep.subr.mxu0 0.0
        %2886 = vmatpush1.msra.mxu0 %v2833
        %2887 = vmatprep.subr.mxu0 0.0
        %2888 = vmatpush1.msra.mxu0 %v2834
        %2889 = vmatprep.subr.mxu0 0.0
        %2890 = vmatpush1.msra.mxu0 %v2835
        %2891 = vmatprep.subr.mxu0 0.0
        %2892 = vmatpush1.msra.mxu0 %v2836
        %2893 = vmatprep.subr.mxu0 0.0
        %2894 = vmatpush1.msra.mxu0 %v2837
        %2895 = vmatprep.subr.mxu0 0.0
        %2896 = vmatpush1.msra.mxu0 %v2838
        %2897 = vmatprep.subr.mxu0 0.0
        %2898 = vmatpush1.msra.mxu0 %v2839
        %2899 = vmatprep.subr.mxu0 0.0
        %2900 = vmatpush1.msra.mxu0 %v2840
        %2901 = vmatprep.subr.mxu0 0.0
        %2902 = vmatpush1.msra.mxu0 %v2841
        %2903 = vmatprep.subr.mxu0 0.0
        %2904 = vmatpush1.msra.mxu0 0.0
        %2905 = vmatprep.subr.mxu0 0.0
        %2906 = vmatpush1.msra.mxu0 0.0
        %2907 = vmatprep.subr.mxu0 0.0
        %2908 = vmatpush1.msra.mxu0 0.0
        %2909 = vmatprep.subr.mxu0 0.0
        %2910 = vmatpush1.msra.mxu0 0.0
        %2911 = vmatprep.mubr.f32.mxu0 %v2845
        %2912 = vmatmul.mubr.f32.gmra.mrb[0].mxu0 %v2842
        %v2913 = vpop.f32.mrb[0].mxu0
        %v2914 = vadd.f32 0.0, %v2913
        %v2915 = vpop.f32.mrb[0].mxu0
        %2916 = vdwg.mxu0
        %v2917 = vadd.f32 %v2812, %v2914
        %s2918 = scalar_lea.vmem %s7, 896
        %v2919 = vld [vmem:[%s2918] sm:$0xff]
        %v2920 = vld [vmem:[%s2918 + $0x8] sm:$0xff]
        %v2921 = vld [vmem:[%s2918 + $0x10] sm:$0xff]
        %v2922 = vld [vmem:[%s2918 + $0x18] sm:$0xff]
        %v2923 = vld [vmem:[%s2918 + $0x20] sm:$0xff]
        %v2924 = vld [vmem:[%s2918 + $0x28] sm:$0xff]
        %v2925 = vld [vmem:[%s2918 + $0x30] sm:$0xff]
        %v2926 = vld [vmem:[%s2918 + $0x38] sm:$0xff]
        %v2927 = vld [vmem:[%s2918 + $0x40] sm:$0xff]
        %v2928 = vld [vmem:[%s2918 + $0x48] sm:$0xff]
        %v2929 = vld [vmem:[%s2918 + $0x50] sm:$0xff]
        %v2930 = vld [vmem:[%s2918 + $0x58] sm:$0xff]
        %v2931 = vld [vmem:[%s2918 + $0x60] sm:$0xff]
        %v2932 = vld [vmem:[%s2918 + $0x68] sm:$0xff]
        %v2933 = vld [vmem:[%s2918 + $0x70] sm:$0xff]
        %v2934 = vld [vmem:[%s2918 + $0x78] sm:$0xff]
        %v2935 = vld [vmem:[%s2918 + $0x80] sm:$0xff]
        %v2936 = vld [vmem:[%s2918 + $0x88] sm:$0xff]
        %v2937 = vld [vmem:[%s2918 + $0x90] sm:$0xff]
        %v2938 = vld [vmem:[%s2918 + $0x98] sm:$0xff]
        %v2939 = vld [vmem:[%s2918 + $0xa0] sm:$0xff]
        %v2940 = vld [vmem:[%s2918 + $0xa8] sm:$0xff]
        %v2941 = vld [vmem:[%s2918 + $0xb0] sm:$0xff]
        %v2942 = vld [vmem:[%s2918 + $0xb8] sm:$0xff]
        %v2943 = vld [vmem:[%s2918 + $0xc0] sm:$0xff]
        %v2944 = vld [vmem:[%s2918 + $0xc8] sm:$0xff]
        %v2945 = vld [vmem:[%s2918 + $0xd0] sm:$0xff]
        %v2946 = vld [vmem:[%s2918 + $0xd8] sm:$0xff]
        %v2947 = vrot.slane %v2500, 4
        %v2948 = vrot.slane %v2501, 4
        %v2950 = vsel %vm1721, %v2948, 0
        %2952 = vmatprep.subr.mxu0 0.0
        %2953 = vmatpush1.msra.mxu0 %v2919
        %2954 = vmatprep.subr.mxu0 0.0
        %2955 = vmatpush1.msra.mxu0 %v2920
        %2956 = vmatprep.subr.mxu0 0.0
        %2957 = vmatpush1.msra.mxu0 %v2921
        %2958 = vmatprep.subr.mxu0 0.0
        %2959 = vmatpush1.msra.mxu0 %v2922
        %2960 = vmatprep.subr.mxu0 0.0
        %2961 = vmatpush1.msra.mxu0 %v2923
        %2962 = vmatprep.subr.mxu0 0.0
        %2963 = vmatpush1.msra.mxu0 %v2924
        %2964 = vmatprep.subr.mxu0 0.0
        %2965 = vmatpush1.msra.mxu0 %v2925
        %2966 = vmatprep.subr.mxu0 0.0
        %2967 = vmatpush1.msra.mxu0 %v2926
        %2968 = vmatprep.subr.mxu0 0.0
        %2969 = vmatpush1.msra.mxu0 %v2927
        %2970 = vmatprep.subr.mxu0 0.0
        %2971 = vmatpush1.msra.mxu0 %v2928
        %2972 = vmatprep.subr.mxu0 0.0
        %2973 = vmatpush1.msra.mxu0 %v2929
        %2974 = vmatprep.subr.mxu0 0.0
        %2975 = vmatpush1.msra.mxu0 %v2930
        %2976 = vmatprep.subr.mxu0 0.0
        %2977 = vmatpush1.msra.mxu0 %v2931
        %2978 = vmatprep.subr.mxu0 0.0
        %2979 = vmatpush1.msra.mxu0 %v2932
        %2980 = vmatprep.subr.mxu0 0.0
        %2981 = vmatpush1.msra.mxu0 %v2933
        %2982 = vmatprep.subr.mxu0 0.0
        %2983 = vmatpush1.msra.mxu0 %v2934
        %2984 = vmatprep.subr.mxu0 0.0
        %2985 = vmatpush1.msra.mxu0 %v2935
        %2986 = vmatprep.subr.mxu0 0.0
        %2987 = vmatpush1.msra.mxu0 %v2936
        %2988 = vmatprep.subr.mxu0 0.0
        %2989 = vmatpush1.msra.mxu0 %v2937
        %2990 = vmatprep.subr.mxu0 0.0
        %2991 = vmatpush1.msra.mxu0 %v2938
        %2992 = vmatprep.subr.mxu0 0.0
        %2993 = vmatpush1.msra.mxu0 %v2939
        %2994 = vmatprep.subr.mxu0 0.0
        %2995 = vmatpush1.msra.mxu0 %v2940
        %2996 = vmatprep.subr.mxu0 0.0
        %2997 = vmatpush1.msra.mxu0 %v2941
        %2998 = vmatprep.subr.mxu0 0.0
        %2999 = vmatpush1.msra.mxu0 %v2942
        %3000 = vmatprep.subr.mxu0 0.0
        %3001 = vmatpush1.msra.mxu0 %v2943
        %3002 = vmatprep.subr.mxu0 0.0
        %3003 = vmatpush1.msra.mxu0 %v2944
        %3004 = vmatprep.subr.mxu0 0.0
        %3005 = vmatpush1.msra.mxu0 %v2945
        %3006 = vmatprep.subr.mxu0 0.0
        %3007 = vmatpush1.msra.mxu0 %v2946
        %3008 = vmatprep.subr.mxu0 0.0
        %3009 = vmatpush1.msra.mxu0 0.0
        %3010 = vmatprep.subr.mxu0 0.0
        %3011 = vmatpush1.msra.mxu0 0.0
        %3012 = vmatprep.subr.mxu0 0.0
        %3013 = vmatpush1.msra.mxu0 0.0
        %3014 = vmatprep.subr.mxu0 0.0
        %3015 = vmatpush1.msra.mxu0 0.0
        %3016 = vmatprep.mubr.f32.mxu0 %v2950
        %3017 = vmatmul.mubr.f32.gmra.mrb[0].mxu0 %v2947
        %v3018 = vpop.f32.mrb[0].mxu0
        %v3019 = vadd.f32 0.0, %v3018
        %v3020 = vpop.f32.mrb[0].mxu0
        %3021 = vdwg.mxu0
        %v3022 = vadd.f32 %v2917, %v3019
        %s3023 = scalar_lea.vmem %s7, 1120
        %v3024 = vld [vmem:[%s3023] sm:$0xff]
        %v3025 = vld [vmem:[%s3023 + $0x8] sm:$0xff]
        %v3026 = vld [vmem:[%s3023 + $0x10] sm:$0xff]
        %v3027 = vld [vmem:[%s3023 + $0x18] sm:$0xff]
        %v3028 = vld [vmem:[%s3023 + $0x20] sm:$0xff]
        %v3029 = vld [vmem:[%s3023 + $0x28] sm:$0xff]
        %v3030 = vld [vmem:[%s3023 + $0x30] sm:$0xff]
        %v3031 = vld [vmem:[%s3023 + $0x38] sm:$0xff]
        %v3032 = vld [vmem:[%s3023 + $0x40] sm:$0xff]
        %v3033 = vld [vmem:[%s3023 + $0x48] sm:$0xff]
        %v3034 = vld [vmem:[%s3023 + $0x50] sm:$0xff]
        %v3035 = vld [vmem:[%s3023 + $0x58] sm:$0xff]
        %v3036 = vld [vmem:[%s3023 + $0x60] sm:$0xff]
        %v3037 = vld [vmem:[%s3023 + $0x68] sm:$0xff]
        %v3038 = vld [vmem:[%s3023 + $0x70] sm:$0xff]
        %v3039 = vld [vmem:[%s3023 + $0x78] sm:$0xff]
        %v3040 = vld [vmem:[%s3023 + $0x80] sm:$0xff]
        %v3041 = vld [vmem:[%s3023 + $0x88] sm:$0xff]
        %v3042 = vld [vmem:[%s3023 + $0x90] sm:$0xff]
        %v3043 = vld [vmem:[%s3023 + $0x98] sm:$0xff]
        %v3044 = vld [vmem:[%s3023 + $0xa0] sm:$0xff]
        %v3045 = vld [vmem:[%s3023 + $0xa8] sm:$0xff]
        %v3046 = vld [vmem:[%s3023 + $0xb0] sm:$0xff]
        %v3047 = vld [vmem:[%s3023 + $0xb8] sm:$0xff]
        %v3048 = vld [vmem:[%s3023 + $0xc0] sm:$0xff]
        %v3049 = vld [vmem:[%s3023 + $0xc8] sm:$0xff]
        %v3050 = vld [vmem:[%s3023 + $0xd0] sm:$0xff]
        %v3051 = vld [vmem:[%s3023 + $0xd8] sm:$0xff]
        %v3052 = vrot.slane %v2500, 5
        %v3053 = vrot.slane %v2501, 5
        %v3055 = vsel %vm1721, %v3053, 0
        %3057 = vmatprep.subr.mxu0 0.0
        %3058 = vmatpush1.msra.mxu0 %v3024
        %3059 = vmatprep.subr.mxu0 0.0
        %3060 = vmatpush1.msra.mxu0 %v3025
        %3061 = vmatprep.subr.mxu0 0.0
        %3062 = vmatpush1.msra.mxu0 %v3026
        %3063 = vmatprep.subr.mxu0 0.0
        %3064 = vmatpush1.msra.mxu0 %v3027
        %3065 = vmatprep.subr.mxu0 0.0
        %3066 = vmatpush1.msra.mxu0 %v3028
        %3067 = vmatprep.subr.mxu0 0.0
        %3068 = vmatpush1.msra.mxu0 %v3029
        %3069 = vmatprep.subr.mxu0 0.0
        %3070 = vmatpush1.msra.mxu0 %v3030
        %3071 = vmatprep.subr.mxu0 0.0
        %3072 = vmatpush1.msra.mxu0 %v3031
        %3073 = vmatprep.subr.mxu0 0.0
        %3074 = vmatpush1.msra.mxu0 %v3032
        %3075 = vmatprep.subr.mxu0 0.0
        %3076 = vmatpush1.msra.mxu0 %v3033
        %3077 = vmatprep.subr.mxu0 0.0
        %3078 = vmatpush1.msra.mxu0 %v3034
        %3079 = vmatprep.subr.mxu0 0.0
        %3080 = vmatpush1.msra.mxu0 %v3035
        %3081 = vmatprep.subr.mxu0 0.0
        %3082 = vmatpush1.msra.mxu0 %v3036
        %3083 = vmatprep.subr.mxu0 0.0
        %3084 = vmatpush1.msra.mxu0 %v3037
        %3085 = vmatprep.subr.mxu0 0.0
        %3086 = vmatpush1.msra.mxu0 %v3038
        %3087 = vmatprep.subr.mxu0 0.0
        %3088 = vmatpush1.msra.mxu0 %v3039
        %3089 = vmatprep.subr.mxu0 0.0
        %3090 = vmatpush1.msra.mxu0 %v3040
        %3091 = vmatprep.subr.mxu0 0.0
        %3092 = vmatpush1.msra.mxu0 %v3041
        %3093 = vmatprep.subr.mxu0 0.0
        %3094 = vmatpush1.msra.mxu0 %v3042
        %3095 = vmatprep.subr.mxu0 0.0
        %3096 = vmatpush1.msra.mxu0 %v3043
        %3097 = vmatprep.subr.mxu0 0.0
        %3098 = vmatpush1.msra.mxu0 %v3044
        %3099 = vmatprep.subr.mxu0 0.0
        %3100 = vmatpush1.msra.mxu0 %v3045
        %3101 = vmatprep.subr.mxu0 0.0
        %3102 = vmatpush1.msra.mxu0 %v3046
        %3103 = vmatprep.subr.mxu0 0.0
        %3104 = vmatpush1.msra.mxu0 %v3047
        %3105 = vmatprep.subr.mxu0 0.0
        %3106 = vmatpush1.msra.mxu0 %v3048
        %3107 = vmatprep.subr.mxu0 0.0
        %3108 = vmatpush1.msra.mxu0 %v3049
        %3109 = vmatprep.subr.mxu0 0.0
        %3110 = vmatpush1.msra.mxu0 %v3050
        %3111 = vmatprep.subr.mxu0 0.0
        %3112 = vmatpush1.msra.mxu0 %v3051
        %3113 = vmatprep.subr.mxu0 0.0
        %3114 = vmatpush1.msra.mxu0 0.0
        %3115 = vmatprep.subr.mxu0 0.0
        %3116 = vmatpush1.msra.mxu0 0.0
        %3117 = vmatprep.subr.mxu0 0.0
        %3118 = vmatpush1.msra.mxu0 0.0
        %3119 = vmatprep.subr.mxu0 0.0
        %3120 = vmatpush1.msra.mxu0 0.0
        %3121 = vmatprep.mubr.f32.mxu0 %v3055
        %3122 = vmatmul.mubr.f32.gmra.mrb[0].mxu0 %v3052
        %v3123 = vpop.f32.mrb[0].mxu0
        %v3124 = vadd.f32 0.0, %v3123
        %v3125 = vpop.f32.mrb[0].mxu0
        %3126 = vdwg.mxu0
        %v3127 = vadd.f32 %v3022, %v3124
        %s3128 = scalar_lea.vmem %s7, 1344
        %v3129 = vld [vmem:[%s3128] sm:$0xff]
        %v3130 = vld [vmem:[%s3128 + $0x8] sm:$0xff]
        %v3131 = vld [vmem:[%s3128 + $0x10] sm:$0xff]
        %v3132 = vld [vmem:[%s3128 + $0x18] sm:$0xff]
        %v3133 = vld [vmem:[%s3128 + $0x20] sm:$0xff]
        %v3134 = vld [vmem:[%s3128 + $0x28] sm:$0xff]
        %v3135 = vld [vmem:[%s3128 + $0x30] sm:$0xff]
        %v3136 = vld [vmem:[%s3128 + $0x38] sm:$0xff]
        %v3137 = vld [vmem:[%s3128 + $0x40] sm:$0xff]
        %v3138 = vld [vmem:[%s3128 + $0x48] sm:$0xff]
        %v3139 = vld [vmem:[%s3128 + $0x50] sm:$0xff]
        %v3140 = vld [vmem:[%s3128 + $0x58] sm:$0xff]
        %v3141 = vld [vmem:[%s3128 + $0x60] sm:$0xff]
        %v3142 = vld [vmem:[%s3128 + $0x68] sm:$0xff]
        %v3143 = vld [vmem:[%s3128 + $0x70] sm:$0xff]
        %v3144 = vld [vmem:[%s3128 + $0x78] sm:$0xff]
        %v3145 = vld [vmem:[%s3128 + $0x80] sm:$0xff]
        %v3146 = vld [vmem:[%s3128 + $0x88] sm:$0xff]
        %v3147 = vld [vmem:[%s3128 + $0x90] sm:$0xff]
        %v3148 = vld [vmem:[%s3128 + $0x98] sm:$0xff]
        %v3149 = vld [vmem:[%s3128 + $0xa0] sm:$0xff]
        %v3150 = vld [vmem:[%s3128 + $0xa8] sm:$0xff]
        %v3151 = vld [vmem:[%s3128 + $0xb0] sm:$0xff]
        %v3152 = vld [vmem:[%s3128 + $0xb8] sm:$0xff]
        %v3153 = vld [vmem:[%s3128 + $0xc0] sm:$0xff]
        %v3154 = vld [vmem:[%s3128 + $0xc8] sm:$0xff]
        %v3155 = vld [vmem:[%s3128 + $0xd0] sm:$0xff]
        %v3156 = vld [vmem:[%s3128 + $0xd8] sm:$0xff]
        %v3157 = vrot.slane %v2500, 6
        %v3158 = vrot.slane %v2501, 6
        %v3160 = vsel %vm1721, %v3158, 0
        %3162 = vmatprep.subr.mxu0 0.0
        %3163 = vmatpush1.msra.mxu0 %v3129
        %3164 = vmatprep.subr.mxu0 0.0
        %3165 = vmatpush1.msra.mxu0 %v3130
        %3166 = vmatprep.subr.mxu0 0.0
        %3167 = vmatpush1.msra.mxu0 %v3131
        %3168 = vmatprep.subr.mxu0 0.0
        %3169 = vmatpush1.msra.mxu0 %v3132
        %3170 = vmatprep.subr.mxu0 0.0
        %3171 = vmatpush1.msra.mxu0 %v3133
        %3172 = vmatprep.subr.mxu0 0.0
        %3173 = vmatpush1.msra.mxu0 %v3134
        %3174 = vmatprep.subr.mxu0 0.0
        %3175 = vmatpush1.msra.mxu0 %v3135
        %3176 = vmatprep.subr.mxu0 0.0
        %3177 = vmatpush1.msra.mxu0 %v3136
        %3178 = vmatprep.subr.mxu0 0.0
        %3179 = vmatpush1.msra.mxu0 %v3137
        %3180 = vmatprep.subr.mxu0 0.0
        %3181 = vmatpush1.msra.mxu0 %v3138
        %3182 = vmatprep.subr.mxu0 0.0
        %3183 = vmatpush1.msra.mxu0 %v3139
        %3184 = vmatprep.subr.mxu0 0.0
        %3185 = vmatpush1.msra.mxu0 %v3140
        %3186 = vmatprep.subr.mxu0 0.0
        %3187 = vmatpush1.msra.mxu0 %v3141
        %3188 = vmatprep.subr.mxu0 0.0
        %3189 = vmatpush1.msra.mxu0 %v3142
        %3190 = vmatprep.subr.mxu0 0.0
        %3191 = vmatpush1.msra.mxu0 %v3143
        %3192 = vmatprep.subr.mxu0 0.0
        %3193 = vmatpush1.msra.mxu0 %v3144
        %3194 = vmatprep.subr.mxu0 0.0
        %3195 = vmatpush1.msra.mxu0 %v3145
        %3196 = vmatprep.subr.mxu0 0.0
        %3197 = vmatpush1.msra.mxu0 %v3146
        %3198 = vmatprep.subr.mxu0 0.0
        %3199 = vmatpush1.msra.mxu0 %v3147
        %3200 = vmatprep.subr.mxu0 0.0
        %3201 = vmatpush1.msra.mxu0 %v3148
        %3202 = vmatprep.subr.mxu0 0.0
        %3203 = vmatpush1.msra.mxu0 %v3149
        %3204 = vmatprep.subr.mxu0 0.0
        %3205 = vmatpush1.msra.mxu0 %v3150
        %3206 = vmatprep.subr.mxu0 0.0
        %3207 = vmatpush1.msra.mxu0 %v3151
        %3208 = vmatprep.subr.mxu0 0.0
        %3209 = vmatpush1.msra.mxu0 %v3152
        %3210 = vmatprep.subr.mxu0 0.0
        %3211 = vmatpush1.msra.mxu0 %v3153
        %3212 = vmatprep.subr.mxu0 0.0
        %3213 = vmatpush1.msra.mxu0 %v3154
        %3214 = vmatprep.subr.mxu0 0.0
        %3215 = vmatpush1.msra.mxu0 %v3155
        %3216 = vmatprep.subr.mxu0 0.0
        %3217 = vmatpush1.msra.mxu0 %v3156
        %3218 = vmatprep.subr.mxu0 0.0
        %3219 = vmatpush1.msra.mxu0 0.0
        %3220 = vmatprep.subr.mxu0 0.0
        %3221 = vmatpush1.msra.mxu0 0.0
        %3222 = vmatprep.subr.mxu0 0.0
        %3223 = vmatpush1.msra.mxu0 0.0
        %3224 = vmatprep.subr.mxu0 0.0
        %3225 = vmatpush1.msra.mxu0 0.0
        %3226 = vmatprep.mubr.f32.mxu0 %v3160
        %3227 = vmatmul.mubr.f32.gmra.mrb[0].mxu0 %v3157
        %v3228 = vpop.f32.mrb[0].mxu0
        %v3229 = vadd.f32 0.0, %v3228
        %v3230 = vpop.f32.mrb[0].mxu0
        %3231 = vdwg.mxu0
        %v3232 = vadd.f32 %v3127, %v3229
        %v3233 = vld [vmem:[%s8] sm:$0x1]
        %v3234 = vadd.f32 %v3232, %v3233
        %v3235 = vtanh.pop %v3234
        %vm3236 = vcmask 253952
        %3237 = vst.msk [vmem:[%s324] sm:$0x1] %vm3236, %v3235
        %s3238 = sand.u32 %s225, 1
        %s3239 = scalar_lea.sflag [#allocation3], %s3238
        %s3240 = sand.u32 %s225, 1
        %s3241 = scalar_lea.vmem [#allocation2], %s3240
        // Predicated region
        $region57: #{cnn_forward.1} parent=55 // pred_check
          %p3242 = pneg %p235
        $region58: #{cnn_forward.1} parent=55 // pred_check_branch
          %3244 = sbr.rel (%p3242) target = $region60
        $region59: #{cnn_forward.1} parent=55 // pred_region
          %s3246 = ssub.s32 16, 16
          %3247 = vsyncadd %s3239, %s3246
          %s3248 = smul.addr %s23, 16
          %s3249 = scalar_lea.hbm %s9, %s3248
          %s3251 = sshll.u32 %s3241, 4
          %s3252 = int_to_ptr.vmem [resolvable:$true] %s3251
          %3254 = dma.vmem_to_hbm [thread:$0]  %s3252, 16, %s3249, %s3239
        $region60: #{cnn_forward.1} parent=55 // pred_fallthru
          _
      $region56: #{cnn_forward.1} parent=5 // pred_fallthru
        _
      %p3255 = scmp.le.s32.totalorder 2, %s18
      // Predicated region
      $region61: #{cnn_forward.1} parent=5 // pred_check
        %p3256 = pneg %p3255
      $region62: #{cnn_forward.1} parent=5 // pred_check_branch
        %3258 = sbr.rel (%p3256) target = $region64
      $region63: #{cnn_forward.1} parent=5 // pred_region
        %s3259 = ssub.s32 %s18, 2
        // Predicated region
        $region65: #{cnn_forward.1} parent=63 // pred_check
          %p3260 = pneg %p241
        $region66: #{cnn_forward.1} parent=63 // pred_check_branch
          %3262 = sbr.rel (%p3260) target = $region68
        $region67: #{cnn_forward.1} parent=63 // pred_region
          %s3263 = sand.u32 %s226, 1
          %s3264 = scalar_lea.sflag [#allocation3], %s3263
          %s3265 = sand.u32 %s226, 1
          %s3266 = scalar_lea.vmem [#allocation2], %s3265
          %3267 = dma.done %s3264, 16
        $region68: #{cnn_forward.1} parent=63 // pred_fallthru
          _
      $region64: #{cnn_forward.1} parent=5 // pred_fallthru
        _
    $region6: #{cnn_forward.1} parent=1 // loop_footer
      %s22 = sadd.s32 1, %s18
    $region7: #{cnn_forward.1} parent=1 // loop_footer_branch
      %17 = sbr.rel target = $region3
    $region8: #{cnn_forward.1} parent=1 // loop_exit
      _
    %3268 = vsyncpa [#allocation3], 1
    %s3269 = scalar_lea.sflag [#allocation3], 1
    %3270 = vsyncpa %s3269, 1

</llo_original>
